<compile_context>
chip_gen: v7x
topology: tpu7x:2x2x1
jax: 0.10.0
libtpu: 0.0.40
codegen_flags: <defaults>
</compile_context>

<pallas_src>
import numpy as np

import jax
import jax.numpy as jnp
from jax.experimental import pallas as pl
from jax.experimental.pallas import tpu as pltpu


# ----------------------------------------------------------------------------
# Fused forward kernel: whole autoencoder for BT row-stacked images per step.
# ----------------------------------------------------------------------------
def _fused_forward_kernel(x_ref,
                          r1_ref, m1_ref, b1_ref, rp1_ref, cp1_ref,
                          r2_ref, m2_ref, b2_ref, rp2_ref, cp2_ref,
                          g1_ref, bd1_ref, p1_ref, g2_ref, bd2_ref, p2_ref,
                          out_ref, comp_ref):
    bf16 = jnp.bfloat16

    def mm(a, b):
        # explicit bf16 operands (same numerics as default-precision f32 dot),
        # f32 accumulation on the MXU.
        return jnp.dot(a.astype(bf16), b.astype(bf16),
                       preferred_element_type=jnp.float32)

    x = x_ref[0]                                         # (BT*H, W) f32

    # ---- conv1 (1->16, 3x3, pad=1) + ReLU      -> h1: (BT*H, C1*W) ----------
    acc = mm(mm(r1_ref[0], x), m1_ref[0])
    acc = acc + mm(mm(r1_ref[1], x), m1_ref[1])
    acc = acc + mm(mm(r1_ref[2], x), m1_ref[2])
    h1 = jnp.maximum(acc + b1_ref[...], 0.0)

    # ---- maxpool 2x2                           -> p1: (BT*H2, C1*W2) --------
    rp = jnp.maximum(mm(rp1_ref[0], h1), mm(rp1_ref[1], h1))
    p1 = jnp.maximum(mm(rp, cp1_ref[0]), mm(rp, cp1_ref[1]))

    # ---- conv2 (16->4, 3x3, pad=1) + ReLU      -> h2: (BT*H2, C2*W2) --------
    acc2 = mm(mm(r2_ref[0], p1), m2_ref[0])
    acc2 = acc2 + mm(mm(r2_ref[1], p1), m2_ref[1])
    acc2 = acc2 + mm(mm(r2_ref[2], p1), m2_ref[2])
    h2 = jnp.maximum(acc2 + b2_ref[...], 0.0)

    # ---- maxpool 2x2 -> compressed             -> comp: (BT*H4, C2*W4) ------
    rq = jnp.maximum(mm(rp2_ref[0], h2), mm(rp2_ref[1], h2))
    comp = jnp.maximum(mm(rq, cp2_ref[0]), mm(rq, cp2_ref[1]))
    comp_ref[0] = comp                                   # single lane-dense slab

    # ---- decode1 (4->16, 2x2, stride 2) + ReLU -> d1: (BT*H2, C1*W2) --------
    d1 = jnp.maximum(mm(p1_ref[0], mm(comp, g1_ref[0]))
                     + mm(p1_ref[1], mm(comp, g1_ref[1]))
                     + bd1_ref[...], 0.0)

    # ---- decode2 (16->1, 2x2, stride 2) + sigmoid -> (BT*H, W) --------------
    pre = (mm(p2_ref[0], mm(d1, g2_ref[0]))
           + mm(p2_ref[1], mm(d1, g2_ref[1]))
           + bd2_ref[...])
    out_ref[0] = 1.0 / (1.0 + jnp.exp(-pre))             # sigmoid (VPU/EUP)


# ----------------------------------------------------------------------------
# Wrapper-side constant builders.
# Pure 0/1 selectors depend only on static shapes -> numpy (compile-time
# constants).  Weight-derived banded / lane-expansion matrices use jnp.
# ----------------------------------------------------------------------------
def _conv_row_shift_selectors(BT, H):
    """(3, BT*H, BT*H) block-diag row shifts; zero rows implement row padding."""
    sel = np.zeros((3, BT * H, BT * H), np.float32)
    for di in range(3):
        for b in range(BT):
            for y in range(H):
                src = y + di - 1
                if 0 <= src < H:
                    sel[di, b * H + y, b * H + src] = 1.0
    return sel


def _row_pool_selectors(BT, H_in):
    """(2, BT*H_in//2, BT*H_in) block-diag 0/1 row gathers for 2x2 pooling."""
    H_out = H_in // 2
    sel = np.zeros((2, BT * H_out, BT * H_in), np.float32)
    r = np.arange(H_out)
    for a in range(2):
        for b in range(BT):
            sel[a, b * H_out + r, b * H_in + 2 * r + a] = 1.0
    return sel


def _col_pool_selectors(C, W_in):
    """(2, C*W_in, C*W_in//2) per-channel 0/1 column gathers for 2x2 pooling."""
    W_out = W_in // 2
    sel = np.zeros((2, C * W_in, C * W_out), np.float32)
    x = np.arange(W_out)
    for a in range(2):
        for c in range(C):
            sel[a, c * W_in + 2 * x + a, c * W_out + x] = 1.0
    return sel


def _row_interleave_selectors(BT, H_in):
    """(2, BT*2*H_in, BT*H_in) block-diag 0/1 even/odd deconv-row scatters."""
    H_out = 2 * H_in
    sel = np.zeros((2, BT * H_out, BT * H_in), np.float32)
    i = np.arange(H_in)
    for di in range(2):
        for b in range(BT):
            sel[di, b * H_out + 2 * i + di, b * H_in + i] = 1.0
    return sel


def _conv_band_matrices(w, W_img):
    """w: (Cout, Cin, 3, 3) Conv2d weight -> (3, Cin*W, Cout*W).

    M[di][ci*W + j, co*W + x] = w[co, ci, di, j-x+1] for -1 <= j-x <= 1
    (column zero padding folded in via band clipping).
    """
    Cout, Cin, _, _ = w.shape
    j = jnp.arange(W_img)[:, None]
    x = jnp.arange(W_img)[None, :]
    dj = j - x + 1
    valid = (dj >= 0) & (dj <= 2)
    djc = jnp.clip(dj, 0, 2)
    mats = []
    for di in range(3):
        sel = w[:, :, di, :][:, :, djc]                        # (Cout,Cin,W,W)
        sel = jnp.where(valid[None, None], sel, 0.0)
        mats.append(jnp.transpose(sel, (1, 2, 0, 3)).reshape(Cin * W_img,
                                                             Cout * W_img))
    return jnp.stack(mats, 0)


def _deconv_lane_matrices(w, W_in):
    """w: (Cin, Cout, 2, 2) ConvTranspose2d weight -> (2, Cin*W_in, Cout*2*W_in).

    G[di][ci*W_in + j, co*2*W_in + 2j + dj] = w[ci, co, di, dj].
    """
    Cin, Cout, _, _ = w.shape
    W_out = 2 * W_in
    xo = jnp.arange(W_out)[None, :]
    ji = 2 * jnp.arange(W_in)[:, None]
    mats = []
    for di in range(2):
        m = jnp.zeros((Cin, W_in, Cout, W_out), jnp.float32)
        for dj in range(2):
            oh = (xo == ji + dj).astype(jnp.float32)           # (W_in, W_out)
            m = m + w[:, None, :, None, di, dj] * oh[None, :, None, :]
        mats.append(m.reshape(Cin * W_in, Cout * W_out))
    return jnp.stack(mats, 0)


def _pick_images_per_step(B, H):
    """Largest divisor of B with BT*H <= 128 rows while keeping >=2 grid steps
    (feeds both v7x TensorCores)."""
    divs = [d for d in range(1, B + 1) if B % d == 0]
    cand = [d for d in divs if d * H <= 128 and B // d >= 2]
    if not cand:
        cand = [d for d in divs if d * H <= 128] or [1]
    return max(cand)


# ----------------------------------------------------------------------------
# Network forward (semantics of compressor.Network.forward), NCHW in/out.
# ----------------------------------------------------------------------------
def network_forward(x_nchw, params, *, images_per_step=None):
    B, Cin, H, W = x_nchw.shape
    assert Cin == 1 and H % 4 == 0 and W % 4 == 0
    C1 = params["w1"].shape[0]       # 16
    C2 = params["w2"].shape[0]       # 4
    H2, W2, H4, W4 = H // 2, W // 2, H // 4, W // 4

    BT = images_per_step or _pick_images_per_step(B, H)
    assert B % BT == 0
    NB = B // BT

    bf16 = jnp.bfloat16
    # Row-stacked, unpadded input (padding is folded into the constants below).
    x_rows = x_nchw.reshape(B, H, W).reshape(NB, BT * H, W)

    r1 = jnp.asarray(_conv_row_shift_selectors(BT, H), bf16)     # (3,BT*H,BT*H)
    m1 = _conv_band_matrices(params["w1"], W).astype(bf16)        # (3,W,C1*W)
    b1r = jnp.repeat(params["b1"], W)[None, :].astype(jnp.float32)
    rp1 = jnp.asarray(_row_pool_selectors(BT, H), bf16)           # (2,BT*H2,BT*H)
    cp1 = jnp.asarray(_col_pool_selectors(C1, W), bf16)           # (2,C1*W,C1*W2)
    r2 = jnp.asarray(_conv_row_shift_selectors(BT, H2), bf16)     # (3,BT*H2,BT*H2)
    m2 = _conv_band_matrices(params["w2"], W2).astype(bf16)       # (3,C1*W2,C2*W2)
    b2r = jnp.repeat(params["b2"], W2)[None, :].astype(jnp.float32)
    rp2 = jnp.asarray(_row_pool_selectors(BT, H2), bf16)          # (2,BT*H4,BT*H2)
    cp2 = jnp.asarray(_col_pool_selectors(C2, W2), bf16)          # (2,C2*W2,C2*W4)
    g1 = _deconv_lane_matrices(params["wd1"], W4).astype(bf16)    # (2,C2*W4,C1*W2)
    bd1r = jnp.repeat(params["bd1"], W2)[None, :].astype(jnp.float32)
    p1s = jnp.asarray(_row_interleave_selectors(BT, H4), bf16)    # (2,BT*H2,BT*H4)
    g2 = _deconv_lane_matrices(params["wd2"], W2).astype(bf16)    # (2,C1*W2,W)
    bd2r = jnp.repeat(params["bd2"], W)[None, :].astype(jnp.float32)
    p2s = jnp.asarray(_row_interleave_selectors(BT, H2), bf16)    # (2,BT*H,BT*H2)

    consts = (r1, m1, b1r, rp1, cp1, r2, m2, b2r, rp2, cp2,
              g1, bd1r, p1s, g2, bd2r, p2s)

    def _const_spec(a):
        nd = a.ndim
        return pl.BlockSpec(a.shape, lambda g, _nd=nd: (0,) * _nd)

    out_rows, comp_rows = pl.pallas_call(
        _fused_forward_kernel,
        out_shape=(jax.ShapeDtypeStruct((NB, BT * H, W), jnp.float32),
                   jax.ShapeDtypeStruct((NB, BT * H4, C2 * W4), jnp.float32)),
        grid=(NB,),
        in_specs=[pl.BlockSpec((1, BT * H, W), lambda g: (g, 0, 0))]
                 + [_const_spec(a) for a in consts],
        out_specs=[pl.BlockSpec((1, BT * H, W), lambda g: (g, 0, 0)),
                   pl.BlockSpec((1, BT * H4, C2 * W4), lambda g: (g, 0, 0))],
        compiler_params=pltpu.CompilerParams(
            dimension_semantics=("parallel",)),
    )(x_rows, *consts)

    # Un-pack the lane/row-dense slabs to NCHW (free XLA reshapes/transpose).
    out = out_rows.reshape(B, 1, H, W)
    comp = comp_rows.reshape(B, H4, C2, W4).transpose(0, 2, 1, 3)
    return out, comp


# ----------------------------------------------------------------------------
# Plain-JAX reference (same math as the PyTorch module) for self-check.
# ----------------------------------------------------------------------------
def _reference_forward(x_nchw, params):
    x = jnp.transpose(x_nchw, (0, 2, 3, 1))                      # NHWC

    def conv3(x, w, b):
        B, H, W, Cin = x.shape
        Cout = w.shape[0]
        xpad = jnp.pad(x, ((0, 0), (1, 1), (1, 1), (0, 0)))
        cols = [xpad[:, di:di + H, dj:dj + W, :]
                for di in range(3) for dj in range(3)]
        a = jnp.concatenate(cols, axis=-1).reshape(B * H * W, 9 * Cin)
        wm = jnp.transpose(w, (2, 3, 1, 0)).reshape(9 * Cin, Cout)
        return (a @ wm + b).reshape(B, H, W, Cout)

    def pool(x):
        B, H, W, C = x.shape
        return jnp.max(x.reshape(B, H // 2, 2, W // 2, 2, C), axis=(2, 4))

    def deconv2(x, w, b):
        B, H, W, Cin = x.shape
        Cout = w.shape[1]
        o = x.reshape(B * H * W, Cin) @ w.reshape(Cin, Cout * 4)
        o = o.reshape(B, H, W, Cout, 2, 2) + b[None, None, None, :, None, None]
        o = jnp.transpose(o, (0, 1, 4, 2, 5, 3))
        return o.reshape(B, 2 * H, 2 * W, Cout)

    h1 = jax.nn.relu(conv3(x, params["w1"], params["b1"]))
    p1 = pool(h1)
    h2 = jax.nn.relu(conv3(p1, params["w2"], params["b2"]))
    comp = pool(h2)
    d1 = jax.nn.relu(deconv2(comp, params["wd1"], params["bd1"]))
    out = jax.nn.sigmoid(deconv2(d1, params["wd2"], params["bd2"]))
    return jnp.transpose(out, (0, 3, 1, 2)), jnp.transpose(comp, (0, 3, 1, 2))


# ----------------------------------------------------------------------------
# Deterministic parameter init (torch-default-like uniform(-1/sqrt(fan_in), .))
# ----------------------------------------------------------------------------
def init_params(key):
    def u(k, shape, fan_in):
        bound = 1.0 / jnp.sqrt(jnp.float32(fan_in))
        return jax.random.uniform(k, shape, jnp.float32, -bound, bound)

    ks = jax.random.split(key, 8)
    return {
        "w1": u(ks[0], (16, 1, 3, 3), 1 * 9),   "b1": u(ks[1], (16,), 1 * 9),
        "w2": u(ks[2], (4, 16, 3, 3), 16 * 9),  "b2": u(ks[3], (4,), 16 * 9),
        "wd1": u(ks[4], (4, 16, 2, 2), 16 * 4), "bd1": u(ks[5], (16,), 16 * 4),
        "wd2": u(ks[6], (16, 1, 2, 2), 1 * 4),  "bd2": u(ks[7], (1,), 1 * 4),
    }


if __name__ == "__main__":
    key = jax.random.PRNGKey(0)
    k_x, k_p = jax.random.split(key)
    B, H, W = 8, 16, 16                       # BT=4 images/step -> grid=(2,)
    x = jax.random.uniform(k_x, (B, 1, H, W), jnp.float32)
    params = init_params(k_p)

    out, compressed = jax.jit(network_forward)(x, params)
    jax.block_until_ready((out, compressed))

    assert out.shape == (B, 1, H, W), out.shape
    assert compressed.shape == (B, 4, H // 4, W // 4), compressed.shape
    assert bool(jnp.all(jnp.isfinite(out))) and bool(jnp.all(jnp.isfinite(compressed)))
    assert bool(jnp.all(out >= 0.0)) and bool(jnp.all(out <= 1.0))   # sigmoid range
    assert bool(jnp.all(compressed >= 0.0))                          # relu+maxpool

    # Numerical cross-check vs. plain-JAX reference (loose tol: MXU matmuls at
    # bf16 operand precision on both sides, different association order).
    out_ref, comp_ref = jax.jit(_reference_forward)(x, params)
    assert bool(jnp.allclose(out, out_ref, atol=4e-2, rtol=0.0))
    assert bool(jnp.allclose(compressed, comp_ref, atol=4e-2, rtol=0.0))

    print("KERNEL_OK")
</pallas_src>

<mosaic_0001>
module attributes {stable_mosaic.version = 11 : i64} {
  func.func @_fused_forward_kernel(%arg0: i32, %arg1: memref<1x64x16xf32, #tpu.memory_space<vmem>>, %arg2: memref<3x64x64xbf16, #tpu.memory_space<vmem>>, %arg3: memref<3x16x256xbf16, #tpu.memory_space<vmem>>, %arg4: memref<1x256xf32, #tpu.memory_space<vmem>>, %arg5: memref<2x32x64xbf16, #tpu.memory_space<vmem>>, %arg6: memref<2x256x128xbf16, #tpu.memory_space<vmem>>, %arg7: memref<3x32x32xbf16, #tpu.memory_space<vmem>>, %arg8: memref<3x128x32xbf16, #tpu.memory_space<vmem>>, %arg9: memref<1x32xf32, #tpu.memory_space<vmem>>, %arg10: memref<2x16x32xbf16, #tpu.memory_space<vmem>>, %arg11: memref<2x32x16xbf16, #tpu.memory_space<vmem>>, %arg12: memref<2x16x128xbf16, #tpu.memory_space<vmem>>, %arg13: memref<1x128xf32, #tpu.memory_space<vmem>>, %arg14: memref<2x32x16xbf16, #tpu.memory_space<vmem>>, %arg15: memref<2x128x16xbf16, #tpu.memory_space<vmem>>, %arg16: memref<1x16xf32, #tpu.memory_space<vmem>>, %arg17: memref<2x64x32xbf16, #tpu.memory_space<vmem>>, %arg18: memref<1x64x16xf32, #tpu.memory_space<vmem>>, %arg19: memref<1x16x16xf32, #tpu.memory_space<vmem>>) attributes {dimension_semantics = [#tpu.dimension_semantics<parallel>], iteration_bounds = array<i64: 2>, scalar_prefetch = 0 : i64, scratch_operands = 0 : i64, tpu.core_type = #tpu.core_type<tc>, window_params = [{transform_indices = @transform_0, window_bounds = array<i64: 1, 64, 16>}, {pipeline_mode = #tpu.pipeline_mode<synchronous>, transform_indices = @transform_1, window_bounds = array<i64: 3, 64, 64>}, {pipeline_mode = #tpu.pipeline_mode<synchronous>, transform_indices = @transform_2, window_bounds = array<i64: 3, 16, 256>}, {pipeline_mode = #tpu.pipeline_mode<synchronous>, transform_indices = @transform_3, window_bounds = array<i64: 1, 256>}, {pipeline_mode = #tpu.pipeline_mode<synchronous>, transform_indices = @transform_4, window_bounds = array<i64: 2, 32, 64>}, {pipeline_mode = #tpu.pipeline_mode<synchronous>, transform_indices = @transform_5, window_bounds = array<i64: 2, 256, 128>}, {pipeline_mode = #tpu.pipeline_mode<synchronous>, transform_indices = @transform_6, window_bounds = array<i64: 3, 32, 32>}, {pipeline_mode = #tpu.pipeline_mode<synchronous>, transform_indices = @transform_7, window_bounds = array<i64: 3, 128, 32>}, {pipeline_mode = #tpu.pipeline_mode<synchronous>, transform_indices = @transform_8, window_bounds = array<i64: 1, 32>}, {pipeline_mode = #tpu.pipeline_mode<synchronous>, transform_indices = @transform_9, window_bounds = array<i64: 2, 16, 32>}, {pipeline_mode = #tpu.pipeline_mode<synchronous>, transform_indices = @transform_10, window_bounds = array<i64: 2, 32, 16>}, {pipeline_mode = #tpu.pipeline_mode<synchronous>, transform_indices = @transform_11, window_bounds = array<i64: 2, 16, 128>}, {pipeline_mode = #tpu.pipeline_mode<synchronous>, transform_indices = @transform_12, window_bounds = array<i64: 1, 128>}, {pipeline_mode = #tpu.pipeline_mode<synchronous>, transform_indices = @transform_13, window_bounds = array<i64: 2, 32, 16>}, {pipeline_mode = #tpu.pipeline_mode<synchronous>, transform_indices = @transform_14, window_bounds = array<i64: 2, 128, 16>}, {pipeline_mode = #tpu.pipeline_mode<synchronous>, transform_indices = @transform_15, window_bounds = array<i64: 1, 16>}, {pipeline_mode = #tpu.pipeline_mode<synchronous>, transform_indices = @transform_16, window_bounds = array<i64: 2, 64, 32>}, {transform_indices = @transform_17, window_bounds = array<i64: 1, 64, 16>}, {transform_indices = @transform_18, window_bounds = array<i64: 1, 16, 16>}]} {
    %c0 = arith.constant 0 : index
    %c0_0 = arith.constant 0 : index
    %c0_1 = arith.constant 0 : index
    %0 = vector.load %arg1[%c0, %c0_0, %c0_1] : memref<1x64x16xf32, #tpu.memory_space<vmem>>, vector<1x64x16xf32>
    %1 = vector.shape_cast %0 : vector<1x64x16xf32> to vector<64x16xf32>
    %c0_2 = arith.constant 0 : index
    %c0_3 = arith.constant 0 : index
    %c0_4 = arith.constant 0 : index
    %2 = vector.load %arg2[%c0_2, %c0_3, %c0_4] : memref<3x64x64xbf16, #tpu.memory_space<vmem>>, vector<1x64x64xbf16>
    %3 = vector.shape_cast %2 : vector<1x64x64xbf16> to vector<64x64xbf16>
    %4 = arith.truncf %1 : vector<64x16xf32> to vector<64x16xbf16>
    %cst = arith.constant dense<0.000000e+00> : vector<64x16xf32>
    %5 = tpu.matmul %3, %4, %cst {dimension_numbers = #tpu.dot_dimension_numbers<[1], [0], [0], [1], [0, 0, 1, 1], [], []>} : vector<64x64xbf16>, vector<64x16xbf16>, vector<64x16xf32> -> vector<64x16xf32>
    %c0_5 = arith.constant 0 : index
    %c0_6 = arith.constant 0 : index
    %c0_7 = arith.constant 0 : index
    %6 = vector.load %arg3[%c0_5, %c0_6, %c0_7] : memref<3x16x256xbf16, #tpu.memory_space<vmem>>, vector<1x16x256xbf16>
    %7 = vector.shape_cast %6 : vector<1x16x256xbf16> to vector<16x256xbf16>
    %8 = arith.truncf %5 : vector<64x16xf32> to vector<64x16xbf16>
    %cst_8 = arith.constant dense<0.000000e+00> : vector<64x256xf32>
    %9 = tpu.matmul %8, %7, %cst_8 {dimension_numbers = #tpu.dot_dimension_numbers<[1], [0], [0], [1], [0, 0, 1, 1], [], []>} : vector<64x16xbf16>, vector<16x256xbf16>, vector<64x256xf32> -> vector<64x256xf32>
    %c1 = arith.constant 1 : index
    %c0_9 = arith.constant 0 : index
    %c0_10 = arith.constant 0 : index
    %10 = vector.load %arg2[%c1, %c0_9, %c0_10] : memref<3x64x64xbf16, #tpu.memory_space<vmem>>, vector<1x64x64xbf16>
    %11 = vector.shape_cast %10 : vector<1x64x64xbf16> to vector<64x64xbf16>
    %12 = arith.truncf %1 : vector<64x16xf32> to vector<64x16xbf16>
    %cst_11 = arith.constant dense<0.000000e+00> : vector<64x16xf32>
    %13 = tpu.matmul %11, %12, %cst_11 {dimension_numbers = #tpu.dot_dimension_numbers<[1], [0], [0], [1], [0, 0, 1, 1], [], []>} : vector<64x64xbf16>, vector<64x16xbf16>, vector<64x16xf32> -> vector<64x16xf32>
    %c1_12 = arith.constant 1 : index
    %c0_13 = arith.constant 0 : index
    %c0_14 = arith.constant 0 : index
    %14 = vector.load %arg3[%c1_12, %c0_13, %c0_14] : memref<3x16x256xbf16, #tpu.memory_space<vmem>>, vector<1x16x256xbf16>
    %15 = vector.shape_cast %14 : vector<1x16x256xbf16> to vector<16x256xbf16>
    %16 = arith.truncf %13 : vector<64x16xf32> to vector<64x16xbf16>
    %cst_15 = arith.constant dense<0.000000e+00> : vector<64x256xf32>
    %17 = tpu.matmul %16, %15, %cst_15 {dimension_numbers = #tpu.dot_dimension_numbers<[1], [0], [0], [1], [0, 0, 1, 1], [], []>} : vector<64x16xbf16>, vector<16x256xbf16>, vector<64x256xf32> -> vector<64x256xf32>
    %18 = arith.addf %9, %17 : vector<64x256xf32>
    %c2 = arith.constant 2 : index
    %c0_16 = arith.constant 0 : index
    %c0_17 = arith.constant 0 : index
    %19 = vector.load %arg2[%c2, %c0_16, %c0_17] : memref<3x64x64xbf16, #tpu.memory_space<vmem>>, vector<1x64x64xbf16>
    %20 = vector.shape_cast %19 : vector<1x64x64xbf16> to vector<64x64xbf16>
    %21 = arith.truncf %1 : vector<64x16xf32> to vector<64x16xbf16>
    %cst_18 = arith.constant dense<0.000000e+00> : vector<64x16xf32>
    %22 = tpu.matmul %20, %21, %cst_18 {dimension_numbers = #tpu.dot_dimension_numbers<[1], [0], [0], [1], [0, 0, 1, 1], [], []>} : vector<64x64xbf16>, vector<64x16xbf16>, vector<64x16xf32> -> vector<64x16xf32>
    %c2_19 = arith.constant 2 : index
    %c0_20 = arith.constant 0 : index
    %c0_21 = arith.constant 0 : index
    %23 = vector.load %arg3[%c2_19, %c0_20, %c0_21] : memref<3x16x256xbf16, #tpu.memory_space<vmem>>, vector<1x16x256xbf16>
    %24 = vector.shape_cast %23 : vector<1x16x256xbf16> to vector<16x256xbf16>
    %25 = arith.truncf %22 : vector<64x16xf32> to vector<64x16xbf16>
    %cst_22 = arith.constant dense<0.000000e+00> : vector<64x256xf32>
    %26 = tpu.matmul %25, %24, %cst_22 {dimension_numbers = #tpu.dot_dimension_numbers<[1], [0], [0], [1], [0, 0, 1, 1], [], []>} : vector<64x16xbf16>, vector<16x256xbf16>, vector<64x256xf32> -> vector<64x256xf32>
    %27 = arith.addf %18, %26 : vector<64x256xf32>
    %c0_23 = arith.constant 0 : index
    %c0_24 = arith.constant 0 : index
    %28 = vector.load %arg4[%c0_23, %c0_24] : memref<1x256xf32, #tpu.memory_space<vmem>>, vector<1x256xf32>
    %29 = vector.broadcast %28 : vector<1x256xf32> to vector<64x256xf32>
    %30 = arith.addf %27, %29 : vector<64x256xf32>
    %cst_25 = arith.constant 0.000000e+00 : f32
    %31 = vector.broadcast %cst_25 : f32 to vector<64x256xf32>
    %32 = arith.maximumf %30, %31 : vector<64x256xf32>
    %c0_26 = arith.constant 0 : index
    %c0_27 = arith.constant 0 : index
    %c0_28 = arith.constant 0 : index
    %33 = vector.load %arg5[%c0_26, %c0_27, %c0_28] : memref<2x32x64xbf16, #tpu.memory_space<vmem>>, vector<1x32x64xbf16>
    %34 = vector.shape_cast %33 : vector<1x32x64xbf16> to vector<32x64xbf16>
    %35 = arith.truncf %32 : vector<64x256xf32> to vector<64x256xbf16>
    %cst_29 = arith.constant dense<0.000000e+00> : vector<32x256xf32>
    %36 = tpu.matmul %34, %35, %cst_29 {dimension_numbers = #tpu.dot_dimension_numbers<[1], [0], [0], [1], [0, 0, 1, 1], [], []>} : vector<32x64xbf16>, vector<64x256xbf16>, vector<32x256xf32> -> vector<32x256xf32>
    %c1_30 = arith.constant 1 : index
    %c0_31 = arith.constant 0 : index
    %c0_32 = arith.constant 0 : index
    %37 = vector.load %arg5[%c1_30, %c0_31, %c0_32] : memref<2x32x64xbf16, #tpu.memory_space<vmem>>, vector<1x32x64xbf16>
    %38 = vector.shape_cast %37 : vector<1x32x64xbf16> to vector<32x64xbf16>
    %39 = arith.truncf %32 : vector<64x256xf32> to vector<64x256xbf16>
    %cst_33 = arith.constant dense<0.000000e+00> : vector<32x256xf32>
    %40 = tpu.matmul %38, %39, %cst_33 {dimension_numbers = #tpu.dot_dimension_numbers<[1], [0], [0], [1], [0, 0, 1, 1], [], []>} : vector<32x64xbf16>, vector<64x256xbf16>, vector<32x256xf32> -> vector<32x256xf32>
    %41 = arith.maximumf %36, %40 : vector<32x256xf32>
    %c0_34 = arith.constant 0 : index
    %c0_35 = arith.constant 0 : index
    %c0_36 = arith.constant 0 : index
    %42 = vector.load %arg6[%c0_34, %c0_35, %c0_36] : memref<2x256x128xbf16, #tpu.memory_space<vmem>>, vector<1x256x128xbf16>
    %43 = vector.shape_cast %42 : vector<1x256x128xbf16> to vector<256x128xbf16>
    %44 = arith.truncf %41 : vector<32x256xf32> to vector<32x256xbf16>
    %cst_37 = arith.constant dense<0.000000e+00> : vector<32x128xf32>
    %45 = tpu.matmul %44, %43, %cst_37 {dimension_numbers = #tpu.dot_dimension_numbers<[1], [0], [0], [1], [0, 0, 1, 1], [], []>} : vector<32x256xbf16>, vector<256x128xbf16>, vector<32x128xf32> -> vector<32x128xf32>
    %c1_38 = arith.constant 1 : index
    %c0_39 = arith.constant 0 : index
    %c0_40 = arith.constant 0 : index
    %46 = vector.load %arg6[%c1_38, %c0_39, %c0_40] : memref<2x256x128xbf16, #tpu.memory_space<vmem>>, vector<1x256x128xbf16>
    %47 = vector.shape_cast %46 : vector<1x256x128xbf16> to vector<256x128xbf16>
    %48 = arith.truncf %41 : vector<32x256xf32> to vector<32x256xbf16>
    %cst_41 = arith.constant dense<0.000000e+00> : vector<32x128xf32>
    %49 = tpu.matmul %48, %47, %cst_41 {dimension_numbers = #tpu.dot_dimension_numbers<[1], [0], [0], [1], [0, 0, 1, 1], [], []>} : vector<32x256xbf16>, vector<256x128xbf16>, vector<32x128xf32> -> vector<32x128xf32>
    %50 = arith.maximumf %45, %49 : vector<32x128xf32>
    %c0_42 = arith.constant 0 : index
    %c0_43 = arith.constant 0 : index
    %c0_44 = arith.constant 0 : index
    %51 = vector.load %arg7[%c0_42, %c0_43, %c0_44] : memref<3x32x32xbf16, #tpu.memory_space<vmem>>, vector<1x32x32xbf16>
    %52 = vector.shape_cast %51 : vector<1x32x32xbf16> to vector<32x32xbf16>
    %53 = arith.truncf %50 : vector<32x128xf32> to vector<32x128xbf16>
    %cst_45 = arith.constant dense<0.000000e+00> : vector<32x128xf32>
    %54 = tpu.matmul %52, %53, %cst_45 {dimension_numbers = #tpu.dot_dimension_numbers<[1], [0], [0], [1], [0, 0, 1, 1], [], []>} : vector<32x32xbf16>, vector<32x128xbf16>, vector<32x128xf32> -> vector<32x128xf32>
    %c0_46 = arith.constant 0 : index
    %c0_47 = arith.constant 0 : index
    %c0_48 = arith.constant 0 : index
    %55 = vector.load %arg8[%c0_46, %c0_47, %c0_48] : memref<3x128x32xbf16, #tpu.memory_space<vmem>>, vector<1x128x32xbf16>
    %56 = vector.shape_cast %55 : vector<1x128x32xbf16> to vector<128x32xbf16>
    %57 = arith.truncf %54 : vector<32x128xf32> to vector<32x128xbf16>
    %cst_49 = arith.constant dense<0.000000e+00> : vector<32x32xf32>
    %58 = tpu.matmul %57, %56, %cst_49 {dimension_numbers = #tpu.dot_dimension_numbers<[1], [0], [0], [1], [0, 0, 1, 1], [], []>} : vector<32x128xbf16>, vector<128x32xbf16>, vector<32x32xf32> -> vector<32x32xf32>
    %c1_50 = arith.constant 1 : index
    %c0_51 = arith.constant 0 : index
    %c0_52 = arith.constant 0 : index
    %59 = vector.load %arg7[%c1_50, %c0_51, %c0_52] : memref<3x32x32xbf16, #tpu.memory_space<vmem>>, vector<1x32x32xbf16>
    %60 = vector.shape_cast %59 : vector<1x32x32xbf16> to vector<32x32xbf16>
    %61 = arith.truncf %50 : vector<32x128xf32> to vector<32x128xbf16>
    %cst_53 = arith.constant dense<0.000000e+00> : vector<32x128xf32>
    %62 = tpu.matmul %60, %61, %cst_53 {dimension_numbers = #tpu.dot_dimension_numbers<[1], [0], [0], [1], [0, 0, 1, 1], [], []>} : vector<32x32xbf16>, vector<32x128xbf16>, vector<32x128xf32> -> vector<32x128xf32>
    %c1_54 = arith.constant 1 : index
    %c0_55 = arith.constant 0 : index
    %c0_56 = arith.constant 0 : index
    %63 = vector.load %arg8[%c1_54, %c0_55, %c0_56] : memref<3x128x32xbf16, #tpu.memory_space<vmem>>, vector<1x128x32xbf16>
    %64 = vector.shape_cast %63 : vector<1x128x32xbf16> to vector<128x32xbf16>
    %65 = arith.truncf %62 : vector<32x128xf32> to vector<32x128xbf16>
    %cst_57 = arith.constant dense<0.000000e+00> : vector<32x32xf32>
    %66 = tpu.matmul %65, %64, %cst_57 {dimension_numbers = #tpu.dot_dimension_numbers<[1], [0], [0], [1], [0, 0, 1, 1], [], []>} : vector<32x128xbf16>, vector<128x32xbf16>, vector<32x32xf32> -> vector<32x32xf32>
    %67 = arith.addf %58, %66 : vector<32x32xf32>
    %c2_58 = arith.constant 2 : index
    %c0_59 = arith.constant 0 : index
    %c0_60 = arith.constant 0 : index
    %68 = vector.load %arg7[%c2_58, %c0_59, %c0_60] : memref<3x32x32xbf16, #tpu.memory_space<vmem>>, vector<1x32x32xbf16>
    %69 = vector.shape_cast %68 : vector<1x32x32xbf16> to vector<32x32xbf16>
    %70 = arith.truncf %50 : vector<32x128xf32> to vector<32x128xbf16>
    %cst_61 = arith.constant dense<0.000000e+00> : vector<32x128xf32>
    %71 = tpu.matmul %69, %70, %cst_61 {dimension_numbers = #tpu.dot_dimension_numbers<[1], [0], [0], [1], [0, 0, 1, 1], [], []>} : vector<32x32xbf16>, vector<32x128xbf16>, vector<32x128xf32> -> vector<32x128xf32>
    %c2_62 = arith.constant 2 : index
    %c0_63 = arith.constant 0 : index
    %c0_64 = arith.constant 0 : index
    %72 = vector.load %arg8[%c2_62, %c0_63, %c0_64] : memref<3x128x32xbf16, #tpu.memory_space<vmem>>, vector<1x128x32xbf16>
    %73 = vector.shape_cast %72 : vector<1x128x32xbf16> to vector<128x32xbf16>
    %74 = arith.truncf %71 : vector<32x128xf32> to vector<32x128xbf16>
    %cst_65 = arith.constant dense<0.000000e+00> : vector<32x32xf32>
    %75 = tpu.matmul %74, %73, %cst_65 {dimension_numbers = #tpu.dot_dimension_numbers<[1], [0], [0], [1], [0, 0, 1, 1], [], []>} : vector<32x128xbf16>, vector<128x32xbf16>, vector<32x32xf32> -> vector<32x32xf32>
    %76 = arith.addf %67, %75 : vector<32x32xf32>
    %c0_66 = arith.constant 0 : index
    %c0_67 = arith.constant 0 : index
    %77 = vector.load %arg9[%c0_66, %c0_67] : memref<1x32xf32, #tpu.memory_space<vmem>>, vector<1x32xf32>
    %78 = vector.broadcast %77 : vector<1x32xf32> to vector<32x32xf32>
    %79 = arith.addf %76, %78 : vector<32x32xf32>
    %cst_68 = arith.constant 0.000000e+00 : f32
    %80 = vector.broadcast %cst_68 : f32 to vector<32x32xf32>
    %81 = arith.maximumf %79, %80 : vector<32x32xf32>
    %c0_69 = arith.constant 0 : index
    %c0_70 = arith.constant 0 : index
    %c0_71 = arith.constant 0 : index
    %82 = vector.load %arg10[%c0_69, %c0_70, %c0_71] : memref<2x16x32xbf16, #tpu.memory_space<vmem>>, vector<1x16x32xbf16>
    %83 = vector.shape_cast %82 : vector<1x16x32xbf16> to vector<16x32xbf16>
    %84 = arith.truncf %81 : vector<32x32xf32> to vector<32x32xbf16>
    %cst_72 = arith.constant dense<0.000000e+00> : vector<16x32xf32>
    %85 = tpu.matmul %83, %84, %cst_72 {dimension_numbers = #tpu.dot_dimension_numbers<[1], [0], [0], [1], [0, 0, 1, 1], [], []>} : vector<16x32xbf16>, vector<32x32xbf16>, vector<16x32xf32> -> vector<16x32xf32>
    %c1_73 = arith.constant 1 : index
    %c0_74 = arith.constant 0 : index
    %c0_75 = arith.constant 0 : index
    %86 = vector.load %arg10[%c1_73, %c0_74, %c0_75] : memref<2x16x32xbf16, #tpu.memory_space<vmem>>, vector<1x16x32xbf16>
    %87 = vector.shape_cast %86 : vector<1x16x32xbf16> to vector<16x32xbf16>
    %88 = arith.truncf %81 : vector<32x32xf32> to vector<32x32xbf16>
    %cst_76 = arith.constant dense<0.000000e+00> : vector<16x32xf32>
    %89 = tpu.matmul %87, %88, %cst_76 {dimension_numbers = #tpu.dot_dimension_numbers<[1], [0], [0], [1], [0, 0, 1, 1], [], []>} : vector<16x32xbf16>, vector<32x32xbf16>, vector<16x32xf32> -> vector<16x32xf32>
    %90 = arith.maximumf %85, %89 : vector<16x32xf32>
    %c0_77 = arith.constant 0 : index
    %c0_78 = arith.constant 0 : index
    %c0_79 = arith.constant 0 : index
    %91 = vector.load %arg11[%c0_77, %c0_78, %c0_79] : memref<2x32x16xbf16, #tpu.memory_space<vmem>>, vector<1x32x16xbf16>
    %92 = vector.shape_cast %91 : vector<1x32x16xbf16> to vector<32x16xbf16>
    %93 = arith.truncf %90 : vector<16x32xf32> to vector<16x32xbf16>
    %cst_80 = arith.constant dense<0.000000e+00> : vector<16x16xf32>
    %94 = tpu.matmul %93, %92, %cst_80 {dimension_numbers = #tpu.dot_dimension_numbers<[1], [0], [0], [1], [0, 0, 1, 1], [], []>} : vector<16x32xbf16>, vector<32x16xbf16>, vector<16x16xf32> -> vector<16x16xf32>
    %c1_81 = arith.constant 1 : index
    %c0_82 = arith.constant 0 : index
    %c0_83 = arith.constant 0 : index
    %95 = vector.load %arg11[%c1_81, %c0_82, %c0_83] : memref<2x32x16xbf16, #tpu.memory_space<vmem>>, vector<1x32x16xbf16>
    %96 = vector.shape_cast %95 : vector<1x32x16xbf16> to vector<32x16xbf16>
    %97 = arith.truncf %90 : vector<16x32xf32> to vector<16x32xbf16>
    %cst_84 = arith.constant dense<0.000000e+00> : vector<16x16xf32>
    %98 = tpu.matmul %97, %96, %cst_84 {dimension_numbers = #tpu.dot_dimension_numbers<[1], [0], [0], [1], [0, 0, 1, 1], [], []>} : vector<16x32xbf16>, vector<32x16xbf16>, vector<16x16xf32> -> vector<16x16xf32>
    %99 = arith.maximumf %94, %98 : vector<16x16xf32>
    %c0_85 = arith.constant 0 : index
    %c0_86 = arith.constant 0 : index
    %c0_87 = arith.constant 0 : index
    %100 = vector.load %arg19[%c0_85, %c0_86, %c0_87] : memref<1x16x16xf32, #tpu.memory_space<vmem>>, vector<1x16x16xf32>
    %101 = vector.shape_cast %100 : vector<1x16x16xf32> to vector<16x16xf32>
    %102 = vector.shape_cast %99 : vector<16x16xf32> to vector<1x16x16xf32>
    tpu.vector_store %arg19[%c0_85, %c0_86, %c0_87], %102 {strides = array<i32>} : memref<1x16x16xf32, #tpu.memory_space<vmem>>, vector<1x16x16xf32>,
    %c0_88 = arith.constant 0 : index
    %c0_89 = arith.constant 0 : index
    %c0_90 = arith.constant 0 : index
    %103 = vector.load %arg14[%c0_88, %c0_89, %c0_90] : memref<2x32x16xbf16, #tpu.memory_space<vmem>>, vector<1x32x16xbf16>
    %104 = vector.shape_cast %103 : vector<1x32x16xbf16> to vector<32x16xbf16>
    %c0_91 = arith.constant 0 : index
    %c0_92 = arith.constant 0 : index
    %c0_93 = arith.constant 0 : index
    %105 = vector.load %arg12[%c0_91, %c0_92, %c0_93] : memref<2x16x128xbf16, #tpu.memory_space<vmem>>, vector<1x16x128xbf16>
    %106 = vector.shape_cast %105 : vector<1x16x128xbf16> to vector<16x128xbf16>
    %107 = arith.truncf %99 : vector<16x16xf32> to vector<16x16xbf16>
    %cst_94 = arith.constant dense<0.000000e+00> : vector<16x128xf32>
    %108 = tpu.matmul %107, %106, %cst_94 {dimension_numbers = #tpu.dot_dimension_numbers<[1], [0], [0], [1], [0, 0, 1, 1], [], []>} : vector<16x16xbf16>, vector<16x128xbf16>, vector<16x128xf32> -> vector<16x128xf32>
    %109 = arith.truncf %108 : vector<16x128xf32> to vector<16x128xbf16>
    %cst_95 = arith.constant dense<0.000000e+00> : vector<32x128xf32>
    %110 = tpu.matmul %104, %109, %cst_95 {dimension_numbers = #tpu.dot_dimension_numbers<[1], [0], [0], [1], [0, 0, 1, 1], [], []>} : vector<32x16xbf16>, vector<16x128xbf16>, vector<32x128xf32> -> vector<32x128xf32>
    %c1_96 = arith.constant 1 : index
    %c0_97 = arith.constant 0 : index
    %c0_98 = arith.constant 0 : index
    %111 = vector.load %arg14[%c1_96, %c0_97, %c0_98] : memref<2x32x16xbf16, #tpu.memory_space<vmem>>, vector<1x32x16xbf16>
    %112 = vector.shape_cast %111 : vector<1x32x16xbf16> to vector<32x16xbf16>
    %c1_99 = arith.constant 1 : index
    %c0_100 = arith.constant 0 : index
    %c0_101 = arith.constant 0 : index
    %113 = vector.load %arg12[%c1_99, %c0_100, %c0_101] : memref<2x16x128xbf16, #tpu.memory_space<vmem>>, vector<1x16x128xbf16>
    %114 = vector.shape_cast %113 : vector<1x16x128xbf16> to vector<16x128xbf16>
    %115 = arith.truncf %99 : vector<16x16xf32> to vector<16x16xbf16>
    %cst_102 = arith.constant dense<0.000000e+00> : vector<16x128xf32>
    %116 = tpu.matmul %115, %114, %cst_102 {dimension_numbers = #tpu.dot_dimension_numbers<[1], [0], [0], [1], [0, 0, 1, 1], [], []>} : vector<16x16xbf16>, vector<16x128xbf16>, vector<16x128xf32> -> vector<16x128xf32>
    %117 = arith.truncf %116 : vector<16x128xf32> to vector<16x128xbf16>
    %cst_103 = arith.constant dense<0.000000e+00> : vector<32x128xf32>
    %118 = tpu.matmul %112, %117, %cst_103 {dimension_numbers = #tpu.dot_dimension_numbers<[1], [0], [0], [1], [0, 0, 1, 1], [], []>} : vector<32x16xbf16>, vector<16x128xbf16>, vector<32x128xf32> -> vector<32x128xf32>
    %119 = arith.addf %110, %118 : vector<32x128xf32>
    %c0_104 = arith.constant 0 : index
    %c0_105 = arith.constant 0 : index
    %120 = vector.load %arg13[%c0_104, %c0_105] : memref<1x128xf32, #tpu.memory_space<vmem>>, vector<1x128xf32>
    %121 = vector.broadcast %120 : vector<1x128xf32> to vector<32x128xf32>
    %122 = arith.addf %119, %121 : vector<32x128xf32>
    %cst_106 = arith.constant 0.000000e+00 : f32
    %123 = vector.broadcast %cst_106 : f32 to vector<32x128xf32>
    %124 = arith.maximumf %122, %123 : vector<32x128xf32>
    %c0_107 = arith.constant 0 : index
    %c0_108 = arith.constant 0 : index
    %c0_109 = arith.constant 0 : index
    %125 = vector.load %arg17[%c0_107, %c0_108, %c0_109] : memref<2x64x32xbf16, #tpu.memory_space<vmem>>, vector<1x64x32xbf16>
    %126 = vector.shape_cast %125 : vector<1x64x32xbf16> to vector<64x32xbf16>
    %c0_110 = arith.constant 0 : index
    %c0_111 = arith.constant 0 : index
    %c0_112 = arith.constant 0 : index
    %127 = vector.load %arg15[%c0_110, %c0_111, %c0_112] : memref<2x128x16xbf16, #tpu.memory_space<vmem>>, vector<1x128x16xbf16>
    %128 = vector.shape_cast %127 : vector<1x128x16xbf16> to vector<128x16xbf16>
    %129 = arith.truncf %124 : vector<32x128xf32> to vector<32x128xbf16>
    %cst_113 = arith.constant dense<0.000000e+00> : vector<32x16xf32>
    %130 = tpu.matmul %129, %128, %cst_113 {dimension_numbers = #tpu.dot_dimension_numbers<[1], [0], [0], [1], [0, 0, 1, 1], [], []>} : vector<32x128xbf16>, vector<128x16xbf16>, vector<32x16xf32> -> vector<32x16xf32>
    %131 = arith.truncf %130 : vector<32x16xf32> to vector<32x16xbf16>
    %cst_114 = arith.constant dense<0.000000e+00> : vector<64x16xf32>
    %132 = tpu.matmul %126, %131, %cst_114 {dimension_numbers = #tpu.dot_dimension_numbers<[1], [0], [0], [1], [0, 0, 1, 1], [], []>} : vector<64x32xbf16>, vector<32x16xbf16>, vector<64x16xf32> -> vector<64x16xf32>
    %c1_115 = arith.constant 1 : index
    %c0_116 = arith.constant 0 : index
    %c0_117 = arith.constant 0 : index
    %133 = vector.load %arg17[%c1_115, %c0_116, %c0_117] : memref<2x64x32xbf16, #tpu.memory_space<vmem>>, vector<1x64x32xbf16>
    %134 = vector.shape_cast %133 : vector<1x64x32xbf16> to vector<64x32xbf16>
    %c1_118 = arith.constant 1 : index
    %c0_119 = arith.constant 0 : index
    %c0_120 = arith.constant 0 : index
    %135 = vector.load %arg15[%c1_118, %c0_119, %c0_120] : memref<2x128x16xbf16, #tpu.memory_space<vmem>>, vector<1x128x16xbf16>
    %136 = vector.shape_cast %135 : vector<1x128x16xbf16> to vector<128x16xbf16>
    %137 = arith.truncf %124 : vector<32x128xf32> to vector<32x128xbf16>
    %cst_121 = arith.constant dense<0.000000e+00> : vector<32x16xf32>
    %138 = tpu.matmul %137, %136, %cst_121 {dimension_numbers = #tpu.dot_dimension_numbers<[1], [0], [0], [1], [0, 0, 1, 1], [], []>} : vector<32x128xbf16>, vector<128x16xbf16>, vector<32x16xf32> -> vector<32x16xf32>
    %139 = arith.truncf %138 : vector<32x16xf32> to vector<32x16xbf16>
    %cst_122 = arith.constant dense<0.000000e+00> : vector<64x16xf32>
    %140 = tpu.matmul %134, %139, %cst_122 {dimension_numbers = #tpu.dot_dimension_numbers<[1], [0], [0], [1], [0, 0, 1, 1], [], []>} : vector<64x32xbf16>, vector<32x16xbf16>, vector<64x16xf32> -> vector<64x16xf32>
    %141 = arith.addf %132, %140 : vector<64x16xf32>
    %c0_123 = arith.constant 0 : index
    %c0_124 = arith.constant 0 : index
    %142 = vector.load %arg16[%c0_123, %c0_124] : memref<1x16xf32, #tpu.memory_space<vmem>>, vector<1x16xf32>
    %143 = vector.broadcast %142 : vector<1x16xf32> to vector<64x16xf32>
    %144 = arith.addf %141, %143 : vector<64x16xf32>
    %cst_125 = arith.constant 0.000000e+00 : f32
    %145 = vector.broadcast %cst_125 : f32 to vector<64x16xf32>
    %146 = arith.subf %145, %144 : vector<64x16xf32>
    %147 = math.exp %146 : vector<64x16xf32>
    %cst_126 = arith.constant 1.000000e+00 : f32
    %148 = vector.broadcast %cst_126 : f32 to vector<64x16xf32>
    %149 = arith.addf %148, %147 : vector<64x16xf32>
    %cst_127 = arith.constant 1.000000e+00 : f32
    %150 = vector.broadcast %cst_127 : f32 to vector<64x16xf32>
    %151 = arith.divf %150, %149 : vector<64x16xf32>
    %c0_128 = arith.constant 0 : index
    %c0_129 = arith.constant 0 : index
    %c0_130 = arith.constant 0 : index
    %152 = vector.load %arg18[%c0_128, %c0_129, %c0_130] : memref<1x64x16xf32, #tpu.memory_space<vmem>>, vector<1x64x16xf32>
    %153 = vector.shape_cast %152 : vector<1x64x16xf32> to vector<64x16xf32>
    %154 = vector.shape_cast %151 : vector<64x16xf32> to vector<1x64x16xf32>
    tpu.vector_store %arg18[%c0_128, %c0_129, %c0_130], %154 {strides = array<i32>} : memref<1x64x16xf32, #tpu.memory_space<vmem>>, vector<1x64x16xf32>,
    return
  }
  func.func @transform_0(%arg0: i32) -> (i32, i32, i32) {
    %c0_i32 = arith.constant 0 : i32
    %c0_i32_0 = arith.constant 0 : i32
    %c0_i32_1 = arith.constant 0 : i32
    return %arg0, %c0_i32, %c0_i32_0 : i32, i32, i32
  }
  func.func @transform_1(%arg0: i32) -> (i32, i32, i32) {
    %c0_i32 = arith.constant 0 : i32
    %c0_i32_0 = arith.constant 0 : i32
    %c0_i32_1 = arith.constant 0 : i32
    %c0_i32_2 = arith.constant 0 : i32
    return %c0_i32, %c0_i32_0, %c0_i32_1 : i32, i32, i32
  }
  func.func @transform_2(%arg0: i32) -> (i32, i32, i32) {
    %c0_i32 = arith.constant 0 : i32
    %c0_i32_0 = arith.constant 0 : i32
    %c0_i32_1 = arith.constant 0 : i32
    %c0_i32_2 = arith.constant 0 : i32
    return %c0_i32, %c0_i32_0, %c0_i32_1 : i32, i32, i32
  }
  func.func @transform_3(%arg0: i32) -> (i32, i32) {
    %c0_i32 = arith.constant 0 : i32
    %c0_i32_0 = arith.constant 0 : i32
    %c0_i32_1 = arith.constant 0 : i32
    return %c0_i32, %c0_i32_0 : i32, i32
  }
  func.func @transform_4(%arg0: i32) -> (i32, i32, i32) {
    %c0_i32 = arith.constant 0 : i32
    %c0_i32_0 = arith.constant 0 : i32
    %c0_i32_1 = arith.constant 0 : i32
    %c0_i32_2 = arith.constant 0 : i32
    return %c0_i32, %c0_i32_0, %c0_i32_1 : i32, i32, i32
  }
  func.func @transform_5(%arg0: i32) -> (i32, i32, i32) {
    %c0_i32 = arith.constant 0 : i32
    %c0_i32_0 = arith.constant 0 : i32
    %c0_i32_1 = arith.constant 0 : i32
    %c0_i32_2 = arith.constant 0 : i32
    return %c0_i32, %c0_i32_0, %c0_i32_1 : i32, i32, i32
  }
  func.func @transform_6(%arg0: i32) -> (i32, i32, i32) {
    %c0_i32 = arith.constant 0 : i32
    %c0_i32_0 = arith.constant 0 : i32
    %c0_i32_1 = arith.constant 0 : i32
    %c0_i32_2 = arith.constant 0 : i32
    return %c0_i32, %c0_i32_0, %c0_i32_1 : i32, i32, i32
  }
  func.func @transform_7(%arg0: i32) -> (i32, i32, i32) {
    %c0_i32 = arith.constant 0 : i32
    %c0_i32_0 = arith.constant 0 : i32
    %c0_i32_1 = arith.constant 0 : i32
    %c0_i32_2 = arith.constant 0 : i32
    return %c0_i32, %c0_i32_0, %c0_i32_1 : i32, i32, i32
  }
  func.func @transform_8(%arg0: i32) -> (i32, i32) {
    %c0_i32 = arith.constant 0 : i32
    %c0_i32_0 = arith.constant 0 : i32
    %c0_i32_1 = arith.constant 0 : i32
    return %c0_i32, %c0_i32_0 : i32, i32
  }
  func.func @transform_9(%arg0: i32) -> (i32, i32, i32) {
    %c0_i32 = arith.constant 0 : i32
    %c0_i32_0 = arith.constant 0 : i32
    %c0_i32_1 = arith.constant 0 : i32
    %c0_i32_2 = arith.constant 0 : i32
    return %c0_i32, %c0_i32_0, %c0_i32_1 : i32, i32, i32
  }
  func.func @transform_10(%arg0: i32) -> (i32, i32, i32) {
    %c0_i32 = arith.constant 0 : i32
    %c0_i32_0 = arith.constant 0 : i32
    %c0_i32_1 = arith.constant 0 : i32
    %c0_i32_2 = arith.constant 0 : i32
    return %c0_i32, %c0_i32_0, %c0_i32_1 : i32, i32, i32
  }
  func.func @transform_11(%arg0: i32) -> (i32, i32, i32) {
    %c0_i32 = arith.constant 0 : i32
    %c0_i32_0 = arith.constant 0 : i32
    %c0_i32_1 = arith.constant 0 : i32
    %c0_i32_2 = arith.constant 0 : i32
    return %c0_i32, %c0_i32_0, %c0_i32_1 : i32, i32, i32
  }
  func.func @transform_12(%arg0: i32) -> (i32, i32) {
    %c0_i32 = arith.constant 0 : i32
    %c0_i32_0 = arith.constant 0 : i32
    %c0_i32_1 = arith.constant 0 : i32
    return %c0_i32, %c0_i32_0 : i32, i32
  }
  func.func @transform_13(%arg0: i32) -> (i32, i32, i32) {
    %c0_i32 = arith.constant 0 : i32
    %c0_i32_0 = arith.constant 0 : i32
    %c0_i32_1 = arith.constant 0 : i32
    %c0_i32_2 = arith.constant 0 : i32
    return %c0_i32, %c0_i32_0, %c0_i32_1 : i32, i32, i32
  }
  func.func @transform_14(%arg0: i32) -> (i32, i32, i32) {
    %c0_i32 = arith.constant 0 : i32
    %c0_i32_0 = arith.constant 0 : i32
    %c0_i32_1 = arith.constant 0 : i32
    %c0_i32_2 = arith.constant 0 : i32
    return %c0_i32, %c0_i32_0, %c0_i32_1 : i32, i32, i32
  }
  func.func @transform_15(%arg0: i32) -> (i32, i32) {
    %c0_i32 = arith.constant 0 : i32
    %c0_i32_0 = arith.constant 0 : i32
    %c0_i32_1 = arith.constant 0 : i32
    return %c0_i32, %c0_i32_0 : i32, i32
  }
  func.func @transform_16(%arg0: i32) -> (i32, i32, i32) {
    %c0_i32 = arith.constant 0 : i32
    %c0_i32_0 = arith.constant 0 : i32
    %c0_i32_1 = arith.constant 0 : i32
    %c0_i32_2 = arith.constant 0 : i32
    return %c0_i32, %c0_i32_0, %c0_i32_1 : i32, i32, i32
  }
  func.func @transform_17(%arg0: i32) -> (i32, i32, i32) {
    %c0_i32 = arith.constant 0 : i32
    %c0_i32_0 = arith.constant 0 : i32
    %c0_i32_1 = arith.constant 0 : i32
    return %arg0, %c0_i32, %c0_i32_0 : i32, i32, i32
  }
  func.func @transform_18(%arg0: i32) -> (i32, i32, i32) {
    %c0_i32 = arith.constant 0 : i32
    %c0_i32_0 = arith.constant 0 : i32
    %c0_i32_1 = arith.constant 0 : i32
    return %arg0, %c0_i32, %c0_i32_0 : i32, i32, i32
  }
}

</mosaic_0001>

<llo_original>
// kernel: network_forward.1
$region0: #{network_forward.1}
  #allocation0 [shape = 'u32[]', space=smem, size = 0x4, offset = 0x4, fixed_abs, tag = 'smem constant byte address 0x4 - core index']
  #allocation1 [shape = 'u32[144,128]{1,0:T(1,128)}', space=vmem, size = 0x12000, scoped, tag = 'internal scratch']
  %s0 = inlined_call_operand.vmem [shape: f32[2,64,16], index: 0, kind: input, shape index: {}]
  %s1 = inlined_call_operand.vmem [shape: bf16[3,64,64], index: 1, kind: input, shape index: {}]
  %s2 = inlined_call_operand.vmem [shape: bf16[3,16,256], index: 2, kind: input, shape index: {}]
  %s3 = inlined_call_operand.vmem [shape: f32[1,256], index: 3, kind: input, shape index: {}]
  %s4 = inlined_call_operand.vmem [shape: bf16[2,32,64], index: 4, kind: input, shape index: {}]
  %s5 = inlined_call_operand.vmem [shape: bf16[2,256,128], index: 5, kind: input, shape index: {}]
  %s6 = inlined_call_operand.vmem [shape: bf16[3,32,32], index: 6, kind: input, shape index: {}]
  %s7 = inlined_call_operand.vmem [shape: bf16[3,128,32], index: 7, kind: input, shape index: {}]
  %s8 = inlined_call_operand.vmem [shape: f32[1,32], index: 8, kind: input, shape index: {}]
  %s9 = inlined_call_operand.vmem [shape: bf16[2,16,32], index: 9, kind: input, shape index: {}]
  %s10 = inlined_call_operand.vmem [shape: bf16[2,32,16], index: 10, kind: input, shape index: {}, may-alias: {10,13}]
  %s11 = inlined_call_operand.vmem [shape: bf16[2,16,128], index: 11, kind: input, shape index: {}]
  %s12 = inlined_call_operand.vmem [shape: f32[1,128], index: 12, kind: input, shape index: {}]
  %s13 = inlined_call_operand.vmem [shape: bf16[2,32,16], index: 13, kind: input, shape index: {}, may-alias: {10,13}]
  %s14 = inlined_call_operand.vmem [shape: bf16[2,128,16], index: 14, kind: input, shape index: {}]
  %s15 = inlined_call_operand.vmem [shape: f32[1,16], index: 15, kind: input, shape index: {}]
  %s16 = inlined_call_operand.vmem [shape: bf16[2,64,32], index: 16, kind: input, shape index: {}]
  %s17 = inlined_call_operand.hbm [shape: f32[2,64,16], index: 17, kind: output, shape index: {0}]
  %s18 = inlined_call_operand.vmem [shape: f32[2,16,16], index: 18, kind: output, shape index: {1}]
  %19 = xla_tuple %s17, %s18
  %s20 = sld [smem:[#allocation0]]
  $region109: #{network_forward.1} parent=0
    _
  %s22 = ssub.s32 1, %s20
  %s23 = scalar_select 0, %s22, %s20
  $region1: #{network_forward.1} parent=0
    #allocation2 [shape = 'u8[65536]{0}', space=vmem, size = 0x10000, scoped, tag = 'output window, operand 0']
    #allocation3 [shape = 's32[2]{0}', space=sflag, size = 0x8, scoped, tag = 'scoped memory for network_forward.1']
    %24 = vsyncpa [#allocation3], 0
    %s25 = scalar_lea.sflag [#allocation3], 1
    %26 = vsyncpa %s25, 0
    loop: start=0, step=1, limit=4
    $region2: #{network_forward.1} parent=1 // loop_pre_header
      _
    $region3: #{network_forward.1} parent=1 // loop_header
      %s28 = sphi 0, %s32
      %p29 = scmp.ge.s32.totalorder %s28, 4
      %s38 = sphi 0, %s40
      %s41 = sphi 0, %s38
      %s42 = sphi 0, %s41
      %s58 = sphi 0, %s42
      %s62 = sphi 0, %s62
      %s64 = sphi 0, %s62
      %s65 = sphi 0, %s64
      %s79 = sphi 0, %s65
      %s83 = sphi 0, %s83
      %s85 = sphi 0, %s83
      %s86 = sphi 0, %s85
      %s100 = sphi 0, %s86
      %s104 = sphi 0, %s104
      %s106 = sphi 0, %s104
      %s107 = sphi 0, %s106
      %s121 = sphi 0, %s107
      %s125 = sphi 0, %s125
      %s127 = sphi 0, %s125
      %s128 = sphi 0, %s127
      %s142 = sphi 0, %s128
      %s146 = sphi 0, %s146
      %s148 = sphi 0, %s146
      %s149 = sphi 0, %s148
      %s163 = sphi 0, %s149
      %s167 = sphi 0, %s167
      %s169 = sphi 0, %s167
      %s170 = sphi 0, %s169
      %s184 = sphi 0, %s170
      %s188 = sphi 0, %s188
      %s190 = sphi 0, %s188
      %s191 = sphi 0, %s190
      %s205 = sphi 0, %s191
      %s209 = sphi 0, %s209
      %s211 = sphi 0, %s209
      %s212 = sphi 0, %s211
      %s226 = sphi 0, %s212
      %s230 = sphi 0, %s230
      %s232 = sphi 0, %s230
      %s233 = sphi 0, %s232
      %s247 = sphi 0, %s233
      %s251 = sphi 0, %s251
      %s253 = sphi 0, %s251
      %s254 = sphi 0, %s253
      %s268 = sphi 0, %s254
      %s272 = sphi 0, %s272
      %s274 = sphi 0, %s272
      %s275 = sphi 0, %s274
      %s289 = sphi 0, %s275
      %s293 = sphi 0, %s293
      %s295 = sphi 0, %s293
      %s296 = sphi 0, %s295
      %s310 = sphi 0, %s296
      %s314 = sphi 0, %s314
      %s316 = sphi 0, %s314
      %s317 = sphi 0, %s316
      %s331 = sphi 0, %s317
      %s335 = sphi 0, %s335
      %s337 = sphi 0, %s335
      %s338 = sphi 0, %s337
      %s352 = sphi 0, %s338
      %s356 = sphi 0, %s356
      %s358 = sphi 0, %s356
      %s359 = sphi 0, %s358
      %s373 = sphi 0, %s359
      %s377 = sphi 0, %s377
      %s379 = sphi 0, %s377
      %s380 = sphi 0, %s379
      %s394 = sphi 0, %s380
      %s400 = sphi 0, %s402
      %s403 = sphi 0, %s400
      %s404 = sphi 0, %s403
      %s420 = sphi 0, %s404
      %s426 = sphi 0, %s428
      %s429 = sphi 0, %s426
      %s430 = sphi 0, %s429
      %s446 = sphi 0, %s430
    $region4: #{network_forward.1} parent=1 // loop_header_branch
      %31 = sbr.rel (%p29) target = $region8
    $region5: #{network_forward.1} parent=1 // loop_body
      %s33 = ssub.s32 %s28, 1
      %s34 = ssub.s32 %s28, 2
      %s35 = sadd.s32 %s28, 1
      %s36 = ssub.s32 %s28, %s35
      %p37 = scmp.eq.s32.totalorder %s36, 0
      %s39 = sadd.s32 %s38, 1
      %s40 = scalar_select %p37, %s38, %s39
      %p43 = pneg %p37
      %p44 = scmp.eq.s32.totalorder %s28, 1
      %p45 = por %p43, %p44
      %p46 = scmp.ne.s32.totalorder %s38, %s41
      %p47 = scmp.eq.s32.totalorder %s28, 0
      %p48 = por %p46, %p47
      %p49 = scmp.ne.s32.totalorder %s38, %s41
      %p50 = scmp.eq.s32.totalorder %s33, 1
      %p51 = por %p49, %p50
      %p52 = scmp.ne.s32.totalorder %s41, %s42
      %p53 = scmp.eq.s32.totalorder %s33, 0
      %p54 = por %p52, %p53
      %p55 = scmp.ne.s32.totalorder %s41, %s42
      %p56 = scmp.eq.s32.totalorder %s34, 1
      %p57 = por %p55, %p56
      %p59 = scmp.ne.s32.totalorder %s42, %s58
      %p60 = scmp.eq.s32.totalorder %s34, 0
      %p61 = por %p59, %p60
      %s63 = sadd.s32 %s62, 1
      %p66 = scmp.eq.s32.totalorder %s28, 1
      %p67 = scmp.ne.s32.totalorder %s62, %s64
      %p68 = scmp.eq.s32.totalorder %s28, 0
      %p69 = por %p67, %p68
      %p70 = scmp.ne.s32.totalorder %s62, %s64
      %p71 = scmp.eq.s32.totalorder %s33, 1
      %p72 = por %p70, %p71
      %p73 = scmp.ne.s32.totalorder %s64, %s65
      %p74 = scmp.eq.s32.totalorder %s33, 0
      %p75 = por %p73, %p74
      %p76 = scmp.ne.s32.totalorder %s64, %s65
      %p77 = scmp.eq.s32.totalorder %s34, 1
      %p78 = por %p76, %p77
      %p80 = scmp.ne.s32.totalorder %s65, %s79
      %p81 = scmp.eq.s32.totalorder %s34, 0
      %p82 = por %p80, %p81
      %s84 = sadd.s32 %s83, 1
      %p87 = scmp.eq.s32.totalorder %s28, 1
      %p88 = scmp.ne.s32.totalorder %s83, %s85
      %p89 = scmp.eq.s32.totalorder %s28, 0
      %p90 = por %p88, %p89
      %p91 = scmp.ne.s32.totalorder %s83, %s85
      %p92 = scmp.eq.s32.totalorder %s33, 1
      %p93 = por %p91, %p92
      %p94 = scmp.ne.s32.totalorder %s85, %s86
      %p95 = scmp.eq.s32.totalorder %s33, 0
      %p96 = por %p94, %p95
      %p97 = scmp.ne.s32.totalorder %s85, %s86
      %p98 = scmp.eq.s32.totalorder %s34, 1
      %p99 = por %p97, %p98
      %p101 = scmp.ne.s32.totalorder %s86, %s100
      %p102 = scmp.eq.s32.totalorder %s34, 0
      %p103 = por %p101, %p102
      %s105 = sadd.s32 %s104, 1
      %p108 = scmp.eq.s32.totalorder %s28, 1
      %p109 = scmp.ne.s32.totalorder %s104, %s106
      %p110 = scmp.eq.s32.totalorder %s28, 0
      %p111 = por %p109, %p110
      %p112 = scmp.ne.s32.totalorder %s104, %s106
      %p113 = scmp.eq.s32.totalorder %s33, 1
      %p114 = por %p112, %p113
      %p115 = scmp.ne.s32.totalorder %s106, %s107
      %p116 = scmp.eq.s32.totalorder %s33, 0
      %p117 = por %p115, %p116
      %p118 = scmp.ne.s32.totalorder %s106, %s107
      %p119 = scmp.eq.s32.totalorder %s34, 1
      %p120 = por %p118, %p119
      %p122 = scmp.ne.s32.totalorder %s107, %s121
      %p123 = scmp.eq.s32.totalorder %s34, 0
      %p124 = por %p122, %p123
      %s126 = sadd.s32 %s125, 1
      %p129 = scmp.eq.s32.totalorder %s28, 1
      %p130 = scmp.ne.s32.totalorder %s125, %s127
      %p131 = scmp.eq.s32.totalorder %s28, 0
      %p132 = por %p130, %p131
      %p133 = scmp.ne.s32.totalorder %s125, %s127
      %p134 = scmp.eq.s32.totalorder %s33, 1
      %p135 = por %p133, %p134
      %p136 = scmp.ne.s32.totalorder %s127, %s128
      %p137 = scmp.eq.s32.totalorder %s33, 0
      %p138 = por %p136, %p137
      %p139 = scmp.ne.s32.totalorder %s127, %s128
      %p140 = scmp.eq.s32.totalorder %s34, 1
      %p141 = por %p139, %p140
      %p143 = scmp.ne.s32.totalorder %s128, %s142
      %p144 = scmp.eq.s32.totalorder %s34, 0
      %p145 = por %p143, %p144
      %s147 = sadd.s32 %s146, 1
      %p150 = scmp.eq.s32.totalorder %s28, 1
      %p151 = scmp.ne.s32.totalorder %s146, %s148
      %p152 = scmp.eq.s32.totalorder %s28, 0
      %p153 = por %p151, %p152
      %p154 = scmp.ne.s32.totalorder %s146, %s148
      %p155 = scmp.eq.s32.totalorder %s33, 1
      %p156 = por %p154, %p155
      %p157 = scmp.ne.s32.totalorder %s148, %s149
      %p158 = scmp.eq.s32.totalorder %s33, 0
      %p159 = por %p157, %p158
      %p160 = scmp.ne.s32.totalorder %s148, %s149
      %p161 = scmp.eq.s32.totalorder %s34, 1
      %p162 = por %p160, %p161
      %p164 = scmp.ne.s32.totalorder %s149, %s163
      %p165 = scmp.eq.s32.totalorder %s34, 0
      %p166 = por %p164, %p165
      %s168 = sadd.s32 %s167, 1
      %p171 = scmp.eq.s32.totalorder %s28, 1
      %p172 = scmp.ne.s32.totalorder %s167, %s169
      %p173 = scmp.eq.s32.totalorder %s28, 0
      %p174 = por %p172, %p173
      %p175 = scmp.ne.s32.totalorder %s167, %s169
      %p176 = scmp.eq.s32.totalorder %s33, 1
      %p177 = por %p175, %p176
      %p178 = scmp.ne.s32.totalorder %s169, %s170
      %p179 = scmp.eq.s32.totalorder %s33, 0
      %p180 = por %p178, %p179
      %p181 = scmp.ne.s32.totalorder %s169, %s170
      %p182 = scmp.eq.s32.totalorder %s34, 1
      %p183 = por %p181, %p182
      %p185 = scmp.ne.s32.totalorder %s170, %s184
      %p186 = scmp.eq.s32.totalorder %s34, 0
      %p187 = por %p185, %p186
      %s189 = sadd.s32 %s188, 1
      %p192 = scmp.eq.s32.totalorder %s28, 1
      %p193 = scmp.ne.s32.totalorder %s188, %s190
      %p194 = scmp.eq.s32.totalorder %s28, 0
      %p195 = por %p193, %p194
      %p196 = scmp.ne.s32.totalorder %s188, %s190
      %p197 = scmp.eq.s32.totalorder %s33, 1
      %p198 = por %p196, %p197
      %p199 = scmp.ne.s32.totalorder %s190, %s191
      %p200 = scmp.eq.s32.totalorder %s33, 0
      %p201 = por %p199, %p200
      %p202 = scmp.ne.s32.totalorder %s190, %s191
      %p203 = scmp.eq.s32.totalorder %s34, 1
      %p204 = por %p202, %p203
      %p206 = scmp.ne.s32.totalorder %s191, %s205
      %p207 = scmp.eq.s32.totalorder %s34, 0
      %p208 = por %p206, %p207
      %s210 = sadd.s32 %s209, 1
      %p213 = scmp.eq.s32.totalorder %s28, 1
      %p214 = scmp.ne.s32.totalorder %s209, %s211
      %p215 = scmp.eq.s32.totalorder %s28, 0
      %p216 = por %p214, %p215
      %p217 = scmp.ne.s32.totalorder %s209, %s211
      %p218 = scmp.eq.s32.totalorder %s33, 1
      %p219 = por %p217, %p218
      %p220 = scmp.ne.s32.totalorder %s211, %s212
      %p221 = scmp.eq.s32.totalorder %s33, 0
      %p222 = por %p220, %p221
      %p223 = scmp.ne.s32.totalorder %s211, %s212
      %p224 = scmp.eq.s32.totalorder %s34, 1
      %p225 = por %p223, %p224
      %p227 = scmp.ne.s32.totalorder %s212, %s226
      %p228 = scmp.eq.s32.totalorder %s34, 0
      %p229 = por %p227, %p228
      %s231 = sadd.s32 %s230, 1
      %p234 = scmp.eq.s32.totalorder %s28, 1
      %p235 = scmp.ne.s32.totalorder %s230, %s232
      %p236 = scmp.eq.s32.totalorder %s28, 0
      %p237 = por %p235, %p236
      %p238 = scmp.ne.s32.totalorder %s230, %s232
      %p239 = scmp.eq.s32.totalorder %s33, 1
      %p240 = por %p238, %p239
      %p241 = scmp.ne.s32.totalorder %s232, %s233
      %p242 = scmp.eq.s32.totalorder %s33, 0
      %p243 = por %p241, %p242
      %p244 = scmp.ne.s32.totalorder %s232, %s233
      %p245 = scmp.eq.s32.totalorder %s34, 1
      %p246 = por %p244, %p245
      %p248 = scmp.ne.s32.totalorder %s233, %s247
      %p249 = scmp.eq.s32.totalorder %s34, 0
      %p250 = por %p248, %p249
      %s252 = sadd.s32 %s251, 1
      %p255 = scmp.eq.s32.totalorder %s28, 1
      %p256 = scmp.ne.s32.totalorder %s251, %s253
      %p257 = scmp.eq.s32.totalorder %s28, 0
      %p258 = por %p256, %p257
      %p259 = scmp.ne.s32.totalorder %s251, %s253
      %p260 = scmp.eq.s32.totalorder %s33, 1
      %p261 = por %p259, %p260
      %p262 = scmp.ne.s32.totalorder %s253, %s254
      %p263 = scmp.eq.s32.totalorder %s33, 0
      %p264 = por %p262, %p263
      %p265 = scmp.ne.s32.totalorder %s253, %s254
      %p266 = scmp.eq.s32.totalorder %s34, 1
      %p267 = por %p265, %p266
      %p269 = scmp.ne.s32.totalorder %s254, %s268
      %p270 = scmp.eq.s32.totalorder %s34, 0
      %p271 = por %p269, %p270
      %s273 = sadd.s32 %s272, 1
      %p276 = scmp.eq.s32.totalorder %s28, 1
      %p277 = scmp.ne.s32.totalorder %s272, %s274
      %p278 = scmp.eq.s32.totalorder %s28, 0
      %p279 = por %p277, %p278
      %p280 = scmp.ne.s32.totalorder %s272, %s274
      %p281 = scmp.eq.s32.totalorder %s33, 1
      %p282 = por %p280, %p281
      %p283 = scmp.ne.s32.totalorder %s274, %s275
      %p284 = scmp.eq.s32.totalorder %s33, 0
      %p285 = por %p283, %p284
      %p286 = scmp.ne.s32.totalorder %s274, %s275
      %p287 = scmp.eq.s32.totalorder %s34, 1
      %p288 = por %p286, %p287
      %p290 = scmp.ne.s32.totalorder %s275, %s289
      %p291 = scmp.eq.s32.totalorder %s34, 0
      %p292 = por %p290, %p291
      %s294 = sadd.s32 %s293, 1
      %p297 = scmp.eq.s32.totalorder %s28, 1
      %p298 = scmp.ne.s32.totalorder %s293, %s295
      %p299 = scmp.eq.s32.totalorder %s28, 0
      %p300 = por %p298, %p299
      %p301 = scmp.ne.s32.totalorder %s293, %s295
      %p302 = scmp.eq.s32.totalorder %s33, 1
      %p303 = por %p301, %p302
      %p304 = scmp.ne.s32.totalorder %s295, %s296
      %p305 = scmp.eq.s32.totalorder %s33, 0
      %p306 = por %p304, %p305
      %p307 = scmp.ne.s32.totalorder %s295, %s296
      %p308 = scmp.eq.s32.totalorder %s34, 1
      %p309 = por %p307, %p308
      %p311 = scmp.ne.s32.totalorder %s296, %s310
      %p312 = scmp.eq.s32.totalorder %s34, 0
      %p313 = por %p311, %p312
      %s315 = sadd.s32 %s314, 1
      %p318 = scmp.eq.s32.totalorder %s28, 1
      %p319 = scmp.ne.s32.totalorder %s314, %s316
      %p320 = scmp.eq.s32.totalorder %s28, 0
      %p321 = por %p319, %p320
      %p322 = scmp.ne.s32.totalorder %s314, %s316
      %p323 = scmp.eq.s32.totalorder %s33, 1
      %p324 = por %p322, %p323
      %p325 = scmp.ne.s32.totalorder %s316, %s317
      %p326 = scmp.eq.s32.totalorder %s33, 0
      %p327 = por %p325, %p326
      %p328 = scmp.ne.s32.totalorder %s316, %s317
      %p329 = scmp.eq.s32.totalorder %s34, 1
      %p330 = por %p328, %p329
      %p332 = scmp.ne.s32.totalorder %s317, %s331
      %p333 = scmp.eq.s32.totalorder %s34, 0
      %p334 = por %p332, %p333
      %s336 = sadd.s32 %s335, 1
      %p339 = scmp.eq.s32.totalorder %s28, 1
      %p340 = scmp.ne.s32.totalorder %s335, %s337
      %p341 = scmp.eq.s32.totalorder %s28, 0
      %p342 = por %p340, %p341
      %p343 = scmp.ne.s32.totalorder %s335, %s337
      %p344 = scmp.eq.s32.totalorder %s33, 1
      %p345 = por %p343, %p344
      %p346 = scmp.ne.s32.totalorder %s337, %s338
      %p347 = scmp.eq.s32.totalorder %s33, 0
      %p348 = por %p346, %p347
      %p349 = scmp.ne.s32.totalorder %s337, %s338
      %p350 = scmp.eq.s32.totalorder %s34, 1
      %p351 = por %p349, %p350
      %p353 = scmp.ne.s32.totalorder %s338, %s352
      %p354 = scmp.eq.s32.totalorder %s34, 0
      %p355 = por %p353, %p354
      %s357 = sadd.s32 %s356, 1
      %p360 = scmp.eq.s32.totalorder %s28, 1
      %p361 = scmp.ne.s32.totalorder %s356, %s358
      %p362 = scmp.eq.s32.totalorder %s28, 0
      %p363 = por %p361, %p362
      %p364 = scmp.ne.s32.totalorder %s356, %s358
      %p365 = scmp.eq.s32.totalorder %s33, 1
      %p366 = por %p364, %p365
      %p367 = scmp.ne.s32.totalorder %s358, %s359
      %p368 = scmp.eq.s32.totalorder %s33, 0
      %p369 = por %p367, %p368
      %p370 = scmp.ne.s32.totalorder %s358, %s359
      %p371 = scmp.eq.s32.totalorder %s34, 1
      %p372 = por %p370, %p371
      %p374 = scmp.ne.s32.totalorder %s359, %s373
      %p375 = scmp.eq.s32.totalorder %s34, 0
      %p376 = por %p374, %p375
      %s378 = sadd.s32 %s377, 1
      %p381 = scmp.eq.s32.totalorder %s28, 1
      %p382 = scmp.ne.s32.totalorder %s377, %s379
      %p383 = scmp.eq.s32.totalorder %s28, 0
      %p384 = por %p382, %p383
      %p385 = scmp.ne.s32.totalorder %s377, %s379
      %p386 = scmp.eq.s32.totalorder %s33, 1
      %p387 = por %p385, %p386
      %p388 = scmp.ne.s32.totalorder %s379, %s380
      %p389 = scmp.eq.s32.totalorder %s33, 0
      %p390 = por %p388, %p389
      %p391 = scmp.ne.s32.totalorder %s379, %s380
      %p392 = scmp.eq.s32.totalorder %s34, 1
      %p393 = por %p391, %p392
      %p395 = scmp.ne.s32.totalorder %s380, %s394
      %p396 = scmp.eq.s32.totalorder %s34, 0
      %p397 = por %p395, %p396
      %s398 = ssub.s32 %s28, %s35
      %p399 = scmp.eq.s32.totalorder %s398, 0
      %s401 = sadd.s32 %s400, 1
      %s402 = scalar_select %p399, %s400, %s401
      %p405 = pneg %p399
      %p406 = scmp.eq.s32.totalorder %s28, 1
      %p407 = por %p405, %p406
      %p408 = scmp.ne.s32.totalorder %s400, %s403
      %p409 = scmp.eq.s32.totalorder %s28, 0
      %p410 = por %p408, %p409
      %p411 = scmp.ne.s32.totalorder %s400, %s403
      %p412 = scmp.eq.s32.totalorder %s33, 1
      %p413 = por %p411, %p412
      %p414 = scmp.ne.s32.totalorder %s403, %s404
      %p415 = scmp.eq.s32.totalorder %s33, 0
      %p416 = por %p414, %p415
      %p417 = scmp.ne.s32.totalorder %s403, %s404
      %p418 = scmp.eq.s32.totalorder %s34, 1
      %p419 = por %p417, %p418
      %p421 = scmp.ne.s32.totalorder %s404, %s420
      %p422 = scmp.eq.s32.totalorder %s34, 0
      %p423 = por %p421, %p422
      %s424 = ssub.s32 %s28, %s35
      %p425 = scmp.eq.s32.totalorder %s424, 0
      %s427 = sadd.s32 %s426, 1
      %s428 = scalar_select %p425, %s426, %s427
      %p431 = pneg %p425
      %p432 = scmp.eq.s32.totalorder %s28, 1
      %p433 = por %p431, %p432
      %p434 = scmp.ne.s32.totalorder %s426, %s429
      %p435 = scmp.eq.s32.totalorder %s28, 0
      %p436 = por %p434, %p435
      %p437 = scmp.ne.s32.totalorder %s426, %s429
      %p438 = scmp.eq.s32.totalorder %s33, 1
      %p439 = por %p437, %p438
      %p440 = scmp.ne.s32.totalorder %s429, %s430
      %p441 = scmp.eq.s32.totalorder %s33, 0
      %p442 = por %p440, %p441
      %p443 = scmp.ne.s32.totalorder %s429, %s430
      %p444 = scmp.eq.s32.totalorder %s34, 1
      %p445 = por %p443, %p444
      %p447 = scmp.ne.s32.totalorder %s430, %s446
      %p448 = scmp.eq.s32.totalorder %s34, 0
      %p449 = por %p447, %p448
      %p450 = scmp.le.s32.totalorder 1, %s28
      %p451 = scmp.lt.s32.totalorder %s28, 3
      %p452 = pnand %p450, %p451
      %p453 = pneg %p452
      // Predicated region
      $region9: #{network_forward.1} parent=5 // pred_check
        _
      $region10: #{network_forward.1} parent=5 // pred_check_branch
        %455 = sbr.rel (%p452) target = $region12
      $region11: #{network_forward.1} parent=5 // pred_region
        %s456 = ssub.s32 %s28, 1
        // Predicated region
        $region13: #{network_forward.1} parent=11 // pred_check
          %p457 = pneg %p75
        $region14: #{network_forward.1} parent=11 // pred_check_branch
          %459 = sbr.rel (%p457) target = $region16
        $region15: #{network_forward.1} parent=11 // pred_region
          _
        $region16: #{network_forward.1} parent=11 // pred_fallthru
          _
        // Predicated region
        $region17: #{network_forward.1} parent=11 // pred_check
          %p460 = pneg %p96
        $region18: #{network_forward.1} parent=11 // pred_check_branch
          %462 = sbr.rel (%p460) target = $region20
        $region19: #{network_forward.1} parent=11 // pred_region
          _
        $region20: #{network_forward.1} parent=11 // pred_fallthru
          _
        // Predicated region
        $region21: #{network_forward.1} parent=11 // pred_check
          %p463 = pneg %p117
        $region22: #{network_forward.1} parent=11 // pred_check_branch
          %465 = sbr.rel (%p463) target = $region24
        $region23: #{network_forward.1} parent=11 // pred_region
          _
        $region24: #{network_forward.1} parent=11 // pred_fallthru
          _
        // Predicated region
        $region25: #{network_forward.1} parent=11 // pred_check
          %p466 = pneg %p138
        $region26: #{network_forward.1} parent=11 // pred_check_branch
          %468 = sbr.rel (%p466) target = $region28
        $region27: #{network_forward.1} parent=11 // pred_region
          _
        $region28: #{network_forward.1} parent=11 // pred_fallthru
          _
        // Predicated region
        $region29: #{network_forward.1} parent=11 // pred_check
          %p469 = pneg %p159
        $region30: #{network_forward.1} parent=11 // pred_check_branch
          %471 = sbr.rel (%p469) target = $region32
        $region31: #{network_forward.1} parent=11 // pred_region
          _
        $region32: #{network_forward.1} parent=11 // pred_fallthru
          _
        // Predicated region
        $region33: #{network_forward.1} parent=11 // pred_check
          %p472 = pneg %p180
        $region34: #{network_forward.1} parent=11 // pred_check_branch
          %474 = sbr.rel (%p472) target = $region36
        $region35: #{network_forward.1} parent=11 // pred_region
          _
        $region36: #{network_forward.1} parent=11 // pred_fallthru
          _
        // Predicated region
        $region37: #{network_forward.1} parent=11 // pred_check
          %p475 = pneg %p201
        $region38: #{network_forward.1} parent=11 // pred_check_branch
          %477 = sbr.rel (%p475) target = $region40
        $region39: #{network_forward.1} parent=11 // pred_region
          _
        $region40: #{network_forward.1} parent=11 // pred_fallthru
          _
        // Predicated region
        $region41: #{network_forward.1} parent=11 // pred_check
          %p478 = pneg %p222
        $region42: #{network_forward.1} parent=11 // pred_check_branch
          %480 = sbr.rel (%p478) target = $region44
        $region43: #{network_forward.1} parent=11 // pred_region
          _
        $region44: #{network_forward.1} parent=11 // pred_fallthru
          _
        // Predicated region
        $region45: #{network_forward.1} parent=11 // pred_check
          %p481 = pneg %p243
        $region46: #{network_forward.1} parent=11 // pred_check_branch
          %483 = sbr.rel (%p481) target = $region48
        $region47: #{network_forward.1} parent=11 // pred_region
          _
        $region48: #{network_forward.1} parent=11 // pred_fallthru
          _
        // Predicated region
        $region49: #{network_forward.1} parent=11 // pred_check
          %p484 = pneg %p264
        $region50: #{network_forward.1} parent=11 // pred_check_branch
          %486 = sbr.rel (%p484) target = $region52
        $region51: #{network_forward.1} parent=11 // pred_region
          _
        $region52: #{network_forward.1} parent=11 // pred_fallthru
          _
        // Predicated region
        $region53: #{network_forward.1} parent=11 // pred_check
          %p487 = pneg %p285
        $region54: #{network_forward.1} parent=11 // pred_check_branch
          %489 = sbr.rel (%p487) target = $region56
        $region55: #{network_forward.1} parent=11 // pred_region
          _
        $region56: #{network_forward.1} parent=11 // pred_fallthru
          _
        // Predicated region
        $region57: #{network_forward.1} parent=11 // pred_check
          %p490 = pneg %p306
        $region58: #{network_forward.1} parent=11 // pred_check_branch
          %492 = sbr.rel (%p490) target = $region60
        $region59: #{network_forward.1} parent=11 // pred_region
          _
        $region60: #{network_forward.1} parent=11 // pred_fallthru
          _
        // Predicated region
        $region61: #{network_forward.1} parent=11 // pred_check
          %p493 = pneg %p327
        $region62: #{network_forward.1} parent=11 // pred_check_branch
          %495 = sbr.rel (%p493) target = $region64
        $region63: #{network_forward.1} parent=11 // pred_region
          _
        $region64: #{network_forward.1} parent=11 // pred_fallthru
          _
        // Predicated region
        $region65: #{network_forward.1} parent=11 // pred_check
          %p496 = pneg %p348
        $region66: #{network_forward.1} parent=11 // pred_check_branch
          %498 = sbr.rel (%p496) target = $region68
        $region67: #{network_forward.1} parent=11 // pred_region
          _
        $region68: #{network_forward.1} parent=11 // pred_fallthru
          _
        // Predicated region
        $region69: #{network_forward.1} parent=11 // pred_check
          %p499 = pneg %p369
        $region70: #{network_forward.1} parent=11 // pred_check_branch
          %501 = sbr.rel (%p499) target = $region72
        $region71: #{network_forward.1} parent=11 // pred_region
          _
        $region72: #{network_forward.1} parent=11 // pred_fallthru
          _
        // Predicated region
        $region73: #{network_forward.1} parent=11 // pred_check
          %p502 = pneg %p390
        $region74: #{network_forward.1} parent=11 // pred_check_branch
          %504 = sbr.rel (%p502) target = $region76
        $region75: #{network_forward.1} parent=11 // pred_region
          _
        $region76: #{network_forward.1} parent=11 // pred_fallthru
          _
      $region12: #{network_forward.1} parent=5 // pred_fallthru
        _
      %p505 = scmp.lt.s32.totalorder %s28, 2
      // Predicated region
      $region77: #{network_forward.1} parent=5 // pred_check
        %p506 = pneg %p505
      $region78: #{network_forward.1} parent=5 // pred_check_branch
        %508 = sbr.rel (%p506) target = $region80
      $region79: #{network_forward.1} parent=5 // pred_region
        // Predicated region
        $region81: #{network_forward.1} parent=79 // pred_check
          %p509 = pneg %p48
        $region82: #{network_forward.1} parent=79 // pred_check_branch
          %511 = sbr.rel (%p509) target = $region84
        $region83: #{network_forward.1} parent=79 // pred_region
          %p512 = scmp.lt.s32.totalorder %s28, 1
          %s513 = scalar_select %p512, %s28, 1
          %s514 = smul.addr %s513, 8
          %s515 = smul.addr %s514, 8
          %s516 = scalar_lea.vmem %s0, %s515
        $region84: #{network_forward.1} parent=79 // pred_fallthru
          _
      $region80: #{network_forward.1} parent=5 // pred_fallthru
        _
      %p517 = scmp.le.s32.totalorder 1, %s28
      %p518 = scmp.lt.s32.totalorder %s28, 3
      %p519 = pnand %p517, %p518
      %p520 = pneg %p519
      // Predicated region
      $region85: #{network_forward.1} parent=5 // pred_check
        _
      $region86: #{network_forward.1} parent=5 // pred_check_branch
        %522 = sbr.rel (%p519) target = $region88
      $region87: #{network_forward.1} parent=5 // pred_region
        %s523 = ssub.s32 %s28, 1
        %p524 = scmp.lt.s32.totalorder %s33, 1
        %s525 = scalar_select %p524, %s33, 1
        %s526 = smul.addr %s525, 8
        %s527 = smul.addr %s526, 8
        %s528 = scalar_lea.vmem %s0, %s527
        %p529 = pneg %p54
        %p530 = pneg %p51
        %p531 = pneg %p75
        %p532 = pneg %p72
        %p533 = pneg %p96
        %p534 = pneg %p93
        %p535 = pneg %p117
        %p536 = pneg %p114
        %p537 = pneg %p138
        %p538 = pneg %p135
        %p539 = pneg %p159
        %p540 = pneg %p156
        %p541 = pneg %p180
        %p542 = pneg %p177
        %p543 = pneg %p201
        %p544 = pneg %p198
        %p545 = pneg %p222
        %p546 = pneg %p219
        %p547 = pneg %p243
        %p548 = pneg %p240
        %p549 = pneg %p264
        %p550 = pneg %p261
        %p551 = pneg %p285
        %p552 = pneg %p282
        %p553 = pneg %p306
        %p554 = pneg %p303
        %p555 = pneg %p327
        %p556 = pneg %p324
        %p557 = pneg %p348
        %p558 = pneg %p345
        %p559 = pneg %p369
        %p560 = pneg %p366
        %p561 = pneg %p390
        %p562 = pneg %p387
        %p563 = pneg %p416
        %p564 = pneg %p413
        %s565 = sand.u32 %s403, 1
        %s566 = scalar_lea.sflag [#allocation3], %s565
        %s567 = sand.u32 %s403, 1
        %s568 = smul.addr %s567, 64
        %s569 = scalar_lea.vmem [#allocation2], %s568
        %p570 = pneg %p442
        %p571 = pneg %p439
        %p572 = scmp.lt.s32.totalorder %s33, 1
        %s573 = scalar_select %p572, %s33, 1
        %s574 = smul.addr %s573, 2
        %s575 = smul.addr %s574, 8
        %s576 = scalar_lea.vmem %s18, %s575
        %p577 = scmp.lt.s32.totalorder %s33, 1
        %s578 = scalar_select %p577, %s33, 1
        %s579 = smul.addr %s578, 8
        %s580 = smul.addr %s579, 8
        %s581 = scalar_lea.vmem %s0, %s580
        %p582 = scmp.lt.s32.totalorder %s33, 1
        %s583 = scalar_select %p582, %s33, 1
        %s584 = smul.addr %s583, 2
        %s585 = smul.addr %s584, 8
        %s586 = scalar_lea.vmem %s18, %s585
        %v588 = vld [vmem:[%s581] sm:$0xff]
        %v589 = vld [vmem:[%s581 + $0x8] sm:$0xff]
        %v590 = vld [vmem:[%s581 + $0x10] sm:$0xff]
        %v591 = vld [vmem:[%s581 + $0x18] sm:$0xff]
        %v592 = vld [vmem:[%s581 + $0x20] sm:$0xff]
        %v593 = vld [vmem:[%s581 + $0x28] sm:$0xff]
        %v594 = vld [vmem:[%s581 + $0x30] sm:$0xff]
        %v595 = vld [vmem:[%s581 + $0x38] sm:$0xff]
        %v596 = vld [vmem:[%s1] sm:$0xf]
        %v597 = vld [vmem:[%s1 + $0x4] sm:$0xf]
        %v598 = vld [vmem:[%s1 + $0x8] sm:$0xf]
        %v599 = vld [vmem:[%s1 + $0xc] sm:$0xf]
        %v600 = vld [vmem:[%s1 + $0x10] sm:$0xf]
        %v601 = vld [vmem:[%s1 + $0x14] sm:$0xf]
        %v602 = vld [vmem:[%s1 + $0x18] sm:$0xf]
        %v603 = vld [vmem:[%s1 + $0x1c] sm:$0xf]
        %v604 = vpack.c.bf16 %v589, %v588
        %v605 = vpack.c.bf16 %v591, %v590
        %v606 = vpack.c.bf16 %v593, %v592
        %v607 = vpack.c.bf16 %v595, %v594
        %v616 = vunpack.c.l.b16 %v596
        %v617 = vunpack.c.l.b16 %v597
        %v618 = vunpack.c.l.b16 %v598
        %v619 = vunpack.c.l.b16 %v599
        %v620 = vunpack.c.l.b16 %v600
        %v621 = vunpack.c.l.b16 %v601
        %v622 = vunpack.c.l.b16 %v602
        %v623 = vunpack.c.l.b16 %v603
        %v624 = vpack.c.b16 %v617, %v616
        %v625 = vpack.c.b16 %v619, %v618
        %v626 = vpack.c.b16 %v621, %v620
        %v627 = vpack.c.b16 %v623, %v622
        %vm628 = vcmask 523264
        %v630 = vsel %vm628, %v624, 0
        %v633 = vsel %vm628, %v625, 0
        %v636 = vsel %vm628, %v626, 0
        %v639 = vsel %vm628, %v627, 0
        %641 = vmatprep.subr.bf16.mxu0 0
        %642 = vmatpush1.bf16.msra.mxu0 %v604
        %643 = vmatprep.subr.bf16.mxu0 0
        %644 = vmatpush1.bf16.msra.mxu0 %v605
        %645 = vmatprep.subr.bf16.mxu0 0
        %646 = vmatpush1.bf16.msra.mxu0 %v606
        %647 = vmatprep.subr.bf16.mxu0 0
        %648 = vmatpush1.bf16.msra.mxu0 %v607
        %649 = vmatprep.subr.bf16.mxu0 0
        %650 = vmatpush1.bf16.msra.mxu0 0
        %651 = vmatprep.subr.bf16.mxu0 0
        %652 = vmatpush1.bf16.msra.mxu0 0
        %653 = vmatprep.subr.bf16.mxu0 0
        %654 = vmatpush1.bf16.msra.mxu0 0
        %655 = vmatprep.subr.bf16.mxu0 0
        %656 = vmatpush1.bf16.msra.mxu0 0
        %657 = vmatprep.subr.bf16.mxu0 0
        %658 = vmatpush1.bf16.msra.mxu0 0
        %659 = vmatprep.subr.bf16.mxu0 0
        %660 = vmatpush1.bf16.msra.mxu0 0
        %661 = vmatprep.subr.bf16.mxu0 0
        %662 = vmatpush1.bf16.msra.mxu0 0
        %663 = vmatprep.subr.bf16.mxu0 0
        %664 = vmatpush1.bf16.msra.mxu0 0
        %665 = vmatprep.subr.bf16.mxu0 0
        %666 = vmatpush1.bf16.msra.mxu0 0
        %667 = vmatprep.subr.bf16.mxu0 0
        %668 = vmatpush1.bf16.msra.mxu0 0
        %669 = vmatprep.subr.bf16.mxu0 0
        %670 = vmatpush1.bf16.msra.mxu0 0
        %671 = vmatprep.subr.bf16.mxu0 0
        %672 = vmatpush1.bf16.msra.mxu0 0
        %673 = vmatprep.mubr.bf16.mxu0 0
        %674 = vmatmul.mubr.bf16.gmra.mrb[0].mxu0 %v630
        %v675 = vpop.f32.mrb[0].mxu0
        %v676 = vadd.f32 0.0, %v675
        %v677 = vpop.f32.mrb[0].mxu0
        %v678 = vpop.f32.mrb[0].mxu0
        %v679 = vadd.f32 0.0, %v678
        %v680 = vpop.f32.mrb[0].mxu0
        %681 = vmatprep.mubr.bf16.mxu0 0
        %682 = vmatmul.mubr.bf16.gmra.mrb[0].mxu0 %v633
        %v683 = vpop.f32.mrb[0].mxu0
        %v684 = vadd.f32 0.0, %v683
        %v685 = vpop.f32.mrb[0].mxu0
        %v686 = vpop.f32.mrb[0].mxu0
        %v687 = vadd.f32 0.0, %v686
        %v688 = vpop.f32.mrb[0].mxu0
        %689 = vmatprep.mubr.bf16.mxu0 0
        %690 = vmatmul.mubr.bf16.gmra.mrb[0].mxu0 %v636
        %v691 = vpop.f32.mrb[0].mxu0
        %v692 = vadd.f32 0.0, %v691
        %v693 = vpop.f32.mrb[0].mxu0
        %v694 = vpop.f32.mrb[0].mxu0
        %v695 = vadd.f32 0.0, %v694
        %v696 = vpop.f32.mrb[0].mxu0
        %697 = vmatprep.mubr.bf16.mxu0 0
        %698 = vmatmul.mubr.bf16.gmra.mrb[0].mxu0 %v639
        %v699 = vpop.f32.mrb[0].mxu0
        %v700 = vadd.f32 0.0, %v699
        %v701 = vpop.f32.mrb[0].mxu0
        %v702 = vpop.f32.mrb[0].mxu0
        %v703 = vadd.f32 0.0, %v702
        %v704 = vpop.f32.mrb[0].mxu0
        %705 = vdwg.mxu0
        %v706 = vld [vmem:[%s2] sm:$0xff]
        %v707 = vld [vmem:[%s2 + $0x8] sm:$0xff]
        %v708 = vpack.c.bf16 %v679, %v676
        %v709 = vpack.c.bf16 %v687, %v684
        %v710 = vpack.c.bf16 %v695, %v692
        %v711 = vpack.c.bf16 %v703, %v700
        %s712 = scalar_lea.vmem %s1, 32
        %v713 = vld [vmem:[%s712] sm:$0xf]
        %v714 = vld [vmem:[%s712 + $0x4] sm:$0xf]
        %v715 = vld [vmem:[%s712 + $0x8] sm:$0xf]
        %v716 = vld [vmem:[%s712 + $0xc] sm:$0xf]
        %v717 = vld [vmem:[%s712 + $0x10] sm:$0xf]
        %v718 = vld [vmem:[%s712 + $0x14] sm:$0xf]
        %v719 = vld [vmem:[%s712 + $0x18] sm:$0xf]
        %v720 = vld [vmem:[%s712 + $0x1c] sm:$0xf]
        %v729 = vunpack.c.l.b16 %v713
        %v730 = vunpack.c.l.b16 %v714
        %v731 = vunpack.c.l.b16 %v715
        %v732 = vunpack.c.l.b16 %v716
        %v733 = vunpack.c.l.b16 %v717
        %v734 = vunpack.c.l.b16 %v718
        %v735 = vunpack.c.l.b16 %v719
        %v736 = vunpack.c.l.b16 %v720
        %v737 = vpack.c.b16 %v730, %v729
        %v738 = vpack.c.b16 %v732, %v731
        %v739 = vpack.c.b16 %v734, %v733
        %v740 = vpack.c.b16 %v736, %v735
        %v742 = vsel %vm628, %v737, 0
        %v745 = vsel %vm628, %v738, 0
        %v748 = vsel %vm628, %v739, 0
        %v751 = vsel %vm628, %v740, 0
        %753 = vmatprep.subr.bf16.mxu0 0
        %754 = vmatpush1.bf16.msra.mxu0 %v604
        %755 = vmatprep.subr.bf16.mxu0 0
        %756 = vmatpush1.bf16.msra.mxu0 %v605
        %757 = vmatprep.subr.bf16.mxu0 0
        %758 = vmatpush1.bf16.msra.mxu0 %v606
        %759 = vmatprep.subr.bf16.mxu0 0
        %760 = vmatpush1.bf16.msra.mxu0 %v607
        %761 = vmatprep.subr.bf16.mxu0 0
        %762 = vmatpush1.bf16.msra.mxu0 0
        %763 = vmatprep.subr.bf16.mxu0 0
        %764 = vmatpush1.bf16.msra.mxu0 0
        %765 = vmatprep.subr.bf16.mxu0 0
        %766 = vmatpush1.bf16.msra.mxu0 0
        %767 = vmatprep.subr.bf16.mxu0 0
        %768 = vmatpush1.bf16.msra.mxu0 0
        %769 = vmatprep.subr.bf16.mxu0 0
        %770 = vmatpush1.bf16.msra.mxu0 0
        %771 = vmatprep.subr.bf16.mxu0 0
        %772 = vmatpush1.bf16.msra.mxu0 0
        %773 = vmatprep.subr.bf16.mxu0 0
        %774 = vmatpush1.bf16.msra.mxu0 0
        %775 = vmatprep.subr.bf16.mxu0 0
        %776 = vmatpush1.bf16.msra.mxu0 0
        %777 = vmatprep.subr.bf16.mxu0 0
        %778 = vmatpush1.bf16.msra.mxu0 0
        %779 = vmatprep.subr.bf16.mxu0 0
        %780 = vmatpush1.bf16.msra.mxu0 0
        %781 = vmatprep.subr.bf16.mxu0 0
        %782 = vmatpush1.bf16.msra.mxu0 0
        %783 = vmatprep.subr.bf16.mxu0 0
        %784 = vmatpush1.bf16.msra.mxu0 0
        %785 = vmatprep.mubr.bf16.mxu0 0
        %786 = vmatmul.mubr.bf16.gmra.mrb[0].mxu0 %v742
        %v787 = vpop.f32.mrb[0].mxu0
        %v788 = vadd.f32 0.0, %v787
        %v789 = vpop.f32.mrb[0].mxu0
        %v790 = vpop.f32.mrb[0].mxu0
        %v791 = vadd.f32 0.0, %v790
        %v792 = vpop.f32.mrb[0].mxu0
        %793 = vmatprep.mubr.bf16.mxu0 0
        %794 = vmatmul.mubr.bf16.gmra.mrb[0].mxu0 %v745
        %v795 = vpop.f32.mrb[0].mxu0
        %v796 = vadd.f32 0.0, %v795
        %v797 = vpop.f32.mrb[0].mxu0
        %v798 = vpop.f32.mrb[0].mxu0
        %v799 = vadd.f32 0.0, %v798
        %v800 = vpop.f32.mrb[0].mxu0
        %801 = vmatprep.mubr.bf16.mxu0 0
        %802 = vmatmul.mubr.bf16.gmra.mrb[0].mxu0 %v748
        %v803 = vpop.f32.mrb[0].mxu0
        %v804 = vadd.f32 0.0, %v803
        %v805 = vpop.f32.mrb[0].mxu0
        %v806 = vpop.f32.mrb[0].mxu0
        %v807 = vadd.f32 0.0, %v806
        %v808 = vpop.f32.mrb[0].mxu0
        %809 = vmatprep.mubr.bf16.mxu0 0
        %810 = vmatmul.mubr.bf16.gmra.mrb[0].mxu0 %v751
        %v811 = vpop.f32.mrb[0].mxu0
        %v812 = vadd.f32 0.0, %v811
        %v813 = vpop.f32.mrb[0].mxu0
        %v814 = vpop.f32.mrb[0].mxu0
        %v815 = vadd.f32 0.0, %v814
        %v816 = vpop.f32.mrb[0].mxu0
        %817 = vdwg.mxu0
        %s818 = scalar_lea.vmem %s2, 16
        %v819 = vld [vmem:[%s818] sm:$0xff]
        %v820 = vld [vmem:[%s818 + $0x8] sm:$0xff]
        %v821 = vpack.c.bf16 %v791, %v788
        %v822 = vpack.c.bf16 %v799, %v796
        %v823 = vpack.c.bf16 %v807, %v804
        %v824 = vpack.c.bf16 %v815, %v812
        %v827 = vunpack.c.l.b16 %v819
        %v828 = vunpack.c.h.b16 %v819
        %v829 = vunpack.c.l.b16 %v820
        %v830 = vunpack.c.h.b16 %v820
        %v831 = vpack.c.b16 %v829, %v827
        %v832 = vpack.c.b16 %v830, %v828
        %vm835 = vcmask 130048
        %v837 = vsel %vm835, %v821, 0
        %v840 = vsel %vm835, %v822, 0
        %v843 = vsel %vm835, %v823, 0
        %v846 = vsel %vm835, %v824, 0
        %848 = vmatprep.subr.bf16.mxu0 %v832
        %849 = vmatpush1.bf16.msra.mxu0 %v831
        %850 = vmatprep.subr.bf16.mxu0 0
        %851 = vmatpush1.bf16.msra.mxu0 0
        %852 = vmatprep.subr.bf16.mxu0 0
        %853 = vmatpush1.bf16.msra.mxu0 0
        %854 = vmatprep.subr.bf16.mxu0 0
        %855 = vmatpush1.bf16.msra.mxu0 0
        %856 = vmatprep.subr.bf16.mxu0 0
        %857 = vmatpush1.bf16.msra.mxu0 0
        %858 = vmatprep.subr.bf16.mxu0 0
        %859 = vmatpush1.bf16.msra.mxu0 0
        %860 = vmatprep.subr.bf16.mxu0 0
        %861 = vmatpush1.bf16.msra.mxu0 0
        %862 = vmatprep.subr.bf16.mxu0 0
        %863 = vmatpush1.bf16.msra.mxu0 0
        %864 = vmatprep.subr.bf16.mxu0 0
        %865 = vmatpush1.bf16.msra.mxu0 0
        %866 = vmatprep.subr.bf16.mxu0 0
        %867 = vmatpush1.bf16.msra.mxu0 0
        %868 = vmatprep.subr.bf16.mxu0 0
        %869 = vmatpush1.bf16.msra.mxu0 0
        %870 = vmatprep.subr.bf16.mxu0 0
        %871 = vmatpush1.bf16.msra.mxu0 0
        %872 = vmatprep.subr.bf16.mxu0 0
        %873 = vmatpush1.bf16.msra.mxu0 0
        %874 = vmatprep.subr.bf16.mxu0 0
        %875 = vmatpush1.bf16.msra.mxu0 0
        %876 = vmatprep.subr.bf16.mxu0 0
        %877 = vmatpush1.bf16.msra.mxu0 0
        %878 = vmatprep.subr.bf16.mxu0 0
        %879 = vmatpush1.bf16.msra.mxu0 0
        %880 = vmatprep.mubr.bf16.mxu0 0
        %881 = vmatmul.mubr.bf16.gmra.mrb[0].mxu0 %v837
        %v882 = vpop.f32.mrb[0].mxu0
        %v883 = vadd.f32 0.0, %v882
        %v884 = vpop.f32.mrb[0].mxu0
        %v885 = vadd.f32 0.0, %v884
        %v886 = vpop.f32.mrb[0].mxu0
        %v887 = vadd.f32 0.0, %v886
        %v888 = vpop.f32.mrb[0].mxu0
        %v889 = vadd.f32 0.0, %v888
        %890 = vmatprep.mubr.bf16.mxu0 0
        %891 = vmatmul.mubr.bf16.gmra.mrb[0].mxu0 %v840
        %v892 = vpop.f32.mrb[0].mxu0
        %v893 = vadd.f32 0.0, %v892
        %v894 = vpop.f32.mrb[0].mxu0
        %v895 = vadd.f32 0.0, %v894
        %v896 = vpop.f32.mrb[0].mxu0
        %v897 = vadd.f32 0.0, %v896
        %v898 = vpop.f32.mrb[0].mxu0
        %v899 = vadd.f32 0.0, %v898
        %900 = vmatprep.mubr.bf16.mxu0 0
        %901 = vmatmul.mubr.bf16.gmra.mrb[0].mxu0 %v843
        %v902 = vpop.f32.mrb[0].mxu0
        %v903 = vadd.f32 0.0, %v902
        %v904 = vpop.f32.mrb[0].mxu0
        %v905 = vadd.f32 0.0, %v904
        %v906 = vpop.f32.mrb[0].mxu0
        %v907 = vadd.f32 0.0, %v906
        %v908 = vpop.f32.mrb[0].mxu0
        %v909 = vadd.f32 0.0, %v908
        %910 = vmatprep.mubr.bf16.mxu0 0
        %911 = vmatmul.mubr.bf16.gmra.mrb[0].mxu0 %v846
        %v912 = vpop.f32.mrb[0].mxu0
        %v913 = vadd.f32 0.0, %v912
        %v914 = vpop.f32.mrb[0].mxu0
        %v915 = vadd.f32 0.0, %v914
        %v916 = vpop.f32.mrb[0].mxu0
        %v917 = vadd.f32 0.0, %v916
        %v918 = vpop.f32.mrb[0].mxu0
        %v919 = vadd.f32 0.0, %v918
        %920 = vdwg.mxu0
        %v923 = vunpack.c.l.b16 %v706
        %v924 = vunpack.c.h.b16 %v706
        %v925 = vunpack.c.l.b16 %v707
        %v926 = vunpack.c.h.b16 %v707
        %v927 = vpack.c.b16 %v925, %v923
        %v928 = vpack.c.b16 %v926, %v924
        %v932 = vsel %vm835, %v708, 0
        %v935 = vsel %vm835, %v709, 0
        %v938 = vsel %vm835, %v710, 0
        %v941 = vsel %vm835, %v711, 0
        %943 = vmatprep.subr.bf16.mxu0 %v928
        %944 = vmatpush1.bf16.msra.mxu0 %v927
        %945 = vmatprep.subr.bf16.mxu0 0
        %946 = vmatpush1.bf16.msra.mxu0 0
        %947 = vmatprep.subr.bf16.mxu0 0
        %948 = vmatpush1.bf16.msra.mxu0 0
        %949 = vmatprep.subr.bf16.mxu0 0
        %950 = vmatpush1.bf16.msra.mxu0 0
        %951 = vmatprep.subr.bf16.mxu0 0
        %952 = vmatpush1.bf16.msra.mxu0 0
        %953 = vmatprep.subr.bf16.mxu0 0
        %954 = vmatpush1.bf16.msra.mxu0 0
        %955 = vmatprep.subr.bf16.mxu0 0
        %956 = vmatpush1.bf16.msra.mxu0 0
        %957 = vmatprep.subr.bf16.mxu0 0
        %958 = vmatpush1.bf16.msra.mxu0 0
        %959 = vmatprep.subr.bf16.mxu0 0
        %960 = vmatpush1.bf16.msra.mxu0 0
        %961 = vmatprep.subr.bf16.mxu0 0
        %962 = vmatpush1.bf16.msra.mxu0 0
        %963 = vmatprep.subr.bf16.mxu0 0
        %964 = vmatpush1.bf16.msra.mxu0 0
        %965 = vmatprep.subr.bf16.mxu0 0
        %966 = vmatpush1.bf16.msra.mxu0 0
        %967 = vmatprep.subr.bf16.mxu0 0
        %968 = vmatpush1.bf16.msra.mxu0 0
        %969 = vmatprep.subr.bf16.mxu0 0
        %970 = vmatpush1.bf16.msra.mxu0 0
        %971 = vmatprep.subr.bf16.mxu0 0
        %972 = vmatpush1.bf16.msra.mxu0 0
        %973 = vmatprep.subr.bf16.mxu0 0
        %974 = vmatpush1.bf16.msra.mxu0 0
        %975 = vmatprep.mubr.bf16.mxu0 0
        %976 = vmatmul.mubr.bf16.gmra.mrb[0].mxu0 %v932
        %v977 = vpop.f32.mrb[0].mxu0
        %v978 = vadd.f32 %v883, %v977
        %v979 = vpop.f32.mrb[0].mxu0
        %v980 = vadd.f32 %v885, %v979
        %v981 = vpop.f32.mrb[0].mxu0
        %v982 = vadd.f32 %v887, %v981
        %v983 = vpop.f32.mrb[0].mxu0
        %v984 = vadd.f32 %v889, %v983
        %985 = vmatprep.mubr.bf16.mxu0 0
        %986 = vmatmul.mubr.bf16.gmra.mrb[0].mxu0 %v935
        %v987 = vpop.f32.mrb[0].mxu0
        %v988 = vadd.f32 %v893, %v987
        %v989 = vpop.f32.mrb[0].mxu0
        %v990 = vadd.f32 %v895, %v989
        %v991 = vpop.f32.mrb[0].mxu0
        %v992 = vadd.f32 %v897, %v991
        %v993 = vpop.f32.mrb[0].mxu0
        %v994 = vadd.f32 %v899, %v993
        %995 = vmatprep.mubr.bf16.mxu0 0
        %996 = vmatmul.mubr.bf16.gmra.mrb[0].mxu0 %v938
        %v997 = vpop.f32.mrb[0].mxu0
        %v998 = vadd.f32 %v903, %v997
        %v999 = vpop.f32.mrb[0].mxu0
        %v1000 = vadd.f32 %v905, %v999
        %v1001 = vpop.f32.mrb[0].mxu0
        %v1002 = vadd.f32 %v907, %v1001
        %v1003 = vpop.f32.mrb[0].mxu0
        %v1004 = vadd.f32 %v909, %v1003
        %1005 = vmatprep.mubr.bf16.mxu0 0
        %1006 = vmatmul.mubr.bf16.gmra.mrb[0].mxu0 %v941
        %v1007 = vpop.f32.mrb[0].mxu0
        %v1008 = vadd.f32 %v913, %v1007
        %v1009 = vpop.f32.mrb[0].mxu0
        %v1010 = vadd.f32 %v915, %v1009
        %v1011 = vpop.f32.mrb[0].mxu0
        %v1012 = vadd.f32 %v917, %v1011
        %v1013 = vpop.f32.mrb[0].mxu0
        %v1014 = vadd.f32 %v919, %v1013
        %1015 = vdwg.mxu0
        %s1016 = scalar_lea.vmem %s1, 64
        %v1017 = vld [vmem:[%s1016] sm:$0xf]
        %v1018 = vld [vmem:[%s1016 + $0x4] sm:$0xf]
        %v1019 = vld [vmem:[%s1016 + $0x8] sm:$0xf]
        %v1020 = vld [vmem:[%s1016 + $0xc] sm:$0xf]
        %v1021 = vld [vmem:[%s1016 + $0x10] sm:$0xf]
        %v1022 = vld [vmem:[%s1016 + $0x14] sm:$0xf]
        %v1023 = vld [vmem:[%s1016 + $0x18] sm:$0xf]
        %v1024 = vld [vmem:[%s1016 + $0x1c] sm:$0xf]
        %v1033 = vunpack.c.l.b16 %v1017
        %v1034 = vunpack.c.l.b16 %v1018
        %v1035 = vunpack.c.l.b16 %v1019
        %v1036 = vunpack.c.l.b16 %v1020
        %v1037 = vunpack.c.l.b16 %v1021
        %v1038 = vunpack.c.l.b16 %v1022
        %v1039 = vunpack.c.l.b16 %v1023
        %v1040 = vunpack.c.l.b16 %v1024
        %v1041 = vpack.c.b16 %v1034, %v1033
        %v1042 = vpack.c.b16 %v1036, %v1035
        %v1043 = vpack.c.b16 %v1038, %v1037
        %v1044 = vpack.c.b16 %v1040, %v1039
        %v1046 = vsel %vm628, %v1041, 0
        %v1049 = vsel %vm628, %v1042, 0
        %v1052 = vsel %vm628, %v1043, 0
        %v1055 = vsel %vm628, %v1044, 0
        %1057 = vmatprep.subr.bf16.mxu0 0
        %1058 = vmatpush1.bf16.msra.mxu0 %v604
        %1059 = vmatprep.subr.bf16.mxu0 0
        %1060 = vmatpush1.bf16.msra.mxu0 %v605
        %1061 = vmatprep.subr.bf16.mxu0 0
        %1062 = vmatpush1.bf16.msra.mxu0 %v606
        %1063 = vmatprep.subr.bf16.mxu0 0
        %1064 = vmatpush1.bf16.msra.mxu0 %v607
        %1065 = vmatprep.subr.bf16.mxu0 0
        %1066 = vmatpush1.bf16.msra.mxu0 0
        %1067 = vmatprep.subr.bf16.mxu0 0
        %1068 = vmatpush1.bf16.msra.mxu0 0
        %1069 = vmatprep.subr.bf16.mxu0 0
        %1070 = vmatpush1.bf16.msra.mxu0 0
        %1071 = vmatprep.subr.bf16.mxu0 0
        %1072 = vmatpush1.bf16.msra.mxu0 0
        %1073 = vmatprep.subr.bf16.mxu0 0
        %1074 = vmatpush1.bf16.msra.mxu0 0
        %1075 = vmatprep.subr.bf16.mxu0 0
        %1076 = vmatpush1.bf16.msra.mxu0 0
        %1077 = vmatprep.subr.bf16.mxu0 0
        %1078 = vmatpush1.bf16.msra.mxu0 0
        %1079 = vmatprep.subr.bf16.mxu0 0
        %1080 = vmatpush1.bf16.msra.mxu0 0
        %1081 = vmatprep.subr.bf16.mxu0 0
        %1082 = vmatpush1.bf16.msra.mxu0 0
        %1083 = vmatprep.subr.bf16.mxu0 0
        %1084 = vmatpush1.bf16.msra.mxu0 0
        %1085 = vmatprep.subr.bf16.mxu0 0
        %1086 = vmatpush1.bf16.msra.mxu0 0
        %1087 = vmatprep.subr.bf16.mxu0 0
        %1088 = vmatpush1.bf16.msra.mxu0 0
        %1089 = vmatprep.mubr.bf16.mxu0 0
        %1090 = vmatmul.mubr.bf16.gmra.mrb[0].mxu0 %v1046
        %v1091 = vpop.f32.mrb[0].mxu0
        %v1092 = vadd.f32 0.0, %v1091
        %v1093 = vpop.f32.mrb[0].mxu0
        %v1094 = vpop.f32.mrb[0].mxu0
        %v1095 = vadd.f32 0.0, %v1094
        %v1096 = vpop.f32.mrb[0].mxu0
        %1097 = vmatprep.mubr.bf16.mxu0 0
        %1098 = vmatmul.mubr.bf16.gmra.mrb[0].mxu0 %v1049
        %v1099 = vpop.f32.mrb[0].mxu0
        %v1100 = vadd.f32 0.0, %v1099
        %v1101 = vpop.f32.mrb[0].mxu0
        %v1102 = vpop.f32.mrb[0].mxu0
        %v1103 = vadd.f32 0.0, %v1102
        %v1104 = vpop.f32.mrb[0].mxu0
        %1105 = vmatprep.mubr.bf16.mxu0 0
        %1106 = vmatmul.mubr.bf16.gmra.mrb[0].mxu0 %v1052
        %v1107 = vpop.f32.mrb[0].mxu0
        %v1108 = vadd.f32 0.0, %v1107
        %v1109 = vpop.f32.mrb[0].mxu0
        %v1110 = vpop.f32.mrb[0].mxu0
        %v1111 = vadd.f32 0.0, %v1110
        %v1112 = vpop.f32.mrb[0].mxu0
        %1113 = vmatprep.mubr.bf16.mxu0 0
        %1114 = vmatmul.mubr.bf16.gmra.mrb[0].mxu0 %v1055
        %v1115 = vpop.f32.mrb[0].mxu0
        %v1116 = vadd.f32 0.0, %v1115
        %v1117 = vpop.f32.mrb[0].mxu0
        %v1118 = vpop.f32.mrb[0].mxu0
        %v1119 = vadd.f32 0.0, %v1118
        %v1120 = vpop.f32.mrb[0].mxu0
        %1121 = vdwg.mxu0
        %s1122 = scalar_lea.vmem %s2, 32
        %v1123 = vld [vmem:[%s1122] sm:$0xff]
        %v1124 = vld [vmem:[%s1122 + $0x8] sm:$0xff]
        %v1125 = vpack.c.bf16 %v1095, %v1092
        %v1126 = vpack.c.bf16 %v1103, %v1100
        %v1127 = vpack.c.bf16 %v1111, %v1108
        %v1128 = vpack.c.bf16 %v1119, %v1116
        %v1131 = vunpack.c.l.b16 %v1123
        %v1132 = vunpack.c.h.b16 %v1123
        %v1133 = vunpack.c.l.b16 %v1124
        %v1134 = vunpack.c.h.b16 %v1124
        %v1135 = vpack.c.b16 %v1133, %v1131
        %v1136 = vpack.c.b16 %v1134, %v1132
        %v1140 = vsel %vm835, %v1125, 0
        %v1143 = vsel %vm835, %v1126, 0
        %v1146 = vsel %vm835, %v1127, 0
        %v1149 = vsel %vm835, %v1128, 0
        %1151 = vmatprep.subr.bf16.mxu0 %v1136
        %1152 = vmatpush1.bf16.msra.mxu0 %v1135
        %1153 = vmatprep.subr.bf16.mxu0 0
        %1154 = vmatpush1.bf16.msra.mxu0 0
        %1155 = vmatprep.subr.bf16.mxu0 0
        %1156 = vmatpush1.bf16.msra.mxu0 0
        %1157 = vmatprep.subr.bf16.mxu0 0
        %1158 = vmatpush1.bf16.msra.mxu0 0
        %1159 = vmatprep.subr.bf16.mxu0 0
        %1160 = vmatpush1.bf16.msra.mxu0 0
        %1161 = vmatprep.subr.bf16.mxu0 0
        %1162 = vmatpush1.bf16.msra.mxu0 0
        %1163 = vmatprep.subr.bf16.mxu0 0
        %1164 = vmatpush1.bf16.msra.mxu0 0
        %1165 = vmatprep.subr.bf16.mxu0 0
        %1166 = vmatpush1.bf16.msra.mxu0 0
        %1167 = vmatprep.subr.bf16.mxu0 0
        %1168 = vmatpush1.bf16.msra.mxu0 0
        %1169 = vmatprep.subr.bf16.mxu0 0
        %1170 = vmatpush1.bf16.msra.mxu0 0
        %1171 = vmatprep.subr.bf16.mxu0 0
        %1172 = vmatpush1.bf16.msra.mxu0 0
        %1173 = vmatprep.subr.bf16.mxu0 0
        %1174 = vmatpush1.bf16.msra.mxu0 0
        %1175 = vmatprep.subr.bf16.mxu0 0
        %1176 = vmatpush1.bf16.msra.mxu0 0
        %1177 = vmatprep.subr.bf16.mxu0 0
        %1178 = vmatpush1.bf16.msra.mxu0 0
        %1179 = vmatprep.subr.bf16.mxu0 0
        %1180 = vmatpush1.bf16.msra.mxu0 0
        %1181 = vmatprep.subr.bf16.mxu0 0
        %1182 = vmatpush1.bf16.msra.mxu0 0
        %1183 = vmatprep.mubr.bf16.mxu0 0
        %1184 = vmatmul.mubr.bf16.gmra.mrb[0].mxu0 %v1140
        %v1185 = vpop.f32.mrb[0].mxu0
        %v1186 = vadd.f32 0.0, %v1185
        %v1187 = vpop.f32.mrb[0].mxu0
        %v1188 = vadd.f32 0.0, %v1187
        %v1189 = vpop.f32.mrb[0].mxu0
        %v1190 = vadd.f32 0.0, %v1189
        %v1191 = vpop.f32.mrb[0].mxu0
        %v1192 = vadd.f32 0.0, %v1191
        %1193 = vmatprep.mubr.bf16.mxu0 0
        %1194 = vmatmul.mubr.bf16.gmra.mrb[0].mxu0 %v1143
        %v1195 = vpop.f32.mrb[0].mxu0
        %v1196 = vadd.f32 0.0, %v1195
        %v1197 = vpop.f32.mrb[0].mxu0
        %v1198 = vadd.f32 0.0, %v1197
        %v1199 = vpop.f32.mrb[0].mxu0
        %v1200 = vadd.f32 0.0, %v1199
        %v1201 = vpop.f32.mrb[0].mxu0
        %v1202 = vadd.f32 0.0, %v1201
        %1203 = vmatprep.mubr.bf16.mxu0 0
        %1204 = vmatmul.mubr.bf16.gmra.mrb[0].mxu0 %v1146
        %v1205 = vpop.f32.mrb[0].mxu0
        %v1206 = vadd.f32 0.0, %v1205
        %v1207 = vpop.f32.mrb[0].mxu0
        %v1208 = vadd.f32 0.0, %v1207
        %v1209 = vpop.f32.mrb[0].mxu0
        %v1210 = vadd.f32 0.0, %v1209
        %v1211 = vpop.f32.mrb[0].mxu0
        %v1212 = vadd.f32 0.0, %v1211
        %1213 = vmatprep.mubr.bf16.mxu0 0
        %1214 = vmatmul.mubr.bf16.gmra.mrb[0].mxu0 %v1149
        %v1215 = vpop.f32.mrb[0].mxu0
        %v1216 = vadd.f32 0.0, %v1215
        %v1217 = vpop.f32.mrb[0].mxu0
        %v1218 = vadd.f32 0.0, %v1217
        %v1219 = vpop.f32.mrb[0].mxu0
        %v1220 = vadd.f32 0.0, %v1219
        %v1221 = vpop.f32.mrb[0].mxu0
        %v1222 = vadd.f32 0.0, %v1221
        %1223 = vdwg.mxu0
        %v1224 = vadd.f32 %v978, %v1186
        %v1225 = vadd.f32 %v980, %v1188
        %v1226 = vadd.f32 %v982, %v1190
        %v1227 = vadd.f32 %v984, %v1192
        %v1228 = vadd.f32 %v988, %v1196
        %v1229 = vadd.f32 %v990, %v1198
        %v1230 = vadd.f32 %v992, %v1200
        %v1231 = vadd.f32 %v994, %v1202
        %v1232 = vadd.f32 %v998, %v1206
        %v1233 = vadd.f32 %v1000, %v1208
        %v1234 = vadd.f32 %v1002, %v1210
        %v1235 = vadd.f32 %v1004, %v1212
        %v1236 = vadd.f32 %v1008, %v1216
        %v1237 = vadd.f32 %v1010, %v1218
        %v1238 = vadd.f32 %v1012, %v1220
        %v1239 = vadd.f32 %v1014, %v1222
        %v1240 = vld [vmem:[%s3] sm:$0x3]
        %v1242 = vlaneseq
        %v1243 = vshrl.u32 %v1242, 7
        %v1244 = vsub.s32 0, %v1243
        %v1245 = vrot.slane %v1240, %v1244
        %v1246 = vlaneseq
        %v1247 = vshrl.u32 %v1246, 7
        %v1248 = vsub.s32 1, %v1247
        %v1249 = vrot.slane %v1240, %v1248
        %v1252 = vadd.f32 %v1224, %v1245
        %v1253 = vadd.f32 %v1225, %v1249
        %v1254 = vadd.f32 %v1226, %v1245
        %v1255 = vadd.f32 %v1227, %v1249
        %v1256 = vadd.f32 %v1228, %v1245
        %v1257 = vadd.f32 %v1229, %v1249
        %v1258 = vadd.f32 %v1230, %v1245
        %v1259 = vadd.f32 %v1231, %v1249
        %v1260 = vadd.f32 %v1232, %v1245
        %v1261 = vadd.f32 %v1233, %v1249
        %v1262 = vadd.f32 %v1234, %v1245
        %v1263 = vadd.f32 %v1235, %v1249
        %v1264 = vadd.f32 %v1236, %v1245
        %v1265 = vadd.f32 %v1237, %v1249
        %v1266 = vadd.f32 %v1238, %v1245
        %v1267 = vadd.f32 %v1239, %v1249
        %v1268 = vmax.f32 %v1252, 0.0
        %v1269 = vmax.f32 %v1253, 0.0
        %v1270 = vmax.f32 %v1254, 0.0
        %v1271 = vmax.f32 %v1255, 0.0
        %v1272 = vmax.f32 %v1256, 0.0
        %v1273 = vmax.f32 %v1257, 0.0
        %v1274 = vmax.f32 %v1258, 0.0
        %v1275 = vmax.f32 %v1259, 0.0
        %v1276 = vmax.f32 %v1260, 0.0
        %v1277 = vmax.f32 %v1261, 0.0
        %v1278 = vmax.f32 %v1262, 0.0
        %v1279 = vmax.f32 %v1263, 0.0
        %v1280 = vmax.f32 %v1264, 0.0
        %v1281 = vmax.f32 %v1265, 0.0
        %v1282 = vmax.f32 %v1266, 0.0
        %v1283 = vmax.f32 %v1267, 0.0
        %v1284 = vld [vmem:[%s4] sm:$0xf]
        %v1285 = vld [vmem:[%s4 + $0x4] sm:$0xf]
        %v1286 = vld [vmem:[%s4 + $0x8] sm:$0xf]
        %v1287 = vld [vmem:[%s4 + $0xc] sm:$0xf]
        %v1288 = vpack.c.bf16 %v1270, %v1268
        %v1289 = vpack.c.bf16 %v1271, %v1269
        %v1290 = vpack.c.bf16 %v1274, %v1272
        %v1291 = vpack.c.bf16 %v1275, %v1273
        %v1292 = vpack.c.bf16 %v1278, %v1276
        %v1293 = vpack.c.bf16 %v1279, %v1277
        %v1294 = vpack.c.bf16 %v1282, %v1280
        %v1295 = vpack.c.bf16 %v1283, %v1281
        %v1300 = vunpack.c.l.b16 %v1284
        %v1301 = vunpack.c.l.b16 %v1285
        %v1302 = vunpack.c.l.b16 %v1286
        %v1303 = vunpack.c.l.b16 %v1287
        %v1304 = vpack.c.b16 %v1301, %v1300
        %v1305 = vpack.c.b16 %v1303, %v1302
        %v1307 = vsel %vm628, %v1304, 0
        %v1310 = vsel %vm628, %v1305, 0
        %1312 = vmatprep.subr.bf16.mxu0 %v1289
        %1313 = vmatpush1.bf16.msra.mxu0 %v1288
        %1314 = vmatprep.subr.bf16.mxu0 %v1291
        %1315 = vmatpush1.bf16.msra.mxu0 %v1290
        %1316 = vmatprep.subr.bf16.mxu0 %v1293
        %1317 = vmatpush1.bf16.msra.mxu0 %v1292
        %1318 = vmatprep.subr.bf16.mxu0 %v1295
        %1319 = vmatpush1.bf16.msra.mxu0 %v1294
        %1320 = vmatprep.subr.bf16.mxu0 0
        %1321 = vmatpush1.bf16.msra.mxu0 0
        %1322 = vmatprep.subr.bf16.mxu0 0
        %1323 = vmatpush1.bf16.msra.mxu0 0
        %1324 = vmatprep.subr.bf16.mxu0 0
        %1325 = vmatpush1.bf16.msra.mxu0 0
        %1326 = vmatprep.subr.bf16.mxu0 0
        %1327 = vmatpush1.bf16.msra.mxu0 0
        %1328 = vmatprep.subr.bf16.mxu0 0
        %1329 = vmatpush1.bf16.msra.mxu0 0
        %1330 = vmatprep.subr.bf16.mxu0 0
        %1331 = vmatpush1.bf16.msra.mxu0 0
        %1332 = vmatprep.subr.bf16.mxu0 0
        %1333 = vmatpush1.bf16.msra.mxu0 0
        %1334 = vmatprep.subr.bf16.mxu0 0
        %1335 = vmatpush1.bf16.msra.mxu0 0
        %1336 = vmatprep.subr.bf16.mxu0 0
        %1337 = vmatpush1.bf16.msra.mxu0 0
        %1338 = vmatprep.subr.bf16.mxu0 0
        %1339 = vmatpush1.bf16.msra.mxu0 0
        %1340 = vmatprep.subr.bf16.mxu0 0
        %1341 = vmatpush1.bf16.msra.mxu0 0
        %1342 = vmatprep.subr.bf16.mxu0 0
        %1343 = vmatpush1.bf16.msra.mxu0 0
        %1344 = vmatprep.mubr.bf16.mxu0 0
        %1345 = vmatmul.mubr.bf16.gmra.mrb[0].mxu0 %v1307
        %v1346 = vpop.f32.mrb[0].mxu0
        %v1347 = vadd.f32 0.0, %v1346
        %v1348 = vpop.f32.mrb[0].mxu0
        %v1349 = vadd.f32 0.0, %v1348
        %v1350 = vpop.f32.mrb[0].mxu0
        %v1351 = vadd.f32 0.0, %v1350
        %v1352 = vpop.f32.mrb[0].mxu0
        %v1353 = vadd.f32 0.0, %v1352
        %1354 = vmatprep.mubr.bf16.mxu0 0
        %1355 = vmatmul.mubr.bf16.gmra.mrb[0].mxu0 %v1310
        %v1356 = vpop.f32.mrb[0].mxu0
        %v1357 = vadd.f32 0.0, %v1356
        %v1358 = vpop.f32.mrb[0].mxu0
        %v1359 = vadd.f32 0.0, %v1358
        %v1360 = vpop.f32.mrb[0].mxu0
        %v1361 = vadd.f32 0.0, %v1360
        %v1362 = vpop.f32.mrb[0].mxu0
        %v1363 = vadd.f32 0.0, %v1362
        %1364 = vdwg.mxu0
        %s1365 = scalar_lea.vmem %s4, 16
        %v1366 = vld [vmem:[%s1365] sm:$0xf]
        %v1367 = vld [vmem:[%s1365 + $0x4] sm:$0xf]
        %v1368 = vld [vmem:[%s1365 + $0x8] sm:$0xf]
        %v1369 = vld [vmem:[%s1365 + $0xc] sm:$0xf]
        %v1374 = vunpack.c.l.b16 %v1366
        %v1375 = vunpack.c.l.b16 %v1367
        %v1376 = vunpack.c.l.b16 %v1368
        %v1377 = vunpack.c.l.b16 %v1369
        %v1378 = vpack.c.b16 %v1375, %v1374
        %v1379 = vpack.c.b16 %v1377, %v1376
        %v1381 = vsel %vm628, %v1378, 0
        %v1384 = vsel %vm628, %v1379, 0
        %1386 = vmatprep.subr.bf16.mxu0 %v1289
        %1387 = vmatpush1.bf16.msra.mxu0 %v1288
        %1388 = vmatprep.subr.bf16.mxu0 %v1291
        %1389 = vmatpush1.bf16.msra.mxu0 %v1290
        %1390 = vmatprep.subr.bf16.mxu0 %v1293
        %1391 = vmatpush1.bf16.msra.mxu0 %v1292
        %1392 = vmatprep.subr.bf16.mxu0 %v1295
        %1393 = vmatpush1.bf16.msra.mxu0 %v1294
        %1394 = vmatprep.subr.bf16.mxu0 0
        %1395 = vmatpush1.bf16.msra.mxu0 0
        %1396 = vmatprep.subr.bf16.mxu0 0
        %1397 = vmatpush1.bf16.msra.mxu0 0
        %1398 = vmatprep.subr.bf16.mxu0 0
        %1399 = vmatpush1.bf16.msra.mxu0 0
        %1400 = vmatprep.subr.bf16.mxu0 0
        %1401 = vmatpush1.bf16.msra.mxu0 0
        %1402 = vmatprep.subr.bf16.mxu0 0
        %1403 = vmatpush1.bf16.msra.mxu0 0
        %1404 = vmatprep.subr.bf16.mxu0 0
        %1405 = vmatpush1.bf16.msra.mxu0 0
        %1406 = vmatprep.subr.bf16.mxu0 0
        %1407 = vmatpush1.bf16.msra.mxu0 0
        %1408 = vmatprep.subr.bf16.mxu0 0
        %1409 = vmatpush1.bf16.msra.mxu0 0
        %1410 = vmatprep.subr.bf16.mxu0 0
        %1411 = vmatpush1.bf16.msra.mxu0 0
        %1412 = vmatprep.subr.bf16.mxu0 0
        %1413 = vmatpush1.bf16.msra.mxu0 0
        %1414 = vmatprep.subr.bf16.mxu0 0
        %1415 = vmatpush1.bf16.msra.mxu0 0
        %1416 = vmatprep.subr.bf16.mxu0 0
        %1417 = vmatpush1.bf16.msra.mxu0 0
        %1418 = vmatprep.mubr.bf16.mxu0 0
        %1419 = vmatmul.mubr.bf16.gmra.mrb[0].mxu0 %v1381
        %v1420 = vpop.f32.mrb[0].mxu0
        %v1421 = vadd.f32 0.0, %v1420
        %v1422 = vpop.f32.mrb[0].mxu0
        %v1423 = vadd.f32 0.0, %v1422
        %v1424 = vpop.f32.mrb[0].mxu0
        %v1425 = vadd.f32 0.0, %v1424
        %v1426 = vpop.f32.mrb[0].mxu0
        %v1427 = vadd.f32 0.0, %v1426
        %1428 = vmatprep.mubr.bf16.mxu0 0
        %1429 = vmatmul.mubr.bf16.gmra.mrb[0].mxu0 %v1384
        %v1430 = vpop.f32.mrb[0].mxu0
        %v1431 = vadd.f32 0.0, %v1430
        %v1432 = vpop.f32.mrb[0].mxu0
        %v1433 = vadd.f32 0.0, %v1432
        %v1434 = vpop.f32.mrb[0].mxu0
        %v1435 = vadd.f32 0.0, %v1434
        %v1436 = vpop.f32.mrb[0].mxu0
        %v1437 = vadd.f32 0.0, %v1436
        %1438 = vdwg.mxu0
        %v1439 = vmax.f32 %v1347, %v1421
        %v1440 = vmax.f32 %v1349, %v1423
        %v1441 = vmax.f32 %v1351, %v1425
        %v1442 = vmax.f32 %v1353, %v1427
        %v1443 = vmax.f32 %v1357, %v1431
        %v1444 = vmax.f32 %v1359, %v1433
        %v1445 = vmax.f32 %v1361, %v1435
        %v1446 = vmax.f32 %v1363, %v1437
        %v1447 = vld [vmem:[%s5] sm:$0xf]
        %v1448 = vld [vmem:[%s5 + $0x4] sm:$0xf]
        %v1449 = vld [vmem:[%s5 + $0x8] sm:$0xf]
        %v1450 = vld [vmem:[%s5 + $0xc] sm:$0xf]
        %v1451 = vld [vmem:[%s5 + $0x10] sm:$0xf]
        %v1452 = vld [vmem:[%s5 + $0x14] sm:$0xf]
        %v1453 = vld [vmem:[%s5 + $0x18] sm:$0xf]
        %v1454 = vld [vmem:[%s5 + $0x1c] sm:$0xf]
        %v1455 = vld [vmem:[%s5 + $0x20] sm:$0xf]
        %v1456 = vld [vmem:[%s5 + $0x24] sm:$0xf]
        %v1457 = vld [vmem:[%s5 + $0x28] sm:$0xf]
        %v1458 = vld [vmem:[%s5 + $0x2c] sm:$0xf]
        %v1459 = vld [vmem:[%s5 + $0x30] sm:$0xf]
        %v1460 = vld [vmem:[%s5 + $0x34] sm:$0xf]
        %v1461 = vld [vmem:[%s5 + $0x38] sm:$0xf]
        %v1462 = vld [vmem:[%s5 + $0x3c] sm:$0xf]
        %v1463 = vld [vmem:[%s5 + $0x40] sm:$0xf]
        %v1464 = vld [vmem:[%s5 + $0x44] sm:$0xf]
        %v1465 = vld [vmem:[%s5 + $0x48] sm:$0xf]
        %v1466 = vld [vmem:[%s5 + $0x4c] sm:$0xf]
        %v1467 = vld [vmem:[%s5 + $0x50] sm:$0xf]
        %v1468 = vld [vmem:[%s5 + $0x54] sm:$0xf]
        %v1469 = vld [vmem:[%s5 + $0x58] sm:$0xf]
        %v1470 = vld [vmem:[%s5 + $0x5c] sm:$0xf]
        %v1471 = vld [vmem:[%s5 + $0x60] sm:$0xf]
        %v1472 = vld [vmem:[%s5 + $0x64] sm:$0xf]
        %v1473 = vld [vmem:[%s5 + $0x68] sm:$0xf]
        %v1474 = vld [vmem:[%s5 + $0x6c] sm:$0xf]
        %v1475 = vld [vmem:[%s5 + $0x70] sm:$0xf]
        %v1476 = vld [vmem:[%s5 + $0x74] sm:$0xf]
        %v1477 = vld [vmem:[%s5 + $0x78] sm:$0xf]
        %v1478 = vld [vmem:[%s5 + $0x7c] sm:$0xf]
        %v1479 = vpack.c.bf16 %v1441, %v1439
        %v1480 = vpack.c.bf16 %v1442, %v1440
        %v1481 = vpack.c.bf16 %v1445, %v1443
        %v1482 = vpack.c.bf16 %v1446, %v1444
        %v1515 = vunpack.c.l.b16 %v1447
        %v1516 = vunpack.c.l.b16 %v1448
        %v1517 = vunpack.c.l.b16 %v1449
        %v1518 = vunpack.c.l.b16 %v1450
        %v1519 = vunpack.c.l.b16 %v1451
        %v1520 = vunpack.c.l.b16 %v1452
        %v1521 = vunpack.c.l.b16 %v1453
        %v1522 = vunpack.c.l.b16 %v1454
        %v1523 = vunpack.c.l.b16 %v1455
        %v1524 = vunpack.c.l.b16 %v1456
        %v1525 = vunpack.c.l.b16 %v1457
        %v1526 = vunpack.c.l.b16 %v1458
        %v1527 = vunpack.c.l.b16 %v1459
        %v1528 = vunpack.c.l.b16 %v1460
        %v1529 = vunpack.c.l.b16 %v1461
        %v1530 = vunpack.c.l.b16 %v1462
        %v1531 = vunpack.c.l.b16 %v1463
        %v1532 = vunpack.c.l.b16 %v1464
        %v1533 = vunpack.c.l.b16 %v1465
        %v1534 = vunpack.c.l.b16 %v1466
        %v1535 = vunpack.c.l.b16 %v1467
        %v1536 = vunpack.c.l.b16 %v1468
        %v1537 = vunpack.c.l.b16 %v1469
        %v1538 = vunpack.c.l.b16 %v1470
        %v1539 = vunpack.c.l.b16 %v1471
        %v1540 = vunpack.c.l.b16 %v1472
        %v1541 = vunpack.c.l.b16 %v1473
        %v1542 = vunpack.c.l.b16 %v1474
        %v1543 = vunpack.c.l.b16 %v1475
        %v1544 = vunpack.c.l.b16 %v1476
        %v1545 = vunpack.c.l.b16 %v1477
        %v1546 = vunpack.c.l.b16 %v1478
        %v1547 = vpack.c.b16 %v1516, %v1515
        %v1548 = vpack.c.b16 %v1518, %v1517
        %v1549 = vpack.c.b16 %v1520, %v1519
        %v1550 = vpack.c.b16 %v1522, %v1521
        %v1551 = vpack.c.b16 %v1524, %v1523
        %v1552 = vpack.c.b16 %v1526, %v1525
        %v1553 = vpack.c.b16 %v1528, %v1527
        %v1554 = vpack.c.b16 %v1530, %v1529
        %v1555 = vpack.c.b16 %v1532, %v1531
        %v1556 = vpack.c.b16 %v1534, %v1533
        %v1557 = vpack.c.b16 %v1536, %v1535
        %v1558 = vpack.c.b16 %v1538, %v1537
        %v1559 = vpack.c.b16 %v1540, %v1539
        %v1560 = vpack.c.b16 %v1542, %v1541
        %v1561 = vpack.c.b16 %v1544, %v1543
        %v1562 = vpack.c.b16 %v1546, %v1545
        %1579 = vmatprep.subr.bf16.mxu0 0
        %1580 = vmatpush1.bf16.msra.mxu0 %v1547
        %1581 = vmatprep.subr.bf16.mxu0 0
        %1582 = vmatpush1.bf16.msra.mxu0 %v1548
        %1583 = vmatprep.subr.bf16.mxu0 0
        %1584 = vmatpush1.bf16.msra.mxu0 %v1549
        %1585 = vmatprep.subr.bf16.mxu0 0
        %1586 = vmatpush1.bf16.msra.mxu0 %v1550
        %1587 = vmatprep.subr.bf16.mxu0 0
        %1588 = vmatpush1.bf16.msra.mxu0 %v1551
        %1589 = vmatprep.subr.bf16.mxu0 0
        %1590 = vmatpush1.bf16.msra.mxu0 %v1552
        %1591 = vmatprep.subr.bf16.mxu0 0
        %1592 = vmatpush1.bf16.msra.mxu0 %v1553
        %1593 = vmatprep.subr.bf16.mxu0 0
        %1594 = vmatpush1.bf16.msra.mxu0 %v1554
        %1595 = vmatprep.subr.bf16.mxu0 0
        %1596 = vmatpush1.bf16.msra.mxu0 %v1555
        %1597 = vmatprep.subr.bf16.mxu0 0
        %1598 = vmatpush1.bf16.msra.mxu0 %v1556
        %1599 = vmatprep.subr.bf16.mxu0 0
        %1600 = vmatpush1.bf16.msra.mxu0 %v1557
        %1601 = vmatprep.subr.bf16.mxu0 0
        %1602 = vmatpush1.bf16.msra.mxu0 %v1558
        %1603 = vmatprep.subr.bf16.mxu0 0
        %1604 = vmatpush1.bf16.msra.mxu0 %v1559
        %1605 = vmatprep.subr.bf16.mxu0 0
        %1606 = vmatpush1.bf16.msra.mxu0 %v1560
        %1607 = vmatprep.subr.bf16.mxu0 0
        %1608 = vmatpush1.bf16.msra.mxu0 %v1561
        %1609 = vmatprep.subr.bf16.mxu0 0
        %1610 = vmatpush1.bf16.msra.mxu0 %v1562
        %1611 = vmatprep.mubr.bf16.mxu0 %v1480
        %1612 = vmatmul.mubr.bf16.gmra.mrb[0].mxu0 %v1479
        %v1613 = vpop.f32.mrb[0].mxu0
        %v1614 = vadd.f32 0.0, %v1613
        %v1615 = vpop.f32.mrb[0].mxu0
        %v1616 = vpop.f32.mrb[0].mxu0
        %v1617 = vadd.f32 0.0, %v1616
        %v1618 = vpop.f32.mrb[0].mxu0
        %1619 = vmatprep.mubr.bf16.mxu0 %v1482
        %1620 = vmatmul.mubr.bf16.gmra.mrb[0].mxu0 %v1481
        %v1621 = vpop.f32.mrb[0].mxu0
        %v1622 = vadd.f32 0.0, %v1621
        %v1623 = vpop.f32.mrb[0].mxu0
        %v1624 = vpop.f32.mrb[0].mxu0
        %v1625 = vadd.f32 0.0, %v1624
        %v1626 = vpop.f32.mrb[0].mxu0
        %1627 = vdwg.mxu0
        %s1628 = scalar_lea.vmem %s5, 128
        %v1629 = vld [vmem:[%s1628] sm:$0xf]
        %v1630 = vld [vmem:[%s1628 + $0x4] sm:$0xf]
        %v1631 = vld [vmem:[%s1628 + $0x8] sm:$0xf]
        %v1632 = vld [vmem:[%s1628 + $0xc] sm:$0xf]
        %v1633 = vld [vmem:[%s1628 + $0x10] sm:$0xf]
        %v1634 = vld [vmem:[%s1628 + $0x14] sm:$0xf]
        %v1635 = vld [vmem:[%s1628 + $0x18] sm:$0xf]
        %v1636 = vld [vmem:[%s1628 + $0x1c] sm:$0xf]
        %v1637 = vld [vmem:[%s1628 + $0x20] sm:$0xf]
        %v1638 = vld [vmem:[%s1628 + $0x24] sm:$0xf]
        %v1639 = vld [vmem:[%s1628 + $0x28] sm:$0xf]
        %v1640 = vld [vmem:[%s1628 + $0x2c] sm:$0xf]
        %v1641 = vld [vmem:[%s1628 + $0x30] sm:$0xf]
        %v1642 = vld [vmem:[%s1628 + $0x34] sm:$0xf]
        %v1643 = vld [vmem:[%s1628 + $0x38] sm:$0xf]
        %v1644 = vld [vmem:[%s1628 + $0x3c] sm:$0xf]
        %v1645 = vld [vmem:[%s1628 + $0x40] sm:$0xf]
        %v1646 = vld [vmem:[%s1628 + $0x44] sm:$0xf]
        %v1647 = vld [vmem:[%s1628 + $0x48] sm:$0xf]
        %v1648 = vld [vmem:[%s1628 + $0x4c] sm:$0xf]
        %v1649 = vld [vmem:[%s1628 + $0x50] sm:$0xf]
        %v1650 = vld [vmem:[%s1628 + $0x54] sm:$0xf]
        %v1651 = vld [vmem:[%s1628 + $0x58] sm:$0xf]
        %v1652 = vld [vmem:[%s1628 + $0x5c] sm:$0xf]
        %v1653 = vld [vmem:[%s1628 + $0x60] sm:$0xf]
        %v1654 = vld [vmem:[%s1628 + $0x64] sm:$0xf]
        %v1655 = vld [vmem:[%s1628 + $0x68] sm:$0xf]
        %v1656 = vld [vmem:[%s1628 + $0x6c] sm:$0xf]
        %v1657 = vld [vmem:[%s1628 + $0x70] sm:$0xf]
        %v1658 = vld [vmem:[%s1628 + $0x74] sm:$0xf]
        %v1659 = vld [vmem:[%s1628 + $0x78] sm:$0xf]
        %v1660 = vld [vmem:[%s1628 + $0x7c] sm:$0xf]
        %v1693 = vunpack.c.l.b16 %v1629
        %v1694 = vunpack.c.l.b16 %v1630
        %v1695 = vunpack.c.l.b16 %v1631
        %v1696 = vunpack.c.l.b16 %v1632
        %v1697 = vunpack.c.l.b16 %v1633
        %v1698 = vunpack.c.l.b16 %v1634
        %v1699 = vunpack.c.l.b16 %v1635
        %v1700 = vunpack.c.l.b16 %v1636
        %v1701 = vunpack.c.l.b16 %v1637
        %v1702 = vunpack.c.l.b16 %v1638
        %v1703 = vunpack.c.l.b16 %v1639
        %v1704 = vunpack.c.l.b16 %v1640
        %v1705 = vunpack.c.l.b16 %v1641
        %v1706 = vunpack.c.l.b16 %v1642
        %v1707 = vunpack.c.l.b16 %v1643
        %v1708 = vunpack.c.l.b16 %v1644
        %v1709 = vunpack.c.l.b16 %v1645
        %v1710 = vunpack.c.l.b16 %v1646
        %v1711 = vunpack.c.l.b16 %v1647
        %v1712 = vunpack.c.l.b16 %v1648
        %v1713 = vunpack.c.l.b16 %v1649
        %v1714 = vunpack.c.l.b16 %v1650
        %v1715 = vunpack.c.l.b16 %v1651
        %v1716 = vunpack.c.l.b16 %v1652
        %v1717 = vunpack.c.l.b16 %v1653
        %v1718 = vunpack.c.l.b16 %v1654
        %v1719 = vunpack.c.l.b16 %v1655
        %v1720 = vunpack.c.l.b16 %v1656
        %v1721 = vunpack.c.l.b16 %v1657
        %v1722 = vunpack.c.l.b16 %v1658
        %v1723 = vunpack.c.l.b16 %v1659
        %v1724 = vunpack.c.l.b16 %v1660
        %v1725 = vpack.c.b16 %v1694, %v1693
        %v1726 = vpack.c.b16 %v1696, %v1695
        %v1727 = vpack.c.b16 %v1698, %v1697
        %v1728 = vpack.c.b16 %v1700, %v1699
        %v1729 = vpack.c.b16 %v1702, %v1701
        %v1730 = vpack.c.b16 %v1704, %v1703
        %v1731 = vpack.c.b16 %v1706, %v1705
        %v1732 = vpack.c.b16 %v1708, %v1707
        %v1733 = vpack.c.b16 %v1710, %v1709
        %v1734 = vpack.c.b16 %v1712, %v1711
        %v1735 = vpack.c.b16 %v1714, %v1713
        %v1736 = vpack.c.b16 %v1716, %v1715
        %v1737 = vpack.c.b16 %v1718, %v1717
        %v1738 = vpack.c.b16 %v1720, %v1719
        %v1739 = vpack.c.b16 %v1722, %v1721
        %v1740 = vpack.c.b16 %v1724, %v1723
        %1757 = vmatprep.subr.bf16.mxu0 0
        %1758 = vmatpush1.bf16.msra.mxu0 %v1725
        %1759 = vmatprep.subr.bf16.mxu0 0
        %1760 = vmatpush1.bf16.msra.mxu0 %v1726
        %1761 = vmatprep.subr.bf16.mxu0 0
        %1762 = vmatpush1.bf16.msra.mxu0 %v1727
        %1763 = vmatprep.subr.bf16.mxu0 0
        %1764 = vmatpush1.bf16.msra.mxu0 %v1728
        %1765 = vmatprep.subr.bf16.mxu0 0
        %1766 = vmatpush1.bf16.msra.mxu0 %v1729
        %1767 = vmatprep.subr.bf16.mxu0 0
        %1768 = vmatpush1.bf16.msra.mxu0 %v1730
        %1769 = vmatprep.subr.bf16.mxu0 0
        %1770 = vmatpush1.bf16.msra.mxu0 %v1731
        %1771 = vmatprep.subr.bf16.mxu0 0
        %1772 = vmatpush1.bf16.msra.mxu0 %v1732
        %1773 = vmatprep.subr.bf16.mxu0 0
        %1774 = vmatpush1.bf16.msra.mxu0 %v1733
        %1775 = vmatprep.subr.bf16.mxu0 0
        %1776 = vmatpush1.bf16.msra.mxu0 %v1734
        %1777 = vmatprep.subr.bf16.mxu0 0
        %1778 = vmatpush1.bf16.msra.mxu0 %v1735
        %1779 = vmatprep.subr.bf16.mxu0 0
        %1780 = vmatpush1.bf16.msra.mxu0 %v1736
        %1781 = vmatprep.subr.bf16.mxu0 0
        %1782 = vmatpush1.bf16.msra.mxu0 %v1737
        %1783 = vmatprep.subr.bf16.mxu0 0
        %1784 = vmatpush1.bf16.msra.mxu0 %v1738
        %1785 = vmatprep.subr.bf16.mxu0 0
        %1786 = vmatpush1.bf16.msra.mxu0 %v1739
        %1787 = vmatprep.subr.bf16.mxu0 0
        %1788 = vmatpush1.bf16.msra.mxu0 %v1740
        %1789 = vmatprep.mubr.bf16.mxu0 %v1480
        %1790 = vmatmul.mubr.bf16.gmra.mrb[0].mxu0 %v1479
        %v1791 = vpop.f32.mrb[0].mxu0
        %v1792 = vadd.f32 0.0, %v1791
        %v1793 = vpop.f32.mrb[0].mxu0
        %v1794 = vpop.f32.mrb[0].mxu0
        %v1795 = vadd.f32 0.0, %v1794
        %v1796 = vpop.f32.mrb[0].mxu0
        %1797 = vmatprep.mubr.bf16.mxu0 %v1482
        %1798 = vmatmul.mubr.bf16.gmra.mrb[0].mxu0 %v1481
        %v1799 = vpop.f32.mrb[0].mxu0
        %v1800 = vadd.f32 0.0, %v1799
        %v1801 = vpop.f32.mrb[0].mxu0
        %v1802 = vpop.f32.mrb[0].mxu0
        %v1803 = vadd.f32 0.0, %v1802
        %v1804 = vpop.f32.mrb[0].mxu0
        %1805 = vdwg.mxu0
        %v1806 = vmax.f32 %v1614, %v1792
        %v1807 = vmax.f32 %v1617, %v1795
        %v1808 = vmax.f32 %v1622, %v1800
        %v1809 = vmax.f32 %v1625, %v1803
        %v1810 = vld [vmem:[%s6] sm:$0xf]
        %v1811 = vld [vmem:[%s6 + $0x4] sm:$0xf]
        %v1812 = vld [vmem:[%s6 + $0x8] sm:$0xf]
        %v1813 = vld [vmem:[%s6 + $0xc] sm:$0xf]
        %v1814 = vpack.c.bf16 %v1807, %v1806
        %v1815 = vpack.c.bf16 %v1809, %v1808
        %v1820 = vunpack.c.l.b16 %v1810
        %v1821 = vunpack.c.l.b16 %v1811
        %v1822 = vunpack.c.l.b16 %v1812
        %v1823 = vunpack.c.l.b16 %v1813
        %v1824 = vpack.c.b16 %v1821, %v1820
        %v1825 = vpack.c.b16 %v1823, %v1822
        %vm1826 = vcmask 261120
        %v1828 = vsel %vm1826, %v1824, 0
        %v1831 = vsel %vm1826, %v1825, 0
        %1833 = vmatprep.subr.bf16.mxu0 0
        %1834 = vmatpush1.bf16.msra.mxu0 %v1814
        %1835 = vmatprep.subr.bf16.mxu0 0
        %1836 = vmatpush1.bf16.msra.mxu0 %v1815
        %1837 = vmatprep.subr.bf16.mxu0 0
        %1838 = vmatpush1.bf16.msra.mxu0 0
        %1839 = vmatprep.subr.bf16.mxu0 0
        %1840 = vmatpush1.bf16.msra.mxu0 0
        %1841 = vmatprep.subr.bf16.mxu0 0
        %1842 = vmatpush1.bf16.msra.mxu0 0
        %1843 = vmatprep.subr.bf16.mxu0 0
        %1844 = vmatpush1.bf16.msra.mxu0 0
        %1845 = vmatprep.subr.bf16.mxu0 0
        %1846 = vmatpush1.bf16.msra.mxu0 0
        %1847 = vmatprep.subr.bf16.mxu0 0
        %1848 = vmatpush1.bf16.msra.mxu0 0
        %1849 = vmatprep.subr.bf16.mxu0 0
        %1850 = vmatpush1.bf16.msra.mxu0 0
        %1851 = vmatprep.subr.bf16.mxu0 0
        %1852 = vmatpush1.bf16.msra.mxu0 0
        %1853 = vmatprep.subr.bf16.mxu0 0
        %1854 = vmatpush1.bf16.msra.mxu0 0
        %1855 = vmatprep.subr.bf16.mxu0 0
        %1856 = vmatpush1.bf16.msra.mxu0 0
        %1857 = vmatprep.subr.bf16.mxu0 0
        %1858 = vmatpush1.bf16.msra.mxu0 0
        %1859 = vmatprep.subr.bf16.mxu0 0
        %1860 = vmatpush1.bf16.msra.mxu0 0
        %1861 = vmatprep.subr.bf16.mxu0 0
        %1862 = vmatpush1.bf16.msra.mxu0 0
        %1863 = vmatprep.subr.bf16.mxu0 0
        %1864 = vmatpush1.bf16.msra.mxu0 0
        %1865 = vmatprep.mubr.bf16.mxu0 0
        %1866 = vmatmul.mubr.bf16.gmra.mrb[0].mxu0 %v1828
        %v1867 = vpop.f32.mrb[0].mxu0
        %v1868 = vadd.f32 0.0, %v1867
        %v1869 = vpop.f32.mrb[0].mxu0
        %v1870 = vpop.f32.mrb[0].mxu0
        %v1871 = vadd.f32 0.0, %v1870
        %v1872 = vpop.f32.mrb[0].mxu0
        %1873 = vmatprep.mubr.bf16.mxu0 0
        %1874 = vmatmul.mubr.bf16.gmra.mrb[0].mxu0 %v1831
        %v1875 = vpop.f32.mrb[0].mxu0
        %v1876 = vadd.f32 0.0, %v1875
        %v1877 = vpop.f32.mrb[0].mxu0
        %v1878 = vpop.f32.mrb[0].mxu0
        %v1879 = vadd.f32 0.0, %v1878
        %v1880 = vpop.f32.mrb[0].mxu0
        %1881 = vdwg.mxu0
        %v1882 = vld [vmem:[%s7] sm:$0xf]
        %v1883 = vld [vmem:[%s7 + $0x4] sm:$0xf]
        %v1884 = vld [vmem:[%s7 + $0x8] sm:$0xf]
        %v1885 = vld [vmem:[%s7 + $0xc] sm:$0xf]
        %v1886 = vld [vmem:[%s7 + $0x10] sm:$0xf]
        %v1887 = vld [vmem:[%s7 + $0x14] sm:$0xf]
        %v1888 = vld [vmem:[%s7 + $0x18] sm:$0xf]
        %v1889 = vld [vmem:[%s7 + $0x1c] sm:$0xf]
        %v1890 = vld [vmem:[%s7 + $0x20] sm:$0xf]
        %v1891 = vld [vmem:[%s7 + $0x24] sm:$0xf]
        %v1892 = vld [vmem:[%s7 + $0x28] sm:$0xf]
        %v1893 = vld [vmem:[%s7 + $0x2c] sm:$0xf]
        %v1894 = vld [vmem:[%s7 + $0x30] sm:$0xf]
        %v1895 = vld [vmem:[%s7 + $0x34] sm:$0xf]
        %v1896 = vld [vmem:[%s7 + $0x38] sm:$0xf]
        %v1897 = vld [vmem:[%s7 + $0x3c] sm:$0xf]
        %v1898 = vpack.c.bf16 %v1871, %v1868
        %v1899 = vpack.c.bf16 %v1879, %v1876
        %s1900 = scalar_lea.vmem %s6, 16
        %v1901 = vld [vmem:[%s1900] sm:$0xf]
        %v1902 = vld [vmem:[%s1900 + $0x4] sm:$0xf]
        %v1903 = vld [vmem:[%s1900 + $0x8] sm:$0xf]
        %v1904 = vld [vmem:[%s1900 + $0xc] sm:$0xf]
        %v1909 = vunpack.c.l.b16 %v1901
        %v1910 = vunpack.c.l.b16 %v1902
        %v1911 = vunpack.c.l.b16 %v1903
        %v1912 = vunpack.c.l.b16 %v1904
        %v1913 = vpack.c.b16 %v1910, %v1909
        %v1914 = vpack.c.b16 %v1912, %v1911
        %v1916 = vsel %vm1826, %v1913, 0
        %v1919 = vsel %vm1826, %v1914, 0
        %1921 = vmatprep.subr.bf16.mxu0 0
        %1922 = vmatpush1.bf16.msra.mxu0 %v1814
        %1923 = vmatprep.subr.bf16.mxu0 0
        %1924 = vmatpush1.bf16.msra.mxu0 %v1815
        %1925 = vmatprep.subr.bf16.mxu0 0
        %1926 = vmatpush1.bf16.msra.mxu0 0
        %1927 = vmatprep.subr.bf16.mxu0 0
        %1928 = vmatpush1.bf16.msra.mxu0 0
        %1929 = vmatprep.subr.bf16.mxu0 0
        %1930 = vmatpush1.bf16.msra.mxu0 0
        %1931 = vmatprep.subr.bf16.mxu0 0
        %1932 = vmatpush1.bf16.msra.mxu0 0
        %1933 = vmatprep.subr.bf16.mxu0 0
        %1934 = vmatpush1.bf16.msra.mxu0 0
        %1935 = vmatprep.subr.bf16.mxu0 0
        %1936 = vmatpush1.bf16.msra.mxu0 0
        %1937 = vmatprep.subr.bf16.mxu0 0
        %1938 = vmatpush1.bf16.msra.mxu0 0
        %1939 = vmatprep.subr.bf16.mxu0 0
        %1940 = vmatpush1.bf16.msra.mxu0 0
        %1941 = vmatprep.subr.bf16.mxu0 0
        %1942 = vmatpush1.bf16.msra.mxu0 0
        %1943 = vmatprep.subr.bf16.mxu0 0
        %1944 = vmatpush1.bf16.msra.mxu0 0
        %1945 = vmatprep.subr.bf16.mxu0 0
        %1946 = vmatpush1.bf16.msra.mxu0 0
        %1947 = vmatprep.subr.bf16.mxu0 0
        %1948 = vmatpush1.bf16.msra.mxu0 0
        %1949 = vmatprep.subr.bf16.mxu0 0
        %1950 = vmatpush1.bf16.msra.mxu0 0
        %1951 = vmatprep.subr.bf16.mxu0 0
        %1952 = vmatpush1.bf16.msra.mxu0 0
        %1953 = vmatprep.mubr.bf16.mxu0 0
        %1954 = vmatmul.mubr.bf16.gmra.mrb[0].mxu0 %v1916
        %v1955 = vpop.f32.mrb[0].mxu0
        %v1956 = vadd.f32 0.0, %v1955
        %v1957 = vpop.f32.mrb[0].mxu0
        %v1958 = vpop.f32.mrb[0].mxu0
        %v1959 = vadd.f32 0.0, %v1958
        %v1960 = vpop.f32.mrb[0].mxu0
        %1961 = vmatprep.mubr.bf16.mxu0 0
        %1962 = vmatmul.mubr.bf16.gmra.mrb[0].mxu0 %v1919
        %v1963 = vpop.f32.mrb[0].mxu0
        %v1964 = vadd.f32 0.0, %v1963
        %v1965 = vpop.f32.mrb[0].mxu0
        %v1966 = vpop.f32.mrb[0].mxu0
        %v1967 = vadd.f32 0.0, %v1966
        %v1968 = vpop.f32.mrb[0].mxu0
        %1969 = vdwg.mxu0
        %s1970 = scalar_lea.vmem %s7, 64
        %v1971 = vld [vmem:[%s1970] sm:$0xf]
        %v1972 = vld [vmem:[%s1970 + $0x4] sm:$0xf]
        %v1973 = vld [vmem:[%s1970 + $0x8] sm:$0xf]
        %v1974 = vld [vmem:[%s1970 + $0xc] sm:$0xf]
        %v1975 = vld [vmem:[%s1970 + $0x10] sm:$0xf]
        %v1976 = vld [vmem:[%s1970 + $0x14] sm:$0xf]
        %v1977 = vld [vmem:[%s1970 + $0x18] sm:$0xf]
        %v1978 = vld [vmem:[%s1970 + $0x1c] sm:$0xf]
        %v1979 = vld [vmem:[%s1970 + $0x20] sm:$0xf]
        %v1980 = vld [vmem:[%s1970 + $0x24] sm:$0xf]
        %v1981 = vld [vmem:[%s1970 + $0x28] sm:$0xf]
        %v1982 = vld [vmem:[%s1970 + $0x2c] sm:$0xf]
        %v1983 = vld [vmem:[%s1970 + $0x30] sm:$0xf]
        %v1984 = vld [vmem:[%s1970 + $0x34] sm:$0xf]
        %v1985 = vld [vmem:[%s1970 + $0x38] sm:$0xf]
        %v1986 = vld [vmem:[%s1970 + $0x3c] sm:$0xf]
        %v1987 = vpack.c.bf16 %v1959, %v1956
        %v1988 = vpack.c.bf16 %v1967, %v1964
        %v2005 = vunpack.c.l.b16 %v1971
        %v2006 = vunpack.c.l.b16 %v1972
        %v2007 = vunpack.c.l.b16 %v1973
        %v2008 = vunpack.c.l.b16 %v1974
        %v2009 = vunpack.c.l.b16 %v1975
        %v2010 = vunpack.c.l.b16 %v1976
        %v2011 = vunpack.c.l.b16 %v1977
        %v2012 = vunpack.c.l.b16 %v1978
        %v2013 = vunpack.c.l.b16 %v1979
        %v2014 = vunpack.c.l.b16 %v1980
        %v2015 = vunpack.c.l.b16 %v1981
        %v2016 = vunpack.c.l.b16 %v1982
        %v2017 = vunpack.c.l.b16 %v1983
        %v2018 = vunpack.c.l.b16 %v1984
        %v2019 = vunpack.c.l.b16 %v1985
        %v2020 = vunpack.c.l.b16 %v1986
        %v2021 = vpack.c.b16 %v2006, %v2005
        %v2022 = vpack.c.b16 %v2008, %v2007
        %v2023 = vpack.c.b16 %v2010, %v2009
        %v2024 = vpack.c.b16 %v2012, %v2011
        %v2025 = vpack.c.b16 %v2014, %v2013
        %v2026 = vpack.c.b16 %v2016, %v2015
        %v2027 = vpack.c.b16 %v2018, %v2017
        %v2028 = vpack.c.b16 %v2020, %v2019
        %2037 = vmatprep.subr.bf16.mxu0 0
        %2038 = vmatpush1.bf16.msra.mxu0 %v2021
        %2039 = vmatprep.subr.bf16.mxu0 0
        %2040 = vmatpush1.bf16.msra.mxu0 %v2022
        %2041 = vmatprep.subr.bf16.mxu0 0
        %2042 = vmatpush1.bf16.msra.mxu0 %v2023
        %2043 = vmatprep.subr.bf16.mxu0 0
        %2044 = vmatpush1.bf16.msra.mxu0 %v2024
        %2045 = vmatprep.subr.bf16.mxu0 0
        %2046 = vmatpush1.bf16.msra.mxu0 %v2025
        %2047 = vmatprep.subr.bf16.mxu0 0
        %2048 = vmatpush1.bf16.msra.mxu0 %v2026
        %2049 = vmatprep.subr.bf16.mxu0 0
        %2050 = vmatpush1.bf16.msra.mxu0 %v2027
        %2051 = vmatprep.subr.bf16.mxu0 0
        %2052 = vmatpush1.bf16.msra.mxu0 %v2028
        %2053 = vmatprep.subr.bf16.mxu0 0
        %2054 = vmatpush1.bf16.msra.mxu0 0
        %2055 = vmatprep.subr.bf16.mxu0 0
        %2056 = vmatpush1.bf16.msra.mxu0 0
        %2057 = vmatprep.subr.bf16.mxu0 0
        %2058 = vmatpush1.bf16.msra.mxu0 0
        %2059 = vmatprep.subr.bf16.mxu0 0
        %2060 = vmatpush1.bf16.msra.mxu0 0
        %2061 = vmatprep.subr.bf16.mxu0 0
        %2062 = vmatpush1.bf16.msra.mxu0 0
        %2063 = vmatprep.subr.bf16.mxu0 0
        %2064 = vmatpush1.bf16.msra.mxu0 0
        %2065 = vmatprep.subr.bf16.mxu0 0
        %2066 = vmatpush1.bf16.msra.mxu0 0
        %2067 = vmatprep.subr.bf16.mxu0 0
        %2068 = vmatpush1.bf16.msra.mxu0 0
        %2069 = vmatprep.mubr.bf16.mxu0 0
        %2070 = vmatmul.mubr.bf16.gmra.mrb[0].mxu0 %v1987
        %v2071 = vpop.f32.mrb[0].mxu0
        %v2072 = vadd.f32 0.0, %v2071
        %v2073 = vpop.f32.mrb[0].mxu0
        %v2074 = vpop.f32.mrb[0].mxu0
        %v2075 = vadd.f32 0.0, %v2074
        %v2076 = vpop.f32.mrb[0].mxu0
        %2077 = vmatprep.mubr.bf16.mxu0 0
        %2078 = vmatmul.mubr.bf16.gmra.mrb[0].mxu0 %v1988
        %v2079 = vpop.f32.mrb[0].mxu0
        %v2080 = vadd.f32 0.0, %v2079
        %v2081 = vpop.f32.mrb[0].mxu0
        %v2082 = vpop.f32.mrb[0].mxu0
        %v2083 = vadd.f32 0.0, %v2082
        %v2084 = vpop.f32.mrb[0].mxu0
        %2085 = vdwg.mxu0
        %v2102 = vunpack.c.l.b16 %v1882
        %v2103 = vunpack.c.l.b16 %v1883
        %v2104 = vunpack.c.l.b16 %v1884
        %v2105 = vunpack.c.l.b16 %v1885
        %v2106 = vunpack.c.l.b16 %v1886
        %v2107 = vunpack.c.l.b16 %v1887
        %v2108 = vunpack.c.l.b16 %v1888
        %v2109 = vunpack.c.l.b16 %v1889
        %v2110 = vunpack.c.l.b16 %v1890
        %v2111 = vunpack.c.l.b16 %v1891
        %v2112 = vunpack.c.l.b16 %v1892
        %v2113 = vunpack.c.l.b16 %v1893
        %v2114 = vunpack.c.l.b16 %v1894
        %v2115 = vunpack.c.l.b16 %v1895
        %v2116 = vunpack.c.l.b16 %v1896
        %v2117 = vunpack.c.l.b16 %v1897
        %v2118 = vpack.c.b16 %v2103, %v2102
        %v2119 = vpack.c.b16 %v2105, %v2104
        %v2120 = vpack.c.b16 %v2107, %v2106
        %v2121 = vpack.c.b16 %v2109, %v2108
        %v2122 = vpack.c.b16 %v2111, %v2110
        %v2123 = vpack.c.b16 %v2113, %v2112
        %v2124 = vpack.c.b16 %v2115, %v2114
        %v2125 = vpack.c.b16 %v2117, %v2116
        %2134 = vmatprep.subr.bf16.mxu0 0
        %2135 = vmatpush1.bf16.msra.mxu0 %v2118
        %2136 = vmatprep.subr.bf16.mxu0 0
        %2137 = vmatpush1.bf16.msra.mxu0 %v2119
        %2138 = vmatprep.subr.bf16.mxu0 0
        %2139 = vmatpush1.bf16.msra.mxu0 %v2120
        %2140 = vmatprep.subr.bf16.mxu0 0
        %2141 = vmatpush1.bf16.msra.mxu0 %v2121
        %2142 = vmatprep.subr.bf16.mxu0 0
        %2143 = vmatpush1.bf16.msra.mxu0 %v2122
        %2144 = vmatprep.subr.bf16.mxu0 0
        %2145 = vmatpush1.bf16.msra.mxu0 %v2123
        %2146 = vmatprep.subr.bf16.mxu0 0
        %2147 = vmatpush1.bf16.msra.mxu0 %v2124
        %2148 = vmatprep.subr.bf16.mxu0 0
        %2149 = vmatpush1.bf16.msra.mxu0 %v2125
        %2150 = vmatprep.subr.bf16.mxu0 0
        %2151 = vmatpush1.bf16.msra.mxu0 0
        %2152 = vmatprep.subr.bf16.mxu0 0
        %2153 = vmatpush1.bf16.msra.mxu0 0
        %2154 = vmatprep.subr.bf16.mxu0 0
        %2155 = vmatpush1.bf16.msra.mxu0 0
        %2156 = vmatprep.subr.bf16.mxu0 0
        %2157 = vmatpush1.bf16.msra.mxu0 0
        %2158 = vmatprep.subr.bf16.mxu0 0
        %2159 = vmatpush1.bf16.msra.mxu0 0
        %2160 = vmatprep.subr.bf16.mxu0 0
        %2161 = vmatpush1.bf16.msra.mxu0 0
        %2162 = vmatprep.subr.bf16.mxu0 0
        %2163 = vmatpush1.bf16.msra.mxu0 0
        %2164 = vmatprep.subr.bf16.mxu0 0
        %2165 = vmatpush1.bf16.msra.mxu0 0
        %2166 = vmatprep.mubr.bf16.mxu0 0
        %2167 = vmatmul.mubr.bf16.gmra.mrb[0].mxu0 %v1898
        %v2168 = vpop.f32.mrb[0].mxu0
        %v2169 = vadd.f32 %v2072, %v2168
        %v2170 = vpop.f32.mrb[0].mxu0
        %v2171 = vpop.f32.mrb[0].mxu0
        %v2172 = vadd.f32 %v2075, %v2171
        %v2173 = vpop.f32.mrb[0].mxu0
        %2174 = vmatprep.mubr.bf16.mxu0 0
        %2175 = vmatmul.mubr.bf16.gmra.mrb[0].mxu0 %v1899
        %v2176 = vpop.f32.mrb[0].mxu0
        %v2177 = vadd.f32 %v2080, %v2176
        %v2178 = vpop.f32.mrb[0].mxu0
        %v2179 = vpop.f32.mrb[0].mxu0
        %v2180 = vadd.f32 %v2083, %v2179
        %v2181 = vpop.f32.mrb[0].mxu0
        %2182 = vdwg.mxu0
        %s2183 = scalar_lea.vmem %s6, 32
        %v2184 = vld [vmem:[%s2183] sm:$0xf]
        %v2185 = vld [vmem:[%s2183 + $0x4] sm:$0xf]
        %v2186 = vld [vmem:[%s2183 + $0x8] sm:$0xf]
        %v2187 = vld [vmem:[%s2183 + $0xc] sm:$0xf]
        %v2192 = vunpack.c.l.b16 %v2184
        %v2193 = vunpack.c.l.b16 %v2185
        %v2194 = vunpack.c.l.b16 %v2186
        %v2195 = vunpack.c.l.b16 %v2187
        %v2196 = vpack.c.b16 %v2193, %v2192
        %v2197 = vpack.c.b16 %v2195, %v2194
        %v2199 = vsel %vm1826, %v2196, 0
        %v2202 = vsel %vm1826, %v2197, 0
        %2204 = vmatprep.subr.bf16.mxu0 0
        %2205 = vmatpush1.bf16.msra.mxu0 %v1814
        %2206 = vmatprep.subr.bf16.mxu0 0
        %2207 = vmatpush1.bf16.msra.mxu0 %v1815
        %2208 = vmatprep.subr.bf16.mxu0 0
        %2209 = vmatpush1.bf16.msra.mxu0 0
        %2210 = vmatprep.subr.bf16.mxu0 0
        %2211 = vmatpush1.bf16.msra.mxu0 0
        %2212 = vmatprep.subr.bf16.mxu0 0
        %2213 = vmatpush1.bf16.msra.mxu0 0
        %2214 = vmatprep.subr.bf16.mxu0 0
        %2215 = vmatpush1.bf16.msra.mxu0 0
        %2216 = vmatprep.subr.bf16.mxu0 0
        %2217 = vmatpush1.bf16.msra.mxu0 0
        %2218 = vmatprep.subr.bf16.mxu0 0
        %2219 = vmatpush1.bf16.msra.mxu0 0
        %2220 = vmatprep.subr.bf16.mxu0 0
        %2221 = vmatpush1.bf16.msra.mxu0 0
        %2222 = vmatprep.subr.bf16.mxu0 0
        %2223 = vmatpush1.bf16.msra.mxu0 0
        %2224 = vmatprep.subr.bf16.mxu0 0
        %2225 = vmatpush1.bf16.msra.mxu0 0
        %2226 = vmatprep.subr.bf16.mxu0 0
        %2227 = vmatpush1.bf16.msra.mxu0 0
        %2228 = vmatprep.subr.bf16.mxu0 0
        %2229 = vmatpush1.bf16.msra.mxu0 0
        %2230 = vmatprep.subr.bf16.mxu0 0
        %2231 = vmatpush1.bf16.msra.mxu0 0
        %2232 = vmatprep.subr.bf16.mxu0 0
        %2233 = vmatpush1.bf16.msra.mxu0 0
        %2234 = vmatprep.subr.bf16.mxu0 0
        %2235 = vmatpush1.bf16.msra.mxu0 0
        %2236 = vmatprep.mubr.bf16.mxu0 0
        %2237 = vmatmul.mubr.bf16.gmra.mrb[0].mxu0 %v2199
        %v2238 = vpop.f32.mrb[0].mxu0
        %v2239 = vadd.f32 0.0, %v2238
        %v2240 = vpop.f32.mrb[0].mxu0
        %v2241 = vpop.f32.mrb[0].mxu0
        %v2242 = vadd.f32 0.0, %v2241
        %v2243 = vpop.f32.mrb[0].mxu0
        %2244 = vmatprep.mubr.bf16.mxu0 0
        %2245 = vmatmul.mubr.bf16.gmra.mrb[0].mxu0 %v2202
        %v2246 = vpop.f32.mrb[0].mxu0
        %v2247 = vadd.f32 0.0, %v2246
        %v2248 = vpop.f32.mrb[0].mxu0
        %v2249 = vpop.f32.mrb[0].mxu0
        %v2250 = vadd.f32 0.0, %v2249
        %v2251 = vpop.f32.mrb[0].mxu0
        %2252 = vdwg.mxu0
        %s2253 = scalar_lea.vmem %s7, 128
        %v2254 = vld [vmem:[%s2253] sm:$0xf]
        %v2255 = vld [vmem:[%s2253 + $0x4] sm:$0xf]
        %v2256 = vld [vmem:[%s2253 + $0x8] sm:$0xf]
        %v2257 = vld [vmem:[%s2253 + $0xc] sm:$0xf]
        %v2258 = vld [vmem:[%s2253 + $0x10] sm:$0xf]
        %v2259 = vld [vmem:[%s2253 + $0x14] sm:$0xf]
        %v2260 = vld [vmem:[%s2253 + $0x18] sm:$0xf]
        %v2261 = vld [vmem:[%s2253 + $0x1c] sm:$0xf]
        %v2262 = vld [vmem:[%s2253 + $0x20] sm:$0xf]
        %v2263 = vld [vmem:[%s2253 + $0x24] sm:$0xf]
        %v2264 = vld [vmem:[%s2253 + $0x28] sm:$0xf]
        %v2265 = vld [vmem:[%s2253 + $0x2c] sm:$0xf]
        %v2266 = vld [vmem:[%s2253 + $0x30] sm:$0xf]
        %v2267 = vld [vmem:[%s2253 + $0x34] sm:$0xf]
        %v2268 = vld [vmem:[%s2253 + $0x38] sm:$0xf]
        %v2269 = vld [vmem:[%s2253 + $0x3c] sm:$0xf]
        %v2270 = vpack.c.bf16 %v2242, %v2239
        %v2271 = vpack.c.bf16 %v2250, %v2247
        %v2288 = vunpack.c.l.b16 %v2254
        %v2289 = vunpack.c.l.b16 %v2255
        %v2290 = vunpack.c.l.b16 %v2256
        %v2291 = vunpack.c.l.b16 %v2257
        %v2292 = vunpack.c.l.b16 %v2258
        %v2293 = vunpack.c.l.b16 %v2259
        %v2294 = vunpack.c.l.b16 %v2260
        %v2295 = vunpack.c.l.b16 %v2261
        %v2296 = vunpack.c.l.b16 %v2262
        %v2297 = vunpack.c.l.b16 %v2263
        %v2298 = vunpack.c.l.b16 %v2264
        %v2299 = vunpack.c.l.b16 %v2265
        %v2300 = vunpack.c.l.b16 %v2266
        %v2301 = vunpack.c.l.b16 %v2267
        %v2302 = vunpack.c.l.b16 %v2268
        %v2303 = vunpack.c.l.b16 %v2269
        %v2304 = vpack.c.b16 %v2289, %v2288
        %v2305 = vpack.c.b16 %v2291, %v2290
        %v2306 = vpack.c.b16 %v2293, %v2292
        %v2307 = vpack.c.b16 %v2295, %v2294
        %v2308 = vpack.c.b16 %v2297, %v2296
        %v2309 = vpack.c.b16 %v2299, %v2298
        %v2310 = vpack.c.b16 %v2301, %v2300
        %v2311 = vpack.c.b16 %v2303, %v2302
        %2320 = vmatprep.subr.bf16.mxu0 0
        %2321 = vmatpush1.bf16.msra.mxu0 %v2304
        %2322 = vmatprep.subr.bf16.mxu0 0
        %2323 = vmatpush1.bf16.msra.mxu0 %v2305
        %2324 = vmatprep.subr.bf16.mxu0 0
        %2325 = vmatpush1.bf16.msra.mxu0 %v2306
        %2326 = vmatprep.subr.bf16.mxu0 0
        %2327 = vmatpush1.bf16.msra.mxu0 %v2307
        %2328 = vmatprep.subr.bf16.mxu0 0
        %2329 = vmatpush1.bf16.msra.mxu0 %v2308
        %2330 = vmatprep.subr.bf16.mxu0 0
        %2331 = vmatpush1.bf16.msra.mxu0 %v2309
        %2332 = vmatprep.subr.bf16.mxu0 0
        %2333 = vmatpush1.bf16.msra.mxu0 %v2310
        %2334 = vmatprep.subr.bf16.mxu0 0
        %2335 = vmatpush1.bf16.msra.mxu0 %v2311
        %2336 = vmatprep.subr.bf16.mxu0 0
        %2337 = vmatpush1.bf16.msra.mxu0 0
        %2338 = vmatprep.subr.bf16.mxu0 0
        %2339 = vmatpush1.bf16.msra.mxu0 0
        %2340 = vmatprep.subr.bf16.mxu0 0
        %2341 = vmatpush1.bf16.msra.mxu0 0
        %2342 = vmatprep.subr.bf16.mxu0 0
        %2343 = vmatpush1.bf16.msra.mxu0 0
        %2344 = vmatprep.subr.bf16.mxu0 0
        %2345 = vmatpush1.bf16.msra.mxu0 0
        %2346 = vmatprep.subr.bf16.mxu0 0
        %2347 = vmatpush1.bf16.msra.mxu0 0
        %2348 = vmatprep.subr.bf16.mxu0 0
        %2349 = vmatpush1.bf16.msra.mxu0 0
        %2350 = vmatprep.subr.bf16.mxu0 0
        %2351 = vmatpush1.bf16.msra.mxu0 0
        %2352 = vmatprep.mubr.bf16.mxu0 0
        %2353 = vmatmul.mubr.bf16.gmra.mrb[0].mxu0 %v2270
        %v2354 = vpop.f32.mrb[0].mxu0
        %v2355 = vadd.f32 0.0, %v2354
        %v2356 = vpop.f32.mrb[0].mxu0
        %v2357 = vpop.f32.mrb[0].mxu0
        %v2358 = vadd.f32 0.0, %v2357
        %v2359 = vpop.f32.mrb[0].mxu0
        %2360 = vmatprep.mubr.bf16.mxu0 0
        %2361 = vmatmul.mubr.bf16.gmra.mrb[0].mxu0 %v2271
        %v2362 = vpop.f32.mrb[0].mxu0
        %v2363 = vadd.f32 0.0, %v2362
        %v2364 = vpop.f32.mrb[0].mxu0
        %v2365 = vpop.f32.mrb[0].mxu0
        %v2366 = vadd.f32 0.0, %v2365
        %v2367 = vpop.f32.mrb[0].mxu0
        %2368 = vdwg.mxu0
        %v2369 = vadd.f32 %v2169, %v2355
        %v2370 = vadd.f32 %v2172, %v2358
        %v2371 = vadd.f32 %v2177, %v2363
        %v2372 = vadd.f32 %v2180, %v2366
        %v2373 = vld [vmem:[%s8] sm:$0x1]
        %v2375 = vlaneseq
        %v2376 = vshrl.u32 %v2375, 7
        %v2377 = vsub.s32 0, %v2376
        %v2378 = vrot.slane %v2373, %v2377
        %v2380 = vadd.f32 %v2369, %v2378
        %v2381 = vadd.f32 %v2370, %v2378
        %v2382 = vadd.f32 %v2371, %v2378
        %v2383 = vadd.f32 %v2372, %v2378
        %v2384 = vmax.f32 %v2380, 0.0
        %v2385 = vmax.f32 %v2381, 0.0
        %v2386 = vmax.f32 %v2382, 0.0
        %v2387 = vmax.f32 %v2383, 0.0
        %v2388 = vld [vmem:[%s9] sm:$0xf]
        %v2389 = vld [vmem:[%s9 + $0x4] sm:$0xf]
        %v2390 = vpack.c.bf16 %v2385, %v2384
        %v2391 = vpack.c.bf16 %v2387, %v2386
        %v2394 = vunpack.c.l.b16 %v2388
        %v2395 = vunpack.c.l.b16 %v2389
        %v2396 = vpack.c.b16 %v2395, %v2394
        %v2398 = vsel %vm1826, %v2396, 0
        %2400 = vmatprep.subr.bf16.mxu0 0
        %2401 = vmatpush1.bf16.msra.mxu0 %v2390
        %2402 = vmatprep.subr.bf16.mxu0 0
        %2403 = vmatpush1.bf16.msra.mxu0 %v2391
        %2404 = vmatprep.subr.bf16.mxu0 0
        %2405 = vmatpush1.bf16.msra.mxu0 0
        %2406 = vmatprep.subr.bf16.mxu0 0
        %2407 = vmatpush1.bf16.msra.mxu0 0
        %2408 = vmatprep.subr.bf16.mxu0 0
        %2409 = vmatpush1.bf16.msra.mxu0 0
        %2410 = vmatprep.subr.bf16.mxu0 0
        %2411 = vmatpush1.bf16.msra.mxu0 0
        %2412 = vmatprep.subr.bf16.mxu0 0
        %2413 = vmatpush1.bf16.msra.mxu0 0
        %2414 = vmatprep.subr.bf16.mxu0 0
        %2415 = vmatpush1.bf16.msra.mxu0 0
        %2416 = vmatprep.subr.bf16.mxu0 0
        %2417 = vmatpush1.bf16.msra.mxu0 0
        %2418 = vmatprep.subr.bf16.mxu0 0
        %2419 = vmatpush1.bf16.msra.mxu0 0
        %2420 = vmatprep.subr.bf16.mxu0 0
        %2421 = vmatpush1.bf16.msra.mxu0 0
        %2422 = vmatprep.subr.bf16.mxu0 0
        %2423 = vmatpush1.bf16.msra.mxu0 0
        %2424 = vmatprep.subr.bf16.mxu0 0
        %2425 = vmatpush1.bf16.msra.mxu0 0
        %2426 = vmatprep.subr.bf16.mxu0 0
        %2427 = vmatpush1.bf16.msra.mxu0 0
        %2428 = vmatprep.subr.bf16.mxu0 0
        %2429 = vmatpush1.bf16.msra.mxu0 0
        %2430 = vmatprep.subr.bf16.mxu0 0
        %2431 = vmatpush1.bf16.msra.mxu0 0
        %2432 = vmatprep.mubr.bf16.mxu0 0
        %2433 = vmatmul.mubr.bf16.gmra.mrb[0].mxu0 %v2398
        %v2434 = vpop.f32.mrb[0].mxu0
        %v2435 = vadd.f32 0.0, %v2434
        %v2436 = vpop.f32.mrb[0].mxu0
        %v2437 = vpop.f32.mrb[0].mxu0
        %v2438 = vadd.f32 0.0, %v2437
        %v2439 = vpop.f32.mrb[0].mxu0
        %2440 = vdwg.mxu0
        %s2441 = scalar_lea.vmem %s9, 8
        %v2442 = vld [vmem:[%s2441] sm:$0xf]
        %v2443 = vld [vmem:[%s2441 + $0x4] sm:$0xf]
        %v2446 = vunpack.c.l.b16 %v2442
        %v2447 = vunpack.c.l.b16 %v2443
        %v2448 = vpack.c.b16 %v2447, %v2446
        %v2450 = vsel %vm1826, %v2448, 0
        %2452 = vmatprep.subr.bf16.mxu0 0
        %2453 = vmatpush1.bf16.msra.mxu0 %v2390
        %2454 = vmatprep.subr.bf16.mxu0 0
        %2455 = vmatpush1.bf16.msra.mxu0 %v2391
        %2456 = vmatprep.subr.bf16.mxu0 0
        %2457 = vmatpush1.bf16.msra.mxu0 0
        %2458 = vmatprep.subr.bf16.mxu0 0
        %2459 = vmatpush1.bf16.msra.mxu0 0
        %2460 = vmatprep.subr.bf16.mxu0 0
        %2461 = vmatpush1.bf16.msra.mxu0 0
        %2462 = vmatprep.subr.bf16.mxu0 0
        %2463 = vmatpush1.bf16.msra.mxu0 0
        %2464 = vmatprep.subr.bf16.mxu0 0
        %2465 = vmatpush1.bf16.msra.mxu0 0
        %2466 = vmatprep.subr.bf16.mxu0 0
        %2467 = vmatpush1.bf16.msra.mxu0 0
        %2468 = vmatprep.subr.bf16.mxu0 0
        %2469 = vmatpush1.bf16.msra.mxu0 0
        %2470 = vmatprep.subr.bf16.mxu0 0
        %2471 = vmatpush1.bf16.msra.mxu0 0
        %2472 = vmatprep.subr.bf16.mxu0 0
        %2473 = vmatpush1.bf16.msra.mxu0 0
        %2474 = vmatprep.subr.bf16.mxu0 0
        %2475 = vmatpush1.bf16.msra.mxu0 0
        %2476 = vmatprep.subr.bf16.mxu0 0
        %2477 = vmatpush1.bf16.msra.mxu0 0
        %2478 = vmatprep.subr.bf16.mxu0 0
        %2479 = vmatpush1.bf16.msra.mxu0 0
        %2480 = vmatprep.subr.bf16.mxu0 0
        %2481 = vmatpush1.bf16.msra.mxu0 0
        %2482 = vmatprep.subr.bf16.mxu0 0
        %2483 = vmatpush1.bf16.msra.mxu0 0
        %2484 = vmatprep.mubr.bf16.mxu0 0
        %2485 = vmatmul.mubr.bf16.gmra.mrb[0].mxu0 %v2450
        %v2486 = vpop.f32.mrb[0].mxu0
        %v2487 = vadd.f32 0.0, %v2486
        %v2488 = vpop.f32.mrb[0].mxu0
        %v2489 = vpop.f32.mrb[0].mxu0
        %v2490 = vadd.f32 0.0, %v2489
        %v2491 = vpop.f32.mrb[0].mxu0
        %2492 = vdwg.mxu0
        %v2493 = vmax.f32 %v2435, %v2487
        %v2494 = vmax.f32 %v2438, %v2490
        %v2495 = vld [vmem:[%s10] sm:$0xf]
        %v2496 = vld [vmem:[%s10 + $0x4] sm:$0xf]
        %v2497 = vld [vmem:[%s10 + $0x8] sm:$0xf]
        %v2498 = vld [vmem:[%s10 + $0xc] sm:$0xf]
        %v2499 = vpack.c.bf16 %v2494, %v2493
        %v2504 = vunpack.c.l.b16 %v2495
        %v2505 = vunpack.c.l.b16 %v2496
        %v2506 = vunpack.c.l.b16 %v2497
        %v2507 = vunpack.c.l.b16 %v2498
        %v2508 = vpack.c.b16 %v2505, %v2504
        %v2509 = vpack.c.b16 %v2507, %v2506
        %v2513 = vsel %vm1826, %v2499, 0
        %2515 = vmatprep.subr.bf16.mxu0 0
        %2516 = vmatpush1.bf16.msra.mxu0 %v2508
        %2517 = vmatprep.subr.bf16.mxu0 0
        %2518 = vmatpush1.bf16.msra.mxu0 %v2509
        %2519 = vmatprep.subr.bf16.mxu0 0
        %2520 = vmatpush1.bf16.msra.mxu0 0
        %2521 = vmatprep.subr.bf16.mxu0 0
        %2522 = vmatpush1.bf16.msra.mxu0 0
        %2523 = vmatprep.subr.bf16.mxu0 0
        %2524 = vmatpush1.bf16.msra.mxu0 0
        %2525 = vmatprep.subr.bf16.mxu0 0
        %2526 = vmatpush1.bf16.msra.mxu0 0
        %2527 = vmatprep.subr.bf16.mxu0 0
        %2528 = vmatpush1.bf16.msra.mxu0 0
        %2529 = vmatprep.subr.bf16.mxu0 0
        %2530 = vmatpush1.bf16.msra.mxu0 0
        %2531 = vmatprep.subr.bf16.mxu0 0
        %2532 = vmatpush1.bf16.msra.mxu0 0
        %2533 = vmatprep.subr.bf16.mxu0 0
        %2534 = vmatpush1.bf16.msra.mxu0 0
        %2535 = vmatprep.subr.bf16.mxu0 0
        %2536 = vmatpush1.bf16.msra.mxu0 0
        %2537 = vmatprep.subr.bf16.mxu0 0
        %2538 = vmatpush1.bf16.msra.mxu0 0
        %2539 = vmatprep.subr.bf16.mxu0 0
        %2540 = vmatpush1.bf16.msra.mxu0 0
        %2541 = vmatprep.subr.bf16.mxu0 0
        %2542 = vmatpush1.bf16.msra.mxu0 0
        %2543 = vmatprep.subr.bf16.mxu0 0
        %2544 = vmatpush1.bf16.msra.mxu0 0
        %2545 = vmatprep.subr.bf16.mxu0 0
        %2546 = vmatpush1.bf16.msra.mxu0 0
        %2547 = vmatprep.mubr.bf16.mxu0 0
        %2548 = vmatmul.mubr.bf16.gmra.mrb[0].mxu0 %v2513
        %v2549 = vpop.f32.mrb[0].mxu0
        %v2550 = vadd.f32 0.0, %v2549
        %v2551 = vpop.f32.mrb[0].mxu0
        %v2552 = vpop.f32.mrb[0].mxu0
        %v2553 = vadd.f32 0.0, %v2552
        %v2554 = vpop.f32.mrb[0].mxu0
        %2555 = vdwg.mxu0
        %s2556 = scalar_lea.vmem %s10, 16
        %v2557 = vld [vmem:[%s2556] sm:$0xf]
        %v2558 = vld [vmem:[%s2556 + $0x4] sm:$0xf]
        %v2559 = vld [vmem:[%s2556 + $0x8] sm:$0xf]
        %v2560 = vld [vmem:[%s2556 + $0xc] sm:$0xf]
        %v2565 = vunpack.c.l.b16 %v2557
        %v2566 = vunpack.c.l.b16 %v2558
        %v2567 = vunpack.c.l.b16 %v2559
        %v2568 = vunpack.c.l.b16 %v2560
        %v2569 = vpack.c.b16 %v2566, %v2565
        %v2570 = vpack.c.b16 %v2568, %v2567
        %2573 = vmatprep.subr.bf16.mxu0 0
        %2574 = vmatpush1.bf16.msra.mxu0 %v2569
        %2575 = vmatprep.subr.bf16.mxu0 0
        %2576 = vmatpush1.bf16.msra.mxu0 %v2570
        %2577 = vmatprep.subr.bf16.mxu0 0
        %2578 = vmatpush1.bf16.msra.mxu0 0
        %2579 = vmatprep.subr.bf16.mxu0 0
        %2580 = vmatpush1.bf16.msra.mxu0 0
        %2581 = vmatprep.subr.bf16.mxu0 0
        %2582 = vmatpush1.bf16.msra.mxu0 0
        %2583 = vmatprep.subr.bf16.mxu0 0
        %2584 = vmatpush1.bf16.msra.mxu0 0
        %2585 = vmatprep.subr.bf16.mxu0 0
        %2586 = vmatpush1.bf16.msra.mxu0 0
        %2587 = vmatprep.subr.bf16.mxu0 0
        %2588 = vmatpush1.bf16.msra.mxu0 0
        %2589 = vmatprep.subr.bf16.mxu0 0
        %2590 = vmatpush1.bf16.msra.mxu0 0
        %2591 = vmatprep.subr.bf16.mxu0 0
        %2592 = vmatpush1.bf16.msra.mxu0 0
        %2593 = vmatprep.subr.bf16.mxu0 0
        %2594 = vmatpush1.bf16.msra.mxu0 0
        %2595 = vmatprep.subr.bf16.mxu0 0
        %2596 = vmatpush1.bf16.msra.mxu0 0
        %2597 = vmatprep.subr.bf16.mxu0 0
        %2598 = vmatpush1.bf16.msra.mxu0 0
        %2599 = vmatprep.subr.bf16.mxu0 0
        %2600 = vmatpush1.bf16.msra.mxu0 0
        %2601 = vmatprep.subr.bf16.mxu0 0
        %2602 = vmatpush1.bf16.msra.mxu0 0
        %2603 = vmatprep.subr.bf16.mxu0 0
        %2604 = vmatpush1.bf16.msra.mxu0 0
        %2605 = vmatprep.mubr.bf16.mxu0 0
        %2606 = vmatmul.mubr.bf16.gmra.mrb[0].mxu0 %v2513
        %v2607 = vpop.f32.mrb[0].mxu0
        %v2608 = vadd.f32 0.0, %v2607
        %v2609 = vpop.f32.mrb[0].mxu0
        %v2610 = vpop.f32.mrb[0].mxu0
        %v2611 = vadd.f32 0.0, %v2610
        %v2612 = vpop.f32.mrb[0].mxu0
        %2613 = vdwg.mxu0
        %v2614 = vmax.f32 %v2550, %v2608
        %v2615 = vmax.f32 %v2553, %v2611
        %2616 = vst.msk [vmem:[%s586] sm:$0xff] %vm835, %v2614
        %2617 = vst.msk [vmem:[%s586 + $0x8] sm:$0xff] %vm835, %v2615
        %v2618 = vld [vmem:[%s13] sm:$0xf]
        %v2619 = vld [vmem:[%s13 + $0x4] sm:$0xf]
        %v2620 = vld [vmem:[%s13 + $0x8] sm:$0xf]
        %v2621 = vld [vmem:[%s13 + $0xc] sm:$0xf]
        %v2622 = vld [vmem:[%s11] sm:$0xf]
        %v2623 = vld [vmem:[%s11 + $0x4] sm:$0xf]
        %v2624 = vpack.c.bf16 %v2615, %v2614
        %v2627 = vunpack.c.l.b16 %v2622
        %v2628 = vunpack.c.l.b16 %v2623
        %v2629 = vpack.c.b16 %v2628, %v2627
        %v2632 = vsel %vm835, %v2624, 0
        %2634 = vmatprep.subr.bf16.mxu0 0
        %2635 = vmatpush1.bf16.msra.mxu0 %v2629
        %2636 = vmatprep.subr.bf16.mxu0 0
        %2637 = vmatpush1.bf16.msra.mxu0 0
        %2638 = vmatprep.subr.bf16.mxu0 0
        %2639 = vmatpush1.bf16.msra.mxu0 0
        %2640 = vmatprep.subr.bf16.mxu0 0
        %2641 = vmatpush1.bf16.msra.mxu0 0
        %2642 = vmatprep.subr.bf16.mxu0 0
        %2643 = vmatpush1.bf16.msra.mxu0 0
        %2644 = vmatprep.subr.bf16.mxu0 0
        %2645 = vmatpush1.bf16.msra.mxu0 0
        %2646 = vmatprep.subr.bf16.mxu0 0
        %2647 = vmatpush1.bf16.msra.mxu0 0
        %2648 = vmatprep.subr.bf16.mxu0 0
        %2649 = vmatpush1.bf16.msra.mxu0 0
        %2650 = vmatprep.subr.bf16.mxu0 0
        %2651 = vmatpush1.bf16.msra.mxu0 0
        %2652 = vmatprep.subr.bf16.mxu0 0
        %2653 = vmatpush1.bf16.msra.mxu0 0
        %2654 = vmatprep.subr.bf16.mxu0 0
        %2655 = vmatpush1.bf16.msra.mxu0 0
        %2656 = vmatprep.subr.bf16.mxu0 0
        %2657 = vmatpush1.bf16.msra.mxu0 0
        %2658 = vmatprep.subr.bf16.mxu0 0
        %2659 = vmatpush1.bf16.msra.mxu0 0
        %2660 = vmatprep.subr.bf16.mxu0 0
        %2661 = vmatpush1.bf16.msra.mxu0 0
        %2662 = vmatprep.subr.bf16.mxu0 0
        %2663 = vmatpush1.bf16.msra.mxu0 0
        %2664 = vmatprep.subr.bf16.mxu0 0
        %2665 = vmatpush1.bf16.msra.mxu0 0
        %2666 = vmatprep.mubr.bf16.mxu0 0
        %2667 = vmatmul.mubr.bf16.gmra.mrb[0].mxu0 %v2632
        %v2668 = vpop.f32.mrb[0].mxu0
        %v2669 = vadd.f32 0.0, %v2668
        %v2670 = vpop.f32.mrb[0].mxu0
        %v2671 = vpop.f32.mrb[0].mxu0
        %v2672 = vadd.f32 0.0, %v2671
        %v2673 = vpop.f32.mrb[0].mxu0
        %2674 = vdwg.mxu0
        %v2675 = vpack.c.bf16 %v2672, %v2669
        %s2676 = scalar_lea.vmem %s13, 16
        %v2677 = vld [vmem:[%s2676] sm:$0xf]
        %v2678 = vld [vmem:[%s2676 + $0x4] sm:$0xf]
        %v2679 = vld [vmem:[%s2676 + $0x8] sm:$0xf]
        %v2680 = vld [vmem:[%s2676 + $0xc] sm:$0xf]
        %s2681 = scalar_lea.vmem %s11, 8
        %v2682 = vld [vmem:[%s2681] sm:$0xf]
        %v2683 = vld [vmem:[%s2681 + $0x4] sm:$0xf]
        %v2686 = vunpack.c.l.b16 %v2682
        %v2687 = vunpack.c.l.b16 %v2683
        %v2688 = vpack.c.b16 %v2687, %v2686
        %2690 = vmatprep.subr.bf16.mxu0 0
        %2691 = vmatpush1.bf16.msra.mxu0 %v2688
        %2692 = vmatprep.subr.bf16.mxu0 0
        %2693 = vmatpush1.bf16.msra.mxu0 0
        %2694 = vmatprep.subr.bf16.mxu0 0
        %2695 = vmatpush1.bf16.msra.mxu0 0
        %2696 = vmatprep.subr.bf16.mxu0 0
        %2697 = vmatpush1.bf16.msra.mxu0 0
        %2698 = vmatprep.subr.bf16.mxu0 0
        %2699 = vmatpush1.bf16.msra.mxu0 0
        %2700 = vmatprep.subr.bf16.mxu0 0
        %2701 = vmatpush1.bf16.msra.mxu0 0
        %2702 = vmatprep.subr.bf16.mxu0 0
        %2703 = vmatpush1.bf16.msra.mxu0 0
        %2704 = vmatprep.subr.bf16.mxu0 0
        %2705 = vmatpush1.bf16.msra.mxu0 0
        %2706 = vmatprep.subr.bf16.mxu0 0
        %2707 = vmatpush1.bf16.msra.mxu0 0
        %2708 = vmatprep.subr.bf16.mxu0 0
        %2709 = vmatpush1.bf16.msra.mxu0 0
        %2710 = vmatprep.subr.bf16.mxu0 0
        %2711 = vmatpush1.bf16.msra.mxu0 0
        %2712 = vmatprep.subr.bf16.mxu0 0
        %2713 = vmatpush1.bf16.msra.mxu0 0
        %2714 = vmatprep.subr.bf16.mxu0 0
        %2715 = vmatpush1.bf16.msra.mxu0 0
        %2716 = vmatprep.subr.bf16.mxu0 0
        %2717 = vmatpush1.bf16.msra.mxu0 0
        %2718 = vmatprep.subr.bf16.mxu0 0
        %2719 = vmatpush1.bf16.msra.mxu0 0
        %2720 = vmatprep.subr.bf16.mxu0 0
        %2721 = vmatpush1.bf16.msra.mxu0 0
        %2722 = vmatprep.mubr.bf16.mxu0 0
        %2723 = vmatmul.mubr.bf16.gmra.mrb[0].mxu0 %v2632
        %v2724 = vpop.f32.mrb[0].mxu0
        %v2725 = vadd.f32 0.0, %v2724
        %v2726 = vpop.f32.mrb[0].mxu0
        %v2727 = vpop.f32.mrb[0].mxu0
        %v2728 = vadd.f32 0.0, %v2727
        %v2729 = vpop.f32.mrb[0].mxu0
        %2730 = vdwg.mxu0
        %v2731 = vpack.c.bf16 %v2728, %v2725
        %v2736 = vunpack.c.l.b16 %v2677
        %v2737 = vunpack.c.l.b16 %v2678
        %v2738 = vunpack.c.l.b16 %v2679
        %v2739 = vunpack.c.l.b16 %v2680
        %v2740 = vpack.c.b16 %v2737, %v2736
        %v2741 = vpack.c.b16 %v2739, %v2738
        %v2743 = vsel %vm835, %v2740, 0
        %v2746 = vsel %vm835, %v2741, 0
        %2748 = vmatprep.subr.bf16.mxu0 0
        %2749 = vmatpush1.bf16.msra.mxu0 %v2731
        %2750 = vmatprep.subr.bf16.mxu0 0
        %2751 = vmatpush1.bf16.msra.mxu0 0
        %2752 = vmatprep.subr.bf16.mxu0 0
        %2753 = vmatpush1.bf16.msra.mxu0 0
        %2754 = vmatprep.subr.bf16.mxu0 0
        %2755 = vmatpush1.bf16.msra.mxu0 0
        %2756 = vmatprep.subr.bf16.mxu0 0
        %2757 = vmatpush1.bf16.msra.mxu0 0
        %2758 = vmatprep.subr.bf16.mxu0 0
        %2759 = vmatpush1.bf16.msra.mxu0 0
        %2760 = vmatprep.subr.bf16.mxu0 0
        %2761 = vmatpush1.bf16.msra.mxu0 0
        %2762 = vmatprep.subr.bf16.mxu0 0
        %2763 = vmatpush1.bf16.msra.mxu0 0
        %2764 = vmatprep.subr.bf16.mxu0 0
        %2765 = vmatpush1.bf16.msra.mxu0 0
        %2766 = vmatprep.subr.bf16.mxu0 0
        %2767 = vmatpush1.bf16.msra.mxu0 0
        %2768 = vmatprep.subr.bf16.mxu0 0
        %2769 = vmatpush1.bf16.msra.mxu0 0
        %2770 = vmatprep.subr.bf16.mxu0 0
        %2771 = vmatpush1.bf16.msra.mxu0 0
        %2772 = vmatprep.subr.bf16.mxu0 0
        %2773 = vmatpush1.bf16.msra.mxu0 0
        %2774 = vmatprep.subr.bf16.mxu0 0
        %2775 = vmatpush1.bf16.msra.mxu0 0
        %2776 = vmatprep.subr.bf16.mxu0 0
        %2777 = vmatpush1.bf16.msra.mxu0 0
        %2778 = vmatprep.subr.bf16.mxu0 0
        %2779 = vmatpush1.bf16.msra.mxu0 0
        %2780 = vmatprep.mubr.bf16.mxu0 0
        %2781 = vmatmul.mubr.bf16.gmra.mrb[0].mxu0 %v2743
        %v2782 = vpop.f32.mrb[0].mxu0
        %v2783 = vadd.f32 0.0, %v2782
        %v2784 = vpop.f32.mrb[0].mxu0
        %v2785 = vpop.f32.mrb[0].mxu0
        %v2786 = vadd.f32 0.0, %v2785
        %v2787 = vpop.f32.mrb[0].mxu0
        %2788 = vmatprep.mubr.bf16.mxu0 0
        %2789 = vmatmul.mubr.bf16.gmra.mrb[0].mxu0 %v2746
        %v2790 = vpop.f32.mrb[0].mxu0
        %v2791 = vadd.f32 0.0, %v2790
        %v2792 = vpop.f32.mrb[0].mxu0
        %v2793 = vpop.f32.mrb[0].mxu0
        %v2794 = vadd.f32 0.0, %v2793
        %v2795 = vpop.f32.mrb[0].mxu0
        %2796 = vdwg.mxu0
        %v2801 = vunpack.c.l.b16 %v2618
        %v2802 = vunpack.c.l.b16 %v2619
        %v2803 = vunpack.c.l.b16 %v2620
        %v2804 = vunpack.c.l.b16 %v2621
        %v2805 = vpack.c.b16 %v2802, %v2801
        %v2806 = vpack.c.b16 %v2804, %v2803
        %v2808 = vsel %vm835, %v2805, 0
        %v2811 = vsel %vm835, %v2806, 0
        %2813 = vmatprep.subr.bf16.mxu0 0
        %2814 = vmatpush1.bf16.msra.mxu0 %v2675
        %2815 = vmatprep.subr.bf16.mxu0 0
        %2816 = vmatpush1.bf16.msra.mxu0 0
        %2817 = vmatprep.subr.bf16.mxu0 0
        %2818 = vmatpush1.bf16.msra.mxu0 0
        %2819 = vmatprep.subr.bf16.mxu0 0
        %2820 = vmatpush1.bf16.msra.mxu0 0
        %2821 = vmatprep.subr.bf16.mxu0 0
        %2822 = vmatpush1.bf16.msra.mxu0 0
        %2823 = vmatprep.subr.bf16.mxu0 0
        %2824 = vmatpush1.bf16.msra.mxu0 0
        %2825 = vmatprep.subr.bf16.mxu0 0
        %2826 = vmatpush1.bf16.msra.mxu0 0
        %2827 = vmatprep.subr.bf16.mxu0 0
        %2828 = vmatpush1.bf16.msra.mxu0 0
        %2829 = vmatprep.subr.bf16.mxu0 0
        %2830 = vmatpush1.bf16.msra.mxu0 0
        %2831 = vmatprep.subr.bf16.mxu0 0
        %2832 = vmatpush1.bf16.msra.mxu0 0
        %2833 = vmatprep.subr.bf16.mxu0 0
        %2834 = vmatpush1.bf16.msra.mxu0 0
        %2835 = vmatprep.subr.bf16.mxu0 0
        %2836 = vmatpush1.bf16.msra.mxu0 0
        %2837 = vmatprep.subr.bf16.mxu0 0
        %2838 = vmatpush1.bf16.msra.mxu0 0
        %2839 = vmatprep.subr.bf16.mxu0 0
        %2840 = vmatpush1.bf16.msra.mxu0 0
        %2841 = vmatprep.subr.bf16.mxu0 0
        %2842 = vmatpush1.bf16.msra.mxu0 0
        %2843 = vmatprep.subr.bf16.mxu0 0
        %2844 = vmatpush1.bf16.msra.mxu0 0
        %2845 = vmatprep.mubr.bf16.mxu0 0
        %2846 = vmatmul.mubr.bf16.gmra.mrb[0].mxu0 %v2808
        %v2847 = vpop.f32.mrb[0].mxu0
        %v2848 = vadd.f32 %v2783, %v2847
        %v2849 = vpop.f32.mrb[0].mxu0
        %v2850 = vpop.f32.mrb[0].mxu0
        %v2851 = vadd.f32 %v2786, %v2850
        %v2852 = vpop.f32.mrb[0].mxu0
        %2853 = vmatprep.mubr.bf16.mxu0 0
        %2854 = vmatmul.mubr.bf16.gmra.mrb[0].mxu0 %v2811
        %v2855 = vpop.f32.mrb[0].mxu0
        %v2856 = vadd.f32 %v2791, %v2855
        %v2857 = vpop.f32.mrb[0].mxu0
        %v2858 = vpop.f32.mrb[0].mxu0
        %v2859 = vadd.f32 %v2794, %v2858
        %v2860 = vpop.f32.mrb[0].mxu0
        %2861 = vdwg.mxu0
        %v2862 = vld [vmem:[%s12] sm:$0x1]
        %v2864 = vlaneseq
        %v2865 = vshrl.u32 %v2864, 7
        %v2866 = vsub.s32 0, %v2865
        %v2867 = vrot.slane %v2862, %v2866
        %v2869 = vadd.f32 %v2848, %v2867
        %v2870 = vadd.f32 %v2851, %v2867
        %v2871 = vadd.f32 %v2856, %v2867
        %v2872 = vadd.f32 %v2859, %v2867
        %v2873 = vmax.f32 %v2869, 0.0
        %v2874 = vmax.f32 %v2870, 0.0
        %v2875 = vmax.f32 %v2871, 0.0
        %v2876 = vmax.f32 %v2872, 0.0
        %v2877 = vld [vmem:[%s16] sm:$0xf]
        %v2878 = vld [vmem:[%s16 + $0x4] sm:$0xf]
        %v2879 = vld [vmem:[%s16 + $0x8] sm:$0xf]
        %v2880 = vld [vmem:[%s16 + $0xc] sm:$0xf]
        %v2881 = vld [vmem:[%s16 + $0x10] sm:$0xf]
        %v2882 = vld [vmem:[%s16 + $0x14] sm:$0xf]
        %v2883 = vld [vmem:[%s16 + $0x18] sm:$0xf]
        %v2884 = vld [vmem:[%s16 + $0x1c] sm:$0xf]
        %v2885 = vld [vmem:[%s14] sm:$0xf]
        %v2886 = vld [vmem:[%s14 + $0x4] sm:$0xf]
        %v2887 = vld [vmem:[%s14 + $0x8] sm:$0xf]
        %v2888 = vld [vmem:[%s14 + $0xc] sm:$0xf]
        %v2889 = vld [vmem:[%s14 + $0x10] sm:$0xf]
        %v2890 = vld [vmem:[%s14 + $0x14] sm:$0xf]
        %v2891 = vld [vmem:[%s14 + $0x18] sm:$0xf]
        %v2892 = vld [vmem:[%s14 + $0x1c] sm:$0xf]
        %v2893 = vld [vmem:[%s14 + $0x20] sm:$0xf]
        %v2894 = vld [vmem:[%s14 + $0x24] sm:$0xf]
        %v2895 = vld [vmem:[%s14 + $0x28] sm:$0xf]
        %v2896 = vld [vmem:[%s14 + $0x2c] sm:$0xf]
        %v2897 = vld [vmem:[%s14 + $0x30] sm:$0xf]
        %v2898 = vld [vmem:[%s14 + $0x34] sm:$0xf]
        %v2899 = vld [vmem:[%s14 + $0x38] sm:$0xf]
        %v2900 = vld [vmem:[%s14 + $0x3c] sm:$0xf]
        %v2901 = vpack.c.bf16 %v2874, %v2873
        %v2902 = vpack.c.bf16 %v2876, %v2875
        %v2919 = vunpack.c.l.b16 %v2885
        %v2920 = vunpack.c.l.b16 %v2886
        %v2921 = vunpack.c.l.b16 %v2887
        %v2922 = vunpack.c.l.b16 %v2888
        %v2923 = vunpack.c.l.b16 %v2889
        %v2924 = vunpack.c.l.b16 %v2890
        %v2925 = vunpack.c.l.b16 %v2891
        %v2926 = vunpack.c.l.b16 %v2892
        %v2927 = vunpack.c.l.b16 %v2893
        %v2928 = vunpack.c.l.b16 %v2894
        %v2929 = vunpack.c.l.b16 %v2895
        %v2930 = vunpack.c.l.b16 %v2896
        %v2931 = vunpack.c.l.b16 %v2897
        %v2932 = vunpack.c.l.b16 %v2898
        %v2933 = vunpack.c.l.b16 %v2899
        %v2934 = vunpack.c.l.b16 %v2900
        %v2935 = vpack.c.b16 %v2920, %v2919
        %v2936 = vpack.c.b16 %v2922, %v2921
        %v2937 = vpack.c.b16 %v2924, %v2923
        %v2938 = vpack.c.b16 %v2926, %v2925
        %v2939 = vpack.c.b16 %v2928, %v2927
        %v2940 = vpack.c.b16 %v2930, %v2929
        %v2941 = vpack.c.b16 %v2932, %v2931
        %v2942 = vpack.c.b16 %v2934, %v2933
        %2951 = vmatprep.subr.bf16.mxu0 0
        %2952 = vmatpush1.bf16.msra.mxu0 %v2935
        %2953 = vmatprep.subr.bf16.mxu0 0
        %2954 = vmatpush1.bf16.msra.mxu0 %v2936
        %2955 = vmatprep.subr.bf16.mxu0 0
        %2956 = vmatpush1.bf16.msra.mxu0 %v2937
        %2957 = vmatprep.subr.bf16.mxu0 0
        %2958 = vmatpush1.bf16.msra.mxu0 %v2938
        %2959 = vmatprep.subr.bf16.mxu0 0
        %2960 = vmatpush1.bf16.msra.mxu0 %v2939
        %2961 = vmatprep.subr.bf16.mxu0 0
        %2962 = vmatpush1.bf16.msra.mxu0 %v2940
        %2963 = vmatprep.subr.bf16.mxu0 0
        %2964 = vmatpush1.bf16.msra.mxu0 %v2941
        %2965 = vmatprep.subr.bf16.mxu0 0
        %2966 = vmatpush1.bf16.msra.mxu0 %v2942
        %2967 = vmatprep.subr.bf16.mxu0 0
        %2968 = vmatpush1.bf16.msra.mxu0 0
        %2969 = vmatprep.subr.bf16.mxu0 0
        %2970 = vmatpush1.bf16.msra.mxu0 0
        %2971 = vmatprep.subr.bf16.mxu0 0
        %2972 = vmatpush1.bf16.msra.mxu0 0
        %2973 = vmatprep.subr.bf16.mxu0 0
        %2974 = vmatpush1.bf16.msra.mxu0 0
        %2975 = vmatprep.subr.bf16.mxu0 0
        %2976 = vmatpush1.bf16.msra.mxu0 0
        %2977 = vmatprep.subr.bf16.mxu0 0
        %2978 = vmatpush1.bf16.msra.mxu0 0
        %2979 = vmatprep.subr.bf16.mxu0 0
        %2980 = vmatpush1.bf16.msra.mxu0 0
        %2981 = vmatprep.subr.bf16.mxu0 0
        %2982 = vmatpush1.bf16.msra.mxu0 0
        %2983 = vmatprep.mubr.bf16.mxu0 0
        %2984 = vmatmul.mubr.bf16.gmra.mrb[0].mxu0 %v2901
        %v2985 = vpop.f32.mrb[0].mxu0
        %v2986 = vadd.f32 0.0, %v2985
        %v2987 = vpop.f32.mrb[0].mxu0
        %v2988 = vpop.f32.mrb[0].mxu0
        %v2989 = vadd.f32 0.0, %v2988
        %v2990 = vpop.f32.mrb[0].mxu0
        %2991 = vmatprep.mubr.bf16.mxu0 0
        %2992 = vmatmul.mubr.bf16.gmra.mrb[0].mxu0 %v2902
        %v2993 = vpop.f32.mrb[0].mxu0
        %v2994 = vadd.f32 0.0, %v2993
        %v2995 = vpop.f32.mrb[0].mxu0
        %v2996 = vpop.f32.mrb[0].mxu0
        %v2997 = vadd.f32 0.0, %v2996
        %v2998 = vpop.f32.mrb[0].mxu0
        %2999 = vdwg.mxu0
        %v3000 = vpack.c.bf16 %v2989, %v2986
        %v3001 = vpack.c.bf16 %v2997, %v2994
        %s3002 = scalar_lea.vmem %s16, 32
        %v3003 = vld [vmem:[%s3002] sm:$0xf]
        %v3004 = vld [vmem:[%s3002 + $0x4] sm:$0xf]
        %v3005 = vld [vmem:[%s3002 + $0x8] sm:$0xf]
        %v3006 = vld [vmem:[%s3002 + $0xc] sm:$0xf]
        %v3007 = vld [vmem:[%s3002 + $0x10] sm:$0xf]
        %v3008 = vld [vmem:[%s3002 + $0x14] sm:$0xf]
        %v3009 = vld [vmem:[%s3002 + $0x18] sm:$0xf]
        %v3010 = vld [vmem:[%s3002 + $0x1c] sm:$0xf]
        %s3011 = scalar_lea.vmem %s14, 64
        %v3012 = vld [vmem:[%s3011] sm:$0xf]
        %v3013 = vld [vmem:[%s3011 + $0x4] sm:$0xf]
        %v3014 = vld [vmem:[%s3011 + $0x8] sm:$0xf]
        %v3015 = vld [vmem:[%s3011 + $0xc] sm:$0xf]
        %v3016 = vld [vmem:[%s3011 + $0x10] sm:$0xf]
        %v3017 = vld [vmem:[%s3011 + $0x14] sm:$0xf]
        %v3018 = vld [vmem:[%s3011 + $0x18] sm:$0xf]
        %v3019 = vld [vmem:[%s3011 + $0x1c] sm:$0xf]
        %v3020 = vld [vmem:[%s3011 + $0x20] sm:$0xf]
        %v3021 = vld [vmem:[%s3011 + $0x24] sm:$0xf]
        %v3022 = vld [vmem:[%s3011 + $0x28] sm:$0xf]
        %v3023 = vld [vmem:[%s3011 + $0x2c] sm:$0xf]
        %v3024 = vld [vmem:[%s3011 + $0x30] sm:$0xf]
        %v3025 = vld [vmem:[%s3011 + $0x34] sm:$0xf]
        %v3026 = vld [vmem:[%s3011 + $0x38] sm:$0xf]
        %v3027 = vld [vmem:[%s3011 + $0x3c] sm:$0xf]
        %v3044 = vunpack.c.l.b16 %v3012
        %v3045 = vunpack.c.l.b16 %v3013
        %v3046 = vunpack.c.l.b16 %v3014
        %v3047 = vunpack.c.l.b16 %v3015
        %v3048 = vunpack.c.l.b16 %v3016
        %v3049 = vunpack.c.l.b16 %v3017
        %v3050 = vunpack.c.l.b16 %v3018
        %v3051 = vunpack.c.l.b16 %v3019
        %v3052 = vunpack.c.l.b16 %v3020
        %v3053 = vunpack.c.l.b16 %v3021
        %v3054 = vunpack.c.l.b16 %v3022
        %v3055 = vunpack.c.l.b16 %v3023
        %v3056 = vunpack.c.l.b16 %v3024
        %v3057 = vunpack.c.l.b16 %v3025
        %v3058 = vunpack.c.l.b16 %v3026
        %v3059 = vunpack.c.l.b16 %v3027
        %v3060 = vpack.c.b16 %v3045, %v3044
        %v3061 = vpack.c.b16 %v3047, %v3046
        %v3062 = vpack.c.b16 %v3049, %v3048
        %v3063 = vpack.c.b16 %v3051, %v3050
        %v3064 = vpack.c.b16 %v3053, %v3052
        %v3065 = vpack.c.b16 %v3055, %v3054
        %v3066 = vpack.c.b16 %v3057, %v3056
        %v3067 = vpack.c.b16 %v3059, %v3058
        %3076 = vmatprep.subr.bf16.mxu0 0
        %3077 = vmatpush1.bf16.msra.mxu0 %v3060
        %3078 = vmatprep.subr.bf16.mxu0 0
        %3079 = vmatpush1.bf16.msra.mxu0 %v3061
        %3080 = vmatprep.subr.bf16.mxu0 0
        %3081 = vmatpush1.bf16.msra.mxu0 %v3062
        %3082 = vmatprep.subr.bf16.mxu0 0
        %3083 = vmatpush1.bf16.msra.mxu0 %v3063
        %3084 = vmatprep.subr.bf16.mxu0 0
        %3085 = vmatpush1.bf16.msra.mxu0 %v3064
        %3086 = vmatprep.subr.bf16.mxu0 0
        %3087 = vmatpush1.bf16.msra.mxu0 %v3065
        %3088 = vmatprep.subr.bf16.mxu0 0
        %3089 = vmatpush1.bf16.msra.mxu0 %v3066
        %3090 = vmatprep.subr.bf16.mxu0 0
        %3091 = vmatpush1.bf16.msra.mxu0 %v3067
        %3092 = vmatprep.subr.bf16.mxu0 0
        %3093 = vmatpush1.bf16.msra.mxu0 0
        %3094 = vmatprep.subr.bf16.mxu0 0
        %3095 = vmatpush1.bf16.msra.mxu0 0
        %3096 = vmatprep.subr.bf16.mxu0 0
        %3097 = vmatpush1.bf16.msra.mxu0 0
        %3098 = vmatprep.subr.bf16.mxu0 0
        %3099 = vmatpush1.bf16.msra.mxu0 0
        %3100 = vmatprep.subr.bf16.mxu0 0
        %3101 = vmatpush1.bf16.msra.mxu0 0
        %3102 = vmatprep.subr.bf16.mxu0 0
        %3103 = vmatpush1.bf16.msra.mxu0 0
        %3104 = vmatprep.subr.bf16.mxu0 0
        %3105 = vmatpush1.bf16.msra.mxu0 0
        %3106 = vmatprep.subr.bf16.mxu0 0
        %3107 = vmatpush1.bf16.msra.mxu0 0
        %3108 = vmatprep.mubr.bf16.mxu0 0
        %3109 = vmatmul.mubr.bf16.gmra.mrb[0].mxu0 %v2901
        %v3110 = vpop.f32.mrb[0].mxu0
        %v3111 = vadd.f32 0.0, %v3110
        %v3112 = vpop.f32.mrb[0].mxu0
        %v3113 = vpop.f32.mrb[0].mxu0
        %v3114 = vadd.f32 0.0, %v3113
        %v3115 = vpop.f32.mrb[0].mxu0
        %3116 = vmatprep.mubr.bf16.mxu0 0
        %3117 = vmatmul.mubr.bf16.gmra.mrb[0].mxu0 %v2902
        %v3118 = vpop.f32.mrb[0].mxu0
        %v3119 = vadd.f32 0.0, %v3118
        %v3120 = vpop.f32.mrb[0].mxu0
        %v3121 = vpop.f32.mrb[0].mxu0
        %v3122 = vadd.f32 0.0, %v3121
        %v3123 = vpop.f32.mrb[0].mxu0
        %3124 = vdwg.mxu0
        %v3125 = vpack.c.bf16 %v3114, %v3111
        %v3126 = vpack.c.bf16 %v3122, %v3119
        %v3135 = vunpack.c.l.b16 %v3003
        %v3136 = vunpack.c.l.b16 %v3004
        %v3137 = vunpack.c.l.b16 %v3005
        %v3138 = vunpack.c.l.b16 %v3006
        %v3139 = vunpack.c.l.b16 %v3007
        %v3140 = vunpack.c.l.b16 %v3008
        %v3141 = vunpack.c.l.b16 %v3009
        %v3142 = vunpack.c.l.b16 %v3010
        %v3143 = vpack.c.b16 %v3136, %v3135
        %v3144 = vpack.c.b16 %v3138, %v3137
        %v3145 = vpack.c.b16 %v3140, %v3139
        %v3146 = vpack.c.b16 %v3142, %v3141
        %v3148 = vsel %vm1826, %v3143, 0
        %v3151 = vsel %vm1826, %v3144, 0
        %v3154 = vsel %vm1826, %v3145, 0
        %v3157 = vsel %vm1826, %v3146, 0
        %3159 = vmatprep.subr.bf16.mxu0 0
        %3160 = vmatpush1.bf16.msra.mxu0 %v3125
        %3161 = vmatprep.subr.bf16.mxu0 0
        %3162 = vmatpush1.bf16.msra.mxu0 %v3126
        %3163 = vmatprep.subr.bf16.mxu0 0
        %3164 = vmatpush1.bf16.msra.mxu0 0
        %3165 = vmatprep.subr.bf16.mxu0 0
        %3166 = vmatpush1.bf16.msra.mxu0 0
        %3167 = vmatprep.subr.bf16.mxu0 0
        %3168 = vmatpush1.bf16.msra.mxu0 0
        %3169 = vmatprep.subr.bf16.mxu0 0
        %3170 = vmatpush1.bf16.msra.mxu0 0
        %3171 = vmatprep.subr.bf16.mxu0 0
        %3172 = vmatpush1.bf16.msra.mxu0 0
        %3173 = vmatprep.subr.bf16.mxu0 0
        %3174 = vmatpush1.bf16.msra.mxu0 0
        %3175 = vmatprep.subr.bf16.mxu0 0
        %3176 = vmatpush1.bf16.msra.mxu0 0
        %3177 = vmatprep.subr.bf16.mxu0 0
        %3178 = vmatpush1.bf16.msra.mxu0 0
        %3179 = vmatprep.subr.bf16.mxu0 0
        %3180 = vmatpush1.bf16.msra.mxu0 0
        %3181 = vmatprep.subr.bf16.mxu0 0
        %3182 = vmatpush1.bf16.msra.mxu0 0
        %3183 = vmatprep.subr.bf16.mxu0 0
        %3184 = vmatpush1.bf16.msra.mxu0 0
        %3185 = vmatprep.subr.bf16.mxu0 0
        %3186 = vmatpush1.bf16.msra.mxu0 0
        %3187 = vmatprep.subr.bf16.mxu0 0
        %3188 = vmatpush1.bf16.msra.mxu0 0
        %3189 = vmatprep.subr.bf16.mxu0 0
        %3190 = vmatpush1.bf16.msra.mxu0 0
        %3191 = vmatprep.mubr.bf16.mxu0 0
        %3192 = vmatmul.mubr.bf16.gmra.mrb[0].mxu0 %v3148
        %v3193 = vpop.f32.mrb[0].mxu0
        %v3194 = vadd.f32 0.0, %v3193
        %v3195 = vpop.f32.mrb[0].mxu0
        %v3196 = vpop.f32.mrb[0].mxu0
        %v3197 = vadd.f32 0.0, %v3196
        %v3198 = vpop.f32.mrb[0].mxu0
        %3199 = vmatprep.mubr.bf16.mxu0 0
        %3200 = vmatmul.mubr.bf16.gmra.mrb[0].mxu0 %v3151
        %v3201 = vpop.f32.mrb[0].mxu0
        %v3202 = vadd.f32 0.0, %v3201
        %v3203 = vpop.f32.mrb[0].mxu0
        %v3204 = vpop.f32.mrb[0].mxu0
        %v3205 = vadd.f32 0.0, %v3204
        %v3206 = vpop.f32.mrb[0].mxu0
        %3207 = vmatprep.mubr.bf16.mxu0 0
        %3208 = vmatmul.mubr.bf16.gmra.mrb[0].mxu0 %v3154
        %v3209 = vpop.f32.mrb[0].mxu0
        %v3210 = vadd.f32 0.0, %v3209
        %v3211 = vpop.f32.mrb[0].mxu0
        %v3212 = vpop.f32.mrb[0].mxu0
        %v3213 = vadd.f32 0.0, %v3212
        %v3214 = vpop.f32.mrb[0].mxu0
        %3215 = vmatprep.mubr.bf16.mxu0 0
        %3216 = vmatmul.mubr.bf16.gmra.mrb[0].mxu0 %v3157
        %v3217 = vpop.f32.mrb[0].mxu0
        %v3218 = vadd.f32 0.0, %v3217
        %v3219 = vpop.f32.mrb[0].mxu0
        %v3220 = vpop.f32.mrb[0].mxu0
        %v3221 = vadd.f32 0.0, %v3220
        %v3222 = vpop.f32.mrb[0].mxu0
        %3223 = vdwg.mxu0
        %v3232 = vunpack.c.l.b16 %v2877
        %v3233 = vunpack.c.l.b16 %v2878
        %v3234 = vunpack.c.l.b16 %v2879
        %v3235 = vunpack.c.l.b16 %v2880
        %v3236 = vunpack.c.l.b16 %v2881
        %v3237 = vunpack.c.l.b16 %v2882
        %v3238 = vunpack.c.l.b16 %v2883
        %v3239 = vunpack.c.l.b16 %v2884
        %v3240 = vpack.c.b16 %v3233, %v3232
        %v3241 = vpack.c.b16 %v3235, %v3234
        %v3242 = vpack.c.b16 %v3237, %v3236
        %v3243 = vpack.c.b16 %v3239, %v3238
        %v3245 = vsel %vm1826, %v3240, 0
        %v3248 = vsel %vm1826, %v3241, 0
        %v3251 = vsel %vm1826, %v3242, 0
        %v3254 = vsel %vm1826, %v3243, 0
        %3256 = vmatprep.subr.bf16.mxu0 0
        %3257 = vmatpush1.bf16.msra.mxu0 %v3000
        %3258 = vmatprep.subr.bf16.mxu0 0
        %3259 = vmatpush1.bf16.msra.mxu0 %v3001
        %3260 = vmatprep.subr.bf16.mxu0 0
        %3261 = vmatpush1.bf16.msra.mxu0 0
        %3262 = vmatprep.subr.bf16.mxu0 0
        %3263 = vmatpush1.bf16.msra.mxu0 0
        %3264 = vmatprep.subr.bf16.mxu0 0
        %3265 = vmatpush1.bf16.msra.mxu0 0
        %3266 = vmatprep.subr.bf16.mxu0 0
        %3267 = vmatpush1.bf16.msra.mxu0 0
        %3268 = vmatprep.subr.bf16.mxu0 0
        %3269 = vmatpush1.bf16.msra.mxu0 0
        %3270 = vmatprep.subr.bf16.mxu0 0
        %3271 = vmatpush1.bf16.msra.mxu0 0
        %3272 = vmatprep.subr.bf16.mxu0 0
        %3273 = vmatpush1.bf16.msra.mxu0 0
        %3274 = vmatprep.subr.bf16.mxu0 0
        %3275 = vmatpush1.bf16.msra.mxu0 0
        %3276 = vmatprep.subr.bf16.mxu0 0
        %3277 = vmatpush1.bf16.msra.mxu0 0
        %3278 = vmatprep.subr.bf16.mxu0 0
        %3279 = vmatpush1.bf16.msra.mxu0 0
        %3280 = vmatprep.subr.bf16.mxu0 0
        %3281 = vmatpush1.bf16.msra.mxu0 0
        %3282 = vmatprep.subr.bf16.mxu0 0
        %3283 = vmatpush1.bf16.msra.mxu0 0
        %3284 = vmatprep.subr.bf16.mxu0 0
        %3285 = vmatpush1.bf16.msra.mxu0 0
        %3286 = vmatprep.subr.bf16.mxu0 0
        %3287 = vmatpush1.bf16.msra.mxu0 0
        %3288 = vmatprep.mubr.bf16.mxu0 0
        %3289 = vmatmul.mubr.bf16.gmra.mrb[0].mxu0 %v3245
        %v3290 = vpop.f32.mrb[0].mxu0
        %v3291 = vadd.f32 %v3194, %v3290
        %v3292 = vpop.f32.mrb[0].mxu0
        %v3293 = vpop.f32.mrb[0].mxu0
        %v3294 = vadd.f32 %v3197, %v3293
        %v3295 = vpop.f32.mrb[0].mxu0
        %3296 = vmatprep.mubr.bf16.mxu0 0
        %3297 = vmatmul.mubr.bf16.gmra.mrb[0].mxu0 %v3248
        %v3298 = vpop.f32.mrb[0].mxu0
        %v3299 = vadd.f32 %v3202, %v3298
        %v3300 = vpop.f32.mrb[0].mxu0
        %v3301 = vpop.f32.mrb[0].mxu0
        %v3302 = vadd.f32 %v3205, %v3301
        %v3303 = vpop.f32.mrb[0].mxu0
        %3304 = vmatprep.mubr.bf16.mxu0 0
        %3305 = vmatmul.mubr.bf16.gmra.mrb[0].mxu0 %v3251
        %v3306 = vpop.f32.mrb[0].mxu0
        %v3307 = vadd.f32 %v3210, %v3306
        %v3308 = vpop.f32.mrb[0].mxu0
        %v3309 = vpop.f32.mrb[0].mxu0
        %v3310 = vadd.f32 %v3213, %v3309
        %v3311 = vpop.f32.mrb[0].mxu0
        %3312 = vmatprep.mubr.bf16.mxu0 0
        %3313 = vmatmul.mubr.bf16.gmra.mrb[0].mxu0 %v3254
        %v3314 = vpop.f32.mrb[0].mxu0
        %v3315 = vadd.f32 %v3218, %v3314
        %v3316 = vpop.f32.mrb[0].mxu0
        %v3317 = vpop.f32.mrb[0].mxu0
        %v3318 = vadd.f32 %v3221, %v3317
        %v3319 = vpop.f32.mrb[0].mxu0
        %3320 = vdwg.mxu0
        %v3321 = vld [vmem:[%s15] sm:$0x1]
        %v3323 = vlaneseq
        %v3324 = vshrl.u32 %v3323, 7
        %v3325 = vsub.s32 0, %v3324
        %v3326 = vrot.slane %v3321, %v3325
        %v3328 = vadd.f32 %v3291, %v3326
        %v3329 = vadd.f32 %v3294, %v3326
        %v3330 = vadd.f32 %v3299, %v3326
        %v3331 = vadd.f32 %v3302, %v3326
        %v3332 = vadd.f32 %v3307, %v3326
        %v3333 = vadd.f32 %v3310, %v3326
        %v3334 = vadd.f32 %v3315, %v3326
        %v3335 = vadd.f32 %v3318, %v3326
        %v3336 = vsub.f32 0.0, %v3328
        %v3337 = vsub.f32 0.0, %v3329
        %v3338 = vsub.f32 0.0, %v3330
        %v3339 = vsub.f32 0.0, %v3331
        %v3340 = vsub.f32 0.0, %v3332
        %v3341 = vsub.f32 0.0, %v3333
        %v3342 = vsub.f32 0.0, %v3334
        %v3343 = vsub.f32 0.0, %v3335
        %v3344 = vmul.f32 %v3336, 1.442695
        %v3345 = vpow.pop %v3344
        %v3346 = vmul.f32 %v3337, 1.442695
        %v3347 = vpow.pop %v3346
        %v3348 = vmul.f32 %v3338, 1.442695
        %v3349 = vpow.pop %v3348
        %v3350 = vmul.f32 %v3339, 1.442695
        %v3351 = vpow.pop %v3350
        %v3352 = vmul.f32 %v3340, 1.442695
        %v3353 = vpow.pop %v3352
        %v3354 = vmul.f32 %v3341, 1.442695
        %v3355 = vpow.pop %v3354
        %v3356 = vmul.f32 %v3342, 1.442695
        %v3357 = vpow.pop %v3356
        %v3358 = vmul.f32 %v3343, 1.442695
        %v3359 = vpow.pop %v3358
        %v3360 = vadd.f32 %v3345, 1.0
        %v3361 = vadd.f32 %v3347, 1.0
        %v3362 = vadd.f32 %v3349, 1.0
        %v3363 = vadd.f32 %v3351, 1.0
        %v3364 = vadd.f32 %v3353, 1.0
        %v3365 = vadd.f32 %v3355, 1.0
        %v3366 = vadd.f32 %v3357, 1.0
        %v3367 = vadd.f32 %v3359, 1.0
        %v3368 = vrcp.pop %v3360
        %v3369 = vmul.f32 1.0, %v3368
        %v3370 = vrcp.pop %v3361
        %v3371 = vmul.f32 1.0, %v3370
        %v3372 = vrcp.pop %v3362
        %v3373 = vmul.f32 1.0, %v3372
        %v3374 = vrcp.pop %v3363
        %v3375 = vmul.f32 1.0, %v3374
        %v3376 = vrcp.pop %v3364
        %v3377 = vmul.f32 1.0, %v3376
        %v3378 = vrcp.pop %v3365
        %v3379 = vmul.f32 1.0, %v3378
        %v3380 = vrcp.pop %v3366
        %v3381 = vmul.f32 1.0, %v3380
        %v3382 = vrcp.pop %v3367
        %v3383 = vmul.f32 1.0, %v3382
        %3384 = vst.msk [vmem:[%s569] sm:$0xff] %vm835, %v3369
        %3385 = vst.msk [vmem:[%s569 + $0x8] sm:$0xff] %vm835, %v3371
        %3386 = vst.msk [vmem:[%s569 + $0x10] sm:$0xff] %vm835, %v3373
        %3387 = vst.msk [vmem:[%s569 + $0x18] sm:$0xff] %vm835, %v3375
        %3388 = vst.msk [vmem:[%s569 + $0x20] sm:$0xff] %vm835, %v3377
        %3389 = vst.msk [vmem:[%s569 + $0x28] sm:$0xff] %vm835, %v3379
        %3390 = vst.msk [vmem:[%s569 + $0x30] sm:$0xff] %vm835, %v3381
        %3391 = vst.msk [vmem:[%s569 + $0x38] sm:$0xff] %vm835, %v3383
        %s3392 = sand.u32 %s403, 1
        %s3393 = scalar_lea.sflag [#allocation3], %s3392
        %s3394 = sand.u32 %s403, 1
        %s3395 = smul.addr %s3394, 64
        %s3396 = scalar_lea.vmem [#allocation2], %s3395
        %p3397 = scmp.lt.s32.totalorder %s33, 1
        %s3398 = scalar_select %p3397, %s33, 1
        %s3399 = smul.addr %s3398, 2
        %s3400 = smul.addr %s3399, 8
        %s3401 = scalar_lea.vmem %s18, %s3400
        // Predicated region
        $region89: #{network_forward.1} parent=87 // pred_check
          %p3402 = pneg %p413
        $region90: #{network_forward.1} parent=87 // pred_check_branch
          %3404 = sbr.rel (%p3402) target = $region92
        $region91: #{network_forward.1} parent=87 // pred_region
          %s3406 = ssub.s32 1024, 1024
          %3407 = vsyncadd %s3393, %s3406
          %s3408 = smul.addr %s33, 8
          %s3409 = smul.addr %s3408, 128
          %s3410 = scalar_lea.hbm %s17, %s3409
          %s3411 = sshll.u32 %s3396, 4
          %s3412 = int_to_ptr.vmem [resolvable:$true] %s3411
          %3417 = dma.vmem_to_hbm [thread:$0]  %s3412, 1024, %s3410, %s3393, 128, 128, 8
        $region92: #{network_forward.1} parent=87 // pred_fallthru
          _
        // Predicated region
        $region93: #{network_forward.1} parent=87 // pred_check
          %p3418 = pneg %p439
        $region94: #{network_forward.1} parent=87 // pred_check_branch
          %3420 = sbr.rel (%p3418) target = $region96
        $region95: #{network_forward.1} parent=87 // pred_region
          _
        $region96: #{network_forward.1} parent=87 // pred_fallthru
          _
      $region88: #{network_forward.1} parent=5 // pred_fallthru
        _
      %p3421 = scmp.le.s32.totalorder 2, %s28
      // Predicated region
      $region97: #{network_forward.1} parent=5 // pred_check
        %p3422 = pneg %p3421
      $region98: #{network_forward.1} parent=5 // pred_check_branch
        %3424 = sbr.rel (%p3422) target = $region100
      $region99: #{network_forward.1} parent=5 // pred_region
        %s3425 = ssub.s32 %s28, 2
        // Predicated region
        $region101: #{network_forward.1} parent=99 // pred_check
          %p3426 = pneg %p419
        $region102: #{network_forward.1} parent=99 // pred_check_branch
          %3428 = sbr.rel (%p3426) target = $region104
        $region103: #{network_forward.1} parent=99 // pred_region
          %s3429 = sand.u32 %s404, 1
          %s3430 = scalar_lea.sflag [#allocation3], %s3429
          %s3431 = sand.u32 %s404, 1
          %s3432 = smul.addr %s3431, 64
          %s3433 = scalar_lea.vmem [#allocation2], %s3432
          %3434 = dma.done %s3430, 1024
        $region104: #{network_forward.1} parent=99 // pred_fallthru
          _
        // Predicated region
        $region105: #{network_forward.1} parent=99 // pred_check
          %p3435 = pneg %p445
        $region106: #{network_forward.1} parent=99 // pred_check_branch
          %3437 = sbr.rel (%p3435) target = $region108
        $region107: #{network_forward.1} parent=99 // pred_region
          %p3438 = scmp.lt.s32.totalorder %s34, 1
          %s3439 = scalar_select %p3438, %s34, 1
          %s3440 = smul.addr %s3439, 2
          %s3441 = smul.addr %s3440, 8
          %s3442 = scalar_lea.vmem %s18, %s3441
        $region108: #{network_forward.1} parent=99 // pred_fallthru
          _
      $region100: #{network_forward.1} parent=5 // pred_fallthru
        _
    $region6: #{network_forward.1} parent=1 // loop_footer
      %s32 = sadd.s32 1, %s28
    $region7: #{network_forward.1} parent=1 // loop_footer_branch
      %27 = sbr.rel target = $region3
    $region8: #{network_forward.1} parent=1 // loop_exit
      _
    %3443 = vsyncpa [#allocation3], 1
    %s3444 = scalar_lea.sflag [#allocation3], 1
    %3445 = vsyncpa %s3444, 1

</llo_original>
